<compile_context>
chip_gen: v6e
topology: v6e:2x2x1
jax: 0.10.0
libtpu: 0.0.40
codegen_flags: <defaults>
</compile_context>

<pallas_src>
import functools

import jax
import jax.numpy as jnp
from jax import lax
from jax.experimental import pallas as pl
from jax.experimental.pallas import tpu as pltpu


# ---------------------------------------------------------------------------
# Fused Pallas kernels:
#   out = maybe_relu( (X_bf16 @ W_bf16)_f32 + shift [+ residual] )
# ---------------------------------------------------------------------------
def _mm_kernel(x_ref, w_ref, shift_ref, o_ref, *, apply_relu):
    acc = jnp.dot(x_ref[...], w_ref[...], preferred_element_type=jnp.float32)
    y = acc + shift_ref[...]
    if apply_relu:
        y = jnp.maximum(y, 0.0)
    o_ref[...] = y.astype(o_ref.dtype)


def _mm_res_kernel(x_ref, w_ref, shift_ref, res_ref, o_ref, *, apply_relu):
    acc = jnp.dot(x_ref[...], w_ref[...], preferred_element_type=jnp.float32)
    y = acc + shift_ref[...] + res_ref[...]
    if apply_relu:
        y = jnp.maximum(y, 0.0)
    o_ref[...] = y.astype(o_ref.dtype)


def _pick_tm(M):
    """Per-layer row tile: no padding waste for small M, >=2 grid steps for
    larger layers (v7x megacore), capped at 512 rows."""
    m16 = -(-M // 16) * 16          # round up to a multiple of 16 (bf16 sublanes)
    if m16 <= 256:
        return m16
    half = -(-m16 // 2)
    return min(512, -(-half // 16) * 16)


def fused_matmul(x, w, shift, res, apply_relu):
    """x: [M, K] im2col patches (f32), w: [K, N] scale-folded weights (f32),
    shift: [N] f32, res: optional [M, N] f32 residual.  Returns f32 [M, N]."""
    M, K = x.shape
    N = w.shape[1]
    Np = ((N + 127) // 128) * 128          # lane-dense output columns
    TM = _pick_tm(M)
    Mp = ((M + TM - 1) // TM) * TM

    if Np != N:
        w = jnp.pad(w, ((0, 0), (0, Np - N)))
        shift = jnp.pad(shift, ((0, Np - N),))
    if Mp != M:
        x = jnp.pad(x, ((0, Mp - M), (0, 0)))

    xb = x.astype(jnp.bfloat16)
    wb = w.astype(jnp.bfloat16)
    shift2 = shift.reshape(1, Np).astype(jnp.float32)

    grid = (Mp // TM,)
    x_spec = pl.BlockSpec((TM, K), lambda i: (i, 0))
    w_spec = pl.BlockSpec((K, Np), lambda i: (0, 0))
    s_spec = pl.BlockSpec((1, Np), lambda i: (0, 0))
    o_spec = pl.BlockSpec((TM, Np), lambda i: (i, 0))
    cparams = pltpu.CompilerParams(dimension_semantics=("parallel",))

    if res is None:
        out = pl.pallas_call(
            functools.partial(_mm_kernel, apply_relu=apply_relu),
            out_shape=jax.ShapeDtypeStruct((Mp, Np), jnp.float32),
            grid=grid,
            in_specs=[x_spec, w_spec, s_spec],
            out_specs=o_spec,
            compiler_params=cparams,
        )(xb, wb, shift2)
    else:
        resp = res.astype(jnp.float32)
        if Np != N:
            resp = jnp.pad(resp, ((0, 0), (0, Np - N)))
        if Mp != M:
            resp = jnp.pad(resp, ((0, Mp - M), (0, 0)))
        out = pl.pallas_call(
            functools.partial(_mm_res_kernel, apply_relu=apply_relu),
            out_shape=jax.ShapeDtypeStruct((Mp, Np), jnp.float32),
            grid=grid,
            in_specs=[x_spec, w_spec, s_spec,
                      pl.BlockSpec((TM, Np), lambda i: (i, 0))],
            out_specs=o_spec,
            compiler_params=cparams,
        )(xb, wb, shift2, resp)
    return out[:M, :N]


# ---------------------------------------------------------------------------
# im2col glue (plain JAX reshapes / slices)
# ---------------------------------------------------------------------------
def im2col(x, kh, kw, stride, pad):
    B, H, W, C = x.shape
    xp = jnp.pad(x, ((0, 0), (pad, pad), (pad, pad), (0, 0)))
    Ho = (H + 2 * pad - kh) // stride + 1
    Wo = (W + 2 * pad - kw) // stride + 1
    cols = []
    for ky in range(kh):
        for kx in range(kw):
            cols.append(
                xp[:,
                   ky:ky + (Ho - 1) * stride + 1:stride,
                   kx:kx + (Wo - 1) * stride + 1:stride,
                   :])
    patches = jnp.stack(cols, axis=3)  # [B, Ho, Wo, kh*kw, C]
    return patches.reshape(B * Ho * Wo, kh * kw * C), (B, Ho, Wo)


def bn_fold(bn):
    gamma, beta, mean, var = bn
    scale = gamma / jnp.sqrt(var + 1e-5)
    shift = beta - mean * scale
    return scale, shift


def conv2d_fused(x, w, scale, shift, stride, pad, res=None, apply_relu=True):
    """Conv2d (PyTorch weight [Cout,Cin,kh,kw]) with BN scale folded into W,
    + shift + optional residual + ReLU, via one fused Pallas matmul."""
    Cout, Cin, kh, kw = w.shape
    patches, (B, Ho, Wo) = im2col(x, kh, kw, stride, pad)
    wmat = jnp.transpose(w, (2, 3, 1, 0)).reshape(kh * kw * Cin, Cout)
    wmat = wmat * scale[None, :]                       # fold BN scale
    resm = None if res is None else res.reshape(B * Ho * Wo, Cout)
    y = fused_matmul(patches, wmat, shift, resm, apply_relu)
    return y.reshape(B, Ho, Wo, Cout)


# Phase decomposition of ConvTranspose2d(k=4, s=2, p=1):
#   out[2m+p, 2n+q] uses only kernel taps of matching parity and a 2x2 input
#   window, so each output parity phase is a stride-1 2x2 convolution on the
#   input resolution (no zero-insertion).
_PHASE_KIDX = ((3, 1), (2, 0))   # [output parity][local tap dy] -> kernel ky
_PHASE_PAD = ((1, 0), (0, 1))    # [output parity] -> (pad_before, pad_after)


def conv_transpose2d_fused(x, w, scale, shift, apply_relu):
    """ConvTranspose2d(k=4, s=2, p=1) as 4 phase sub-convs.  w: [Cin,Cout,4,4]."""
    B, H, W, Cin = x.shape
    Cout = w.shape[1]
    phase = [[None, None], [None, None]]
    for p in (0, 1):
        for q in (0, 1):
            pt, pb = _PHASE_PAD[p]
            plft, prt = _PHASE_PAD[q]
            xp = jnp.pad(x, ((0, 0), (pt, pb), (plft, prt), (0, 0)))
            patches, (_, Ho, Wo) = im2col(xp, 2, 2, 1, 0)   # Ho=H, Wo=W
            kys, kxs = _PHASE_KIDX[p], _PHASE_KIDX[q]
            wtaps = jnp.stack([w[:, :, kys[dy], kxs[dx]]
                               for dy in (0, 1) for dx in (0, 1)], axis=0)
            wmat = wtaps.reshape(4 * Cin, Cout) * scale[None, :]
            y = fused_matmul(patches, wmat, shift, None, apply_relu)
            phase[p][q] = y.reshape(B, H, W, Cout)
    pq = jnp.stack([jnp.stack(row, axis=0) for row in phase], axis=0)  # [2,2,B,H,W,C]
    return jnp.transpose(pq, (2, 3, 0, 4, 1, 5)).reshape(B, 2 * H, 2 * W, Cout)


# ---------------------------------------------------------------------------
# Parameters (deterministic, synthetic; fan-in scaled so activations stay O(1))
# ---------------------------------------------------------------------------
def init_params(key, in_channels=3, hidden=16):
    keys = iter(jax.random.split(key, 64))

    def conv_w(co, ci, k):
        std = (ci * k * k) ** -0.5
        return jax.random.normal(next(keys), (co, ci, k, k), jnp.float32) * std

    def convT_w(ci, co, k):
        std = (ci * k * k) ** -0.5
        return jax.random.normal(next(keys), (ci, co, k, k), jnp.float32) * std

    def bn(c):
        gamma = 1.0 + 0.1 * jax.random.normal(next(keys), (c,), jnp.float32)
        beta = 0.1 * jax.random.normal(next(keys), (c,), jnp.float32)
        mean = 0.1 * jax.random.normal(next(keys), (c,), jnp.float32)
        var = 1.0 + 0.1 * jnp.abs(jax.random.normal(next(keys), (c,), jnp.float32))
        return (gamma, beta, mean, var)

    h = hidden
    p = {}
    p['enc1_w'] = conv_w(h, in_channels, 4); p['enc1_bn'] = bn(h)
    p['enc2_w'] = conv_w(2 * h, h, 4);       p['enc2_bn'] = bn(2 * h)
    p['enc3_w'] = conv_w(4 * h, 2 * h, 4);   p['enc3_bn'] = bn(4 * h)
    for i in (1, 2):
        p[f'res{i}_w1'] = conv_w(4 * h, 4 * h, 3); p[f'res{i}_bn1'] = bn(4 * h)
        p[f'res{i}_w2'] = conv_w(4 * h, 4 * h, 3); p[f'res{i}_bn2'] = bn(4 * h)
    p['dec1_w'] = convT_w(4 * h, 2 * h, 4); p['dec1_bn'] = bn(2 * h)
    p['dec2_w'] = convT_w(4 * h, h, 4);     p['dec2_bn'] = bn(h)
    p['dec3_w'] = convT_w(2 * h, 3, 4)                      # bias=True (no BN)
    p['dec3_b'] = 0.1 * jax.random.normal(next(keys), (3,), jnp.float32)
    return p


# ---------------------------------------------------------------------------
# Model forward (encoder -> resblocks -> decoder), all convs via Pallas kernel
# ---------------------------------------------------------------------------
def model_forward(params, x):
    # Encoder: DownConv = conv4x4/s2/p1 -> BN -> ReLU
    s, sh = bn_fold(params['enc1_bn'])
    x1 = conv2d_fused(x, params['enc1_w'], s, sh, 2, 1)
    s, sh = bn_fold(params['enc2_bn'])
    x2 = conv2d_fused(x1, params['enc2_w'], s, sh, 2, 1)
    s, sh = bn_fold(params['enc3_bn'])
    x3 = conv2d_fused(x2, params['enc3_w'], s, sh, 2, 1)

    # ResBlock: relu(bn1(conv1(x))); relu(x + bn2(conv2(.)))
    def resblock(xin, i):
        sa, sha = bn_fold(params[f'res{i}_bn1'])
        y = conv2d_fused(xin, params[f'res{i}_w1'], sa, sha, 1, 1)
        sb, shb = bn_fold(params[f'res{i}_bn2'])
        return conv2d_fused(y, params[f'res{i}_w2'], sb, shb, 1, 1,
                            res=xin, apply_relu=True)

    x3 = resblock(resblock(x3, 1), 2)

    # Decoder: UpConv = (concat skip) -> ConvT4x4/s2/p1 -> [BN] -> [ReLU]
    s, sh = bn_fold(params['dec1_bn'])
    d1 = conv_transpose2d_fused(x3, params['dec1_w'], s, sh, True)
    s, sh = bn_fold(params['dec2_bn'])
    d2 = conv_transpose2d_fused(jnp.concatenate([d1, x2], -1),
                                params['dec2_w'], s, sh, True)
    ones = jnp.ones((3,), jnp.float32)
    out = conv_transpose2d_fused(jnp.concatenate([d2, x1], -1),
                                 params['dec3_w'], ones, params['dec3_b'], False)
    return out


# ---------------------------------------------------------------------------
# Pure-JAX (lax.conv, f32) reference for a correctness cross-check
# ---------------------------------------------------------------------------
def ref_forward(params, x):
    def conv(xx, w, stride, pad):
        return lax.conv_general_dilated(
            xx, jnp.transpose(w, (2, 3, 1, 0)), (stride, stride),
            ((pad, pad), (pad, pad)),
            dimension_numbers=('NHWC', 'HWIO', 'NHWC'))

    def convT(xx, w):
        return lax.conv_general_dilated(
            xx, jnp.transpose(jnp.flip(w, (2, 3)), (2, 3, 0, 1)), (1, 1),
            ((2, 2), (2, 2)), lhs_dilation=(2, 2),
            dimension_numbers=('NHWC', 'HWIO', 'NHWC'))

    def bn(xx, p):
        s, sh = bn_fold(p)
        return xx * s + sh

    x1 = jax.nn.relu(bn(conv(x, params['enc1_w'], 2, 1), params['enc1_bn']))
    x2 = jax.nn.relu(bn(conv(x1, params['enc2_w'], 2, 1), params['enc2_bn']))
    x3 = jax.nn.relu(bn(conv(x2, params['enc3_w'], 2, 1), params['enc3_bn']))

    def resblk(xx, i):
        y = jax.nn.relu(bn(conv(xx, params[f'res{i}_w1'], 1, 1), params[f'res{i}_bn1']))
        return jax.nn.relu(xx + bn(conv(y, params[f'res{i}_w2'], 1, 1), params[f'res{i}_bn2']))

    x3 = resblk(resblk(x3, 1), 2)
    d1 = jax.nn.relu(bn(convT(x3, params['dec1_w']), params['dec1_bn']))
    d2 = jax.nn.relu(bn(convT(jnp.concatenate([d1, x2], -1), params['dec2_w']),
                        params['dec2_bn']))
    return convT(jnp.concatenate([d2, x1], -1), params['dec3_w']) + params['dec3_b']


if __name__ == "__main__":
    key = jax.random.PRNGKey(0)
    pkey, xkey = jax.random.split(key)
    params = init_params(pkey, in_channels=3, hidden=16)

    # NHWC input; equivalent PyTorch NCHW input would be (2, 3, 32, 32).
    x = jax.random.normal(xkey, (2, 32, 32, 3), jnp.float32)

    out = jax.jit(model_forward)(params, x)
    out = jax.block_until_ready(out)
    assert out.shape == (2, 32, 32, 3), out.shape

    ref = ref_forward(params, x)
    max_diff = float(jnp.max(jnp.abs(out - ref)))
    ref_scale = float(jnp.max(jnp.abs(ref)))
    # bf16 MXU inputs with f32 accumulation: allow 5% of the output range.
    if max_diff > 5e-2 * max(ref_scale, 1.0):
        raise AssertionError(
            f"Pallas output mismatch vs reference: max abs diff {max_diff}, "
            f"ref scale {ref_scale}")

    print("KERNEL_OK")
</pallas_src>

<mosaic_0001>
module attributes {stable_mosaic.version = 11 : i64} {
  func.func @_mm_kernel(%arg0: i32, %arg1: memref<256x48xbf16, #tpu.memory_space<vmem>>, %arg2: memref<48x128xbf16, #tpu.memory_space<vmem>>, %arg3: memref<1x128xf32, #tpu.memory_space<vmem>>, %arg4: memref<256x128xf32, #tpu.memory_space<vmem>>) attributes {dimension_semantics = [#tpu.dimension_semantics<parallel>], iteration_bounds = array<i64: 2>, scalar_prefetch = 0 : i64, scratch_operands = 0 : i64, tpu.core_type = #tpu.core_type<tc>, window_params = [{transform_indices = @transform_0, window_bounds = array<i64: 256, 48>}, {pipeline_mode = #tpu.pipeline_mode<synchronous>, transform_indices = @transform_1, window_bounds = array<i64: 48, 128>}, {pipeline_mode = #tpu.pipeline_mode<synchronous>, transform_indices = @transform_2, window_bounds = array<i64: 1, 128>}, {transform_indices = @transform_3, window_bounds = array<i64: 256, 128>}]} {
    %c0 = arith.constant 0 : index
    %c0_0 = arith.constant 0 : index
    %0 = vector.load %arg1[%c0, %c0_0] : memref<256x48xbf16, #tpu.memory_space<vmem>>, vector<256x48xbf16>
    %c0_1 = arith.constant 0 : index
    %c0_2 = arith.constant 0 : index
    %1 = vector.load %arg2[%c0_1, %c0_2] : memref<48x128xbf16, #tpu.memory_space<vmem>>, vector<48x128xbf16>
    %cst = arith.constant dense<0.000000e+00> : vector<256x128xf32>
    %2 = tpu.matmul %0, %1, %cst {dimension_numbers = #tpu.dot_dimension_numbers<[1], [0], [0], [1], [0, 0, 1, 1], [], []>} : vector<256x48xbf16>, vector<48x128xbf16>, vector<256x128xf32> -> vector<256x128xf32>
    %c0_3 = arith.constant 0 : index
    %c0_4 = arith.constant 0 : index
    %3 = vector.load %arg3[%c0_3, %c0_4] : memref<1x128xf32, #tpu.memory_space<vmem>>, vector<1x128xf32>
    %4 = vector.broadcast %3 : vector<1x128xf32> to vector<256x128xf32>
    %5 = arith.addf %2, %4 : vector<256x128xf32>
    %cst_5 = arith.constant 0.000000e+00 : f32
    %6 = vector.broadcast %cst_5 : f32 to vector<256x128xf32>
    %7 = arith.maximumf %5, %6 : vector<256x128xf32>
    %c0_6 = arith.constant 0 : index
    %c0_7 = arith.constant 0 : index
    %8 = vector.load %arg4[%c0_6, %c0_7] : memref<256x128xf32, #tpu.memory_space<vmem>>, vector<256x128xf32>
    tpu.vector_store %arg4[%c0_6, %c0_7], %7 {strides = array<i32>} : memref<256x128xf32, #tpu.memory_space<vmem>>, vector<256x128xf32>,
    return
  }
  func.func @transform_0(%arg0: i32) -> (i32, i32) {
    %c0_i32 = arith.constant 0 : i32
    %c0_i32_0 = arith.constant 0 : i32
    return %arg0, %c0_i32 : i32, i32
  }
  func.func @transform_1(%arg0: i32) -> (i32, i32) {
    %c0_i32 = arith.constant 0 : i32
    %c0_i32_0 = arith.constant 0 : i32
    %c0_i32_1 = arith.constant 0 : i32
    return %c0_i32, %c0_i32_0 : i32, i32
  }
  func.func @transform_2(%arg0: i32) -> (i32, i32) {
    %c0_i32 = arith.constant 0 : i32
    %c0_i32_0 = arith.constant 0 : i32
    %c0_i32_1 = arith.constant 0 : i32
    return %c0_i32, %c0_i32_0 : i32, i32
  }
  func.func @transform_3(%arg0: i32) -> (i32, i32) {
    %c0_i32 = arith.constant 0 : i32
    %c0_i32_0 = arith.constant 0 : i32
    return %arg0, %c0_i32 : i32, i32
  }
}

module attributes {stable_mosaic.version = 11 : i64} {
  func.func @_mm_kernel(%arg0: i32, %arg1: memref<128x256xbf16, #tpu.memory_space<vmem>>, %arg2: memref<256x128xbf16, #tpu.memory_space<vmem>>, %arg3: memref<1x128xf32, #tpu.memory_space<vmem>>, %arg4: memref<128x128xf32, #tpu.memory_space<vmem>>) attributes {dimension_semantics = [#tpu.dimension_semantics<parallel>], iteration_bounds = array<i64: 1>, scalar_prefetch = 0 : i64, scratch_operands = 0 : i64, tpu.core_type = #tpu.core_type<tc>, window_params = [{transform_indices = @transform_0, window_bounds = array<i64: 128, 256>}, {pipeline_mode = #tpu.pipeline_mode<synchronous>, transform_indices = @transform_1, window_bounds = array<i64: 256, 128>}, {pipeline_mode = #tpu.pipeline_mode<synchronous>, transform_indices = @transform_2, window_bounds = array<i64: 1, 128>}, {transform_indices = @transform_3, window_bounds = array<i64: 128, 128>}]} {
    %c0 = arith.constant 0 : index
    %c0_0 = arith.constant 0 : index
    %0 = vector.load %arg1[%c0, %c0_0] : memref<128x256xbf16, #tpu.memory_space<vmem>>, vector<128x256xbf16>
    %c0_1 = arith.constant 0 : index
    %c0_2 = arith.constant 0 : index
    %1 = vector.load %arg2[%c0_1, %c0_2] : memref<256x128xbf16, #tpu.memory_space<vmem>>, vector<256x128xbf16>
    %cst = arith.constant dense<0.000000e+00> : vector<128x128xf32>
    %2 = tpu.matmul %0, %1, %cst {dimension_numbers = #tpu.dot_dimension_numbers<[1], [0], [0], [1], [0, 0, 1, 1], [], []>} : vector<128x256xbf16>, vector<256x128xbf16>, vector<128x128xf32> -> vector<128x128xf32>
    %c0_3 = arith.constant 0 : index
    %c0_4 = arith.constant 0 : index
    %3 = vector.load %arg3[%c0_3, %c0_4] : memref<1x128xf32, #tpu.memory_space<vmem>>, vector<1x128xf32>
    %4 = vector.broadcast %3 : vector<1x128xf32> to vector<128x128xf32>
    %5 = arith.addf %2, %4 : vector<128x128xf32>
    %cst_5 = arith.constant 0.000000e+00 : f32
    %6 = vector.broadcast %cst_5 : f32 to vector<128x128xf32>
    %7 = arith.maximumf %5, %6 : vector<128x128xf32>
    %c0_6 = arith.constant 0 : index
    %c0_7 = arith.constant 0 : index
    %8 = vector.load %arg4[%c0_6, %c0_7] : memref<128x128xf32, #tpu.memory_space<vmem>>, vector<128x128xf32>
    tpu.vector_store %arg4[%c0_6, %c0_7], %7 {strides = array<i32>} : memref<128x128xf32, #tpu.memory_space<vmem>>, vector<128x128xf32>,
    return
  }
  func.func @transform_0(%arg0: i32) -> (i32, i32) {
    %c0_i32 = arith.constant 0 : i32
    %c0_i32_0 = arith.constant 0 : i32
    return %arg0, %c0_i32 : i32, i32
  }
  func.func @transform_1(%arg0: i32) -> (i32, i32) {
    %c0_i32 = arith.constant 0 : i32
    %c0_i32_0 = arith.constant 0 : i32
    %c0_i32_1 = arith.constant 0 : i32
    return %c0_i32, %c0_i32_0 : i32, i32
  }
  func.func @transform_2(%arg0: i32) -> (i32, i32) {
    %c0_i32 = arith.constant 0 : i32
    %c0_i32_0 = arith.constant 0 : i32
    %c0_i32_1 = arith.constant 0 : i32
    return %c0_i32, %c0_i32_0 : i32, i32
  }
  func.func @transform_3(%arg0: i32) -> (i32, i32) {
    %c0_i32 = arith.constant 0 : i32
    %c0_i32_0 = arith.constant 0 : i32
    return %arg0, %c0_i32 : i32, i32
  }
}

module attributes {stable_mosaic.version = 11 : i64} {
  func.func @_mm_kernel(%arg0: i32, %arg1: memref<32x512xbf16, #tpu.memory_space<vmem>>, %arg2: memref<512x128xbf16, #tpu.memory_space<vmem>>, %arg3: memref<1x128xf32, #tpu.memory_space<vmem>>, %arg4: memref<32x128xf32, #tpu.memory_space<vmem>>) attributes {dimension_semantics = [#tpu.dimension_semantics<parallel>], iteration_bounds = array<i64: 1>, scalar_prefetch = 0 : i64, scratch_operands = 0 : i64, tpu.core_type = #tpu.core_type<tc>, window_params = [{transform_indices = @transform_0, window_bounds = array<i64: 32, 512>}, {pipeline_mode = #tpu.pipeline_mode<synchronous>, transform_indices = @transform_1, window_bounds = array<i64: 512, 128>}, {pipeline_mode = #tpu.pipeline_mode<synchronous>, transform_indices = @transform_2, window_bounds = array<i64: 1, 128>}, {transform_indices = @transform_3, window_bounds = array<i64: 32, 128>}]} {
    %c0 = arith.constant 0 : index
    %c0_0 = arith.constant 0 : index
    %0 = vector.load %arg1[%c0, %c0_0] : memref<32x512xbf16, #tpu.memory_space<vmem>>, vector<32x512xbf16>
    %c0_1 = arith.constant 0 : index
    %c0_2 = arith.constant 0 : index
    %1 = vector.load %arg2[%c0_1, %c0_2] : memref<512x128xbf16, #tpu.memory_space<vmem>>, vector<512x128xbf16>
    %cst = arith.constant dense<0.000000e+00> : vector<32x128xf32>
    %2 = tpu.matmul %0, %1, %cst {dimension_numbers = #tpu.dot_dimension_numbers<[1], [0], [0], [1], [0, 0, 1, 1], [], []>} : vector<32x512xbf16>, vector<512x128xbf16>, vector<32x128xf32> -> vector<32x128xf32>
    %c0_3 = arith.constant 0 : index
    %c0_4 = arith.constant 0 : index
    %3 = vector.load %arg3[%c0_3, %c0_4] : memref<1x128xf32, #tpu.memory_space<vmem>>, vector<1x128xf32>
    %4 = vector.broadcast %3 : vector<1x128xf32> to vector<32x128xf32>
    %5 = arith.addf %2, %4 : vector<32x128xf32>
    %cst_5 = arith.constant 0.000000e+00 : f32
    %6 = vector.broadcast %cst_5 : f32 to vector<32x128xf32>
    %7 = arith.maximumf %5, %6 : vector<32x128xf32>
    %c0_6 = arith.constant 0 : index
    %c0_7 = arith.constant 0 : index
    %8 = vector.load %arg4[%c0_6, %c0_7] : memref<32x128xf32, #tpu.memory_space<vmem>>, vector<32x128xf32>
    tpu.vector_store %arg4[%c0_6, %c0_7], %7 {strides = array<i32>} : memref<32x128xf32, #tpu.memory_space<vmem>>, vector<32x128xf32>,
    return
  }
  func.func @transform_0(%arg0: i32) -> (i32, i32) {
    %c0_i32 = arith.constant 0 : i32
    %c0_i32_0 = arith.constant 0 : i32
    return %arg0, %c0_i32 : i32, i32
  }
  func.func @transform_1(%arg0: i32) -> (i32, i32) {
    %c0_i32 = arith.constant 0 : i32
    %c0_i32_0 = arith.constant 0 : i32
    %c0_i32_1 = arith.constant 0 : i32
    return %c0_i32, %c0_i32_0 : i32, i32
  }
  func.func @transform_2(%arg0: i32) -> (i32, i32) {
    %c0_i32 = arith.constant 0 : i32
    %c0_i32_0 = arith.constant 0 : i32
    %c0_i32_1 = arith.constant 0 : i32
    return %c0_i32, %c0_i32_0 : i32, i32
  }
  func.func @transform_3(%arg0: i32) -> (i32, i32) {
    %c0_i32 = arith.constant 0 : i32
    %c0_i32_0 = arith.constant 0 : i32
    return %arg0, %c0_i32 : i32, i32
  }
}

module attributes {stable_mosaic.version = 11 : i64} {
  func.func @_mm_res_kernel(%arg0: i32, %arg1: memref<32x576xbf16, #tpu.memory_space<vmem>>, %arg2: memref<576x128xbf16, #tpu.memory_space<vmem>>, %arg3: memref<1x128xf32, #tpu.memory_space<vmem>>, %arg4: memref<32x128xf32, #tpu.memory_space<vmem>>, %arg5: memref<32x128xf32, #tpu.memory_space<vmem>>) attributes {dimension_semantics = [#tpu.dimension_semantics<parallel>], iteration_bounds = array<i64: 1>, scalar_prefetch = 0 : i64, scratch_operands = 0 : i64, tpu.core_type = #tpu.core_type<tc>, window_params = [{transform_indices = @transform_0, window_bounds = array<i64: 32, 576>}, {pipeline_mode = #tpu.pipeline_mode<synchronous>, transform_indices = @transform_1, window_bounds = array<i64: 576, 128>}, {pipeline_mode = #tpu.pipeline_mode<synchronous>, transform_indices = @transform_2, window_bounds = array<i64: 1, 128>}, {transform_indices = @transform_3, window_bounds = array<i64: 32, 128>}, {transform_indices = @transform_4, window_bounds = array<i64: 32, 128>}]} {
    %c0 = arith.constant 0 : index
    %c0_0 = arith.constant 0 : index
    %0 = vector.load %arg1[%c0, %c0_0] : memref<32x576xbf16, #tpu.memory_space<vmem>>, vector<32x576xbf16>
    %c0_1 = arith.constant 0 : index
    %c0_2 = arith.constant 0 : index
    %1 = vector.load %arg2[%c0_1, %c0_2] : memref<576x128xbf16, #tpu.memory_space<vmem>>, vector<576x128xbf16>
    %cst = arith.constant dense<0.000000e+00> : vector<32x128xf32>
    %2 = tpu.matmul %0, %1, %cst {dimension_numbers = #tpu.dot_dimension_numbers<[1], [0], [0], [1], [0, 0, 1, 1], [], []>} : vector<32x576xbf16>, vector<576x128xbf16>, vector<32x128xf32> -> vector<32x128xf32>
    %c0_3 = arith.constant 0 : index
    %c0_4 = arith.constant 0 : index
    %3 = vector.load %arg3[%c0_3, %c0_4] : memref<1x128xf32, #tpu.memory_space<vmem>>, vector<1x128xf32>
    %4 = vector.broadcast %3 : vector<1x128xf32> to vector<32x128xf32>
    %5 = arith.addf %2, %4 : vector<32x128xf32>
    %c0_5 = arith.constant 0 : index
    %c0_6 = arith.constant 0 : index
    %6 = vector.load %arg4[%c0_5, %c0_6] : memref<32x128xf32, #tpu.memory_space<vmem>>, vector<32x128xf32>
    %7 = arith.addf %5, %6 : vector<32x128xf32>
    %cst_7 = arith.constant 0.000000e+00 : f32
    %8 = vector.broadcast %cst_7 : f32 to vector<32x128xf32>
    %9 = arith.maximumf %7, %8 : vector<32x128xf32>
    %c0_8 = arith.constant 0 : index
    %c0_9 = arith.constant 0 : index
    %10 = vector.load %arg5[%c0_8, %c0_9] : memref<32x128xf32, #tpu.memory_space<vmem>>, vector<32x128xf32>
    tpu.vector_store %arg5[%c0_8, %c0_9], %9 {strides = array<i32>} : memref<32x128xf32, #tpu.memory_space<vmem>>, vector<32x128xf32>,
    return
  }
  func.func @transform_0(%arg0: i32) -> (i32, i32) {
    %c0_i32 = arith.constant 0 : i32
    %c0_i32_0 = arith.constant 0 : i32
    return %arg0, %c0_i32 : i32, i32
  }
  func.func @transform_1(%arg0: i32) -> (i32, i32) {
    %c0_i32 = arith.constant 0 : i32
    %c0_i32_0 = arith.constant 0 : i32
    %c0_i32_1 = arith.constant 0 : i32
    return %c0_i32, %c0_i32_0 : i32, i32
  }
  func.func @transform_2(%arg0: i32) -> (i32, i32) {
    %c0_i32 = arith.constant 0 : i32
    %c0_i32_0 = arith.constant 0 : i32
    %c0_i32_1 = arith.constant 0 : i32
    return %c0_i32, %c0_i32_0 : i32, i32
  }
  func.func @transform_3(%arg0: i32) -> (i32, i32) {
    %c0_i32 = arith.constant 0 : i32
    %c0_i32_0 = arith.constant 0 : i32
    return %arg0, %c0_i32 : i32, i32
  }
  func.func @transform_4(%arg0: i32) -> (i32, i32) {
    %c0_i32 = arith.constant 0 : i32
    %c0_i32_0 = arith.constant 0 : i32
    return %arg0, %c0_i32 : i32, i32
  }
}

module attributes {stable_mosaic.version = 11 : i64} {
  func.func @_mm_kernel(%arg0: i32, %arg1: memref<32x576xbf16, #tpu.memory_space<vmem>>, %arg2: memref<576x128xbf16, #tpu.memory_space<vmem>>, %arg3: memref<1x128xf32, #tpu.memory_space<vmem>>, %arg4: memref<32x128xf32, #tpu.memory_space<vmem>>) attributes {dimension_semantics = [#tpu.dimension_semantics<parallel>], iteration_bounds = array<i64: 1>, scalar_prefetch = 0 : i64, scratch_operands = 0 : i64, tpu.core_type = #tpu.core_type<tc>, window_params = [{transform_indices = @transform_0, window_bounds = array<i64: 32, 576>}, {pipeline_mode = #tpu.pipeline_mode<synchronous>, transform_indices = @transform_1, window_bounds = array<i64: 576, 128>}, {pipeline_mode = #tpu.pipeline_mode<synchronous>, transform_indices = @transform_2, window_bounds = array<i64: 1, 128>}, {transform_indices = @transform_3, window_bounds = array<i64: 32, 128>}]} {
    %c0 = arith.constant 0 : index
    %c0_0 = arith.constant 0 : index
    %0 = vector.load %arg1[%c0, %c0_0] : memref<32x576xbf16, #tpu.memory_space<vmem>>, vector<32x576xbf16>
    %c0_1 = arith.constant 0 : index
    %c0_2 = arith.constant 0 : index
    %1 = vector.load %arg2[%c0_1, %c0_2] : memref<576x128xbf16, #tpu.memory_space<vmem>>, vector<576x128xbf16>
    %cst = arith.constant dense<0.000000e+00> : vector<32x128xf32>
    %2 = tpu.matmul %0, %1, %cst {dimension_numbers = #tpu.dot_dimension_numbers<[1], [0], [0], [1], [0, 0, 1, 1], [], []>} : vector<32x576xbf16>, vector<576x128xbf16>, vector<32x128xf32> -> vector<32x128xf32>
    %c0_3 = arith.constant 0 : index
    %c0_4 = arith.constant 0 : index
    %3 = vector.load %arg3[%c0_3, %c0_4] : memref<1x128xf32, #tpu.memory_space<vmem>>, vector<1x128xf32>
    %4 = vector.broadcast %3 : vector<1x128xf32> to vector<32x128xf32>
    %5 = arith.addf %2, %4 : vector<32x128xf32>
    %cst_5 = arith.constant 0.000000e+00 : f32
    %6 = vector.broadcast %cst_5 : f32 to vector<32x128xf32>
    %7 = arith.maximumf %5, %6 : vector<32x128xf32>
    %c0_6 = arith.constant 0 : index
    %c0_7 = arith.constant 0 : index
    %8 = vector.load %arg4[%c0_6, %c0_7] : memref<32x128xf32, #tpu.memory_space<vmem>>, vector<32x128xf32>
    tpu.vector_store %arg4[%c0_6, %c0_7], %7 {strides = array<i32>} : memref<32x128xf32, #tpu.memory_space<vmem>>, vector<32x128xf32>,
    return
  }
  func.func @transform_0(%arg0: i32) -> (i32, i32) {
    %c0_i32 = arith.constant 0 : i32
    %c0_i32_0 = arith.constant 0 : i32
    return %arg0, %c0_i32 : i32, i32
  }
  func.func @transform_1(%arg0: i32) -> (i32, i32) {
    %c0_i32 = arith.constant 0 : i32
    %c0_i32_0 = arith.constant 0 : i32
    %c0_i32_1 = arith.constant 0 : i32
    return %c0_i32, %c0_i32_0 : i32, i32
  }
  func.func @transform_2(%arg0: i32) -> (i32, i32) {
    %c0_i32 = arith.constant 0 : i32
    %c0_i32_0 = arith.constant 0 : i32
    %c0_i32_1 = arith.constant 0 : i32
    return %c0_i32, %c0_i32_0 : i32, i32
  }
  func.func @transform_3(%arg0: i32) -> (i32, i32) {
    %c0_i32 = arith.constant 0 : i32
    %c0_i32_0 = arith.constant 0 : i32
    return %arg0, %c0_i32 : i32, i32
  }
}

module attributes {stable_mosaic.version = 11 : i64} {
  func.func @_mm_kernel(%arg0: i32, %arg1: memref<32x256xbf16, #tpu.memory_space<vmem>>, %arg2: memref<256x128xbf16, #tpu.memory_space<vmem>>, %arg3: memref<1x128xf32, #tpu.memory_space<vmem>>, %arg4: memref<32x128xf32, #tpu.memory_space<vmem>>) attributes {dimension_semantics = [#tpu.dimension_semantics<parallel>], iteration_bounds = array<i64: 1>, scalar_prefetch = 0 : i64, scratch_operands = 0 : i64, tpu.core_type = #tpu.core_type<tc>, window_params = [{transform_indices = @transform_0, window_bounds = array<i64: 32, 256>}, {pipeline_mode = #tpu.pipeline_mode<synchronous>, transform_indices = @transform_1, window_bounds = array<i64: 256, 128>}, {pipeline_mode = #tpu.pipeline_mode<synchronous>, transform_indices = @transform_2, window_bounds = array<i64: 1, 128>}, {transform_indices = @transform_3, window_bounds = array<i64: 32, 128>}]} {
    %c0 = arith.constant 0 : index
    %c0_0 = arith.constant 0 : index
    %0 = vector.load %arg1[%c0, %c0_0] : memref<32x256xbf16, #tpu.memory_space<vmem>>, vector<32x256xbf16>
    %c0_1 = arith.constant 0 : index
    %c0_2 = arith.constant 0 : index
    %1 = vector.load %arg2[%c0_1, %c0_2] : memref<256x128xbf16, #tpu.memory_space<vmem>>, vector<256x128xbf16>
    %cst = arith.constant dense<0.000000e+00> : vector<32x128xf32>
    %2 = tpu.matmul %0, %1, %cst {dimension_numbers = #tpu.dot_dimension_numbers<[1], [0], [0], [1], [0, 0, 1, 1], [], []>} : vector<32x256xbf16>, vector<256x128xbf16>, vector<32x128xf32> -> vector<32x128xf32>
    %c0_3 = arith.constant 0 : index
    %c0_4 = arith.constant 0 : index
    %3 = vector.load %arg3[%c0_3, %c0_4] : memref<1x128xf32, #tpu.memory_space<vmem>>, vector<1x128xf32>
    %4 = vector.broadcast %3 : vector<1x128xf32> to vector<32x128xf32>
    %5 = arith.addf %2, %4 : vector<32x128xf32>
    %cst_5 = arith.constant 0.000000e+00 : f32
    %6 = vector.broadcast %cst_5 : f32 to vector<32x128xf32>
    %7 = arith.maximumf %5, %6 : vector<32x128xf32>
    %c0_6 = arith.constant 0 : index
    %c0_7 = arith.constant 0 : index
    %8 = vector.load %arg4[%c0_6, %c0_7] : memref<32x128xf32, #tpu.memory_space<vmem>>, vector<32x128xf32>
    tpu.vector_store %arg4[%c0_6, %c0_7], %7 {strides = array<i32>} : memref<32x128xf32, #tpu.memory_space<vmem>>, vector<32x128xf32>,
    return
  }
  func.func @transform_0(%arg0: i32) -> (i32, i32) {
    %c0_i32 = arith.constant 0 : i32
    %c0_i32_0 = arith.constant 0 : i32
    return %arg0, %c0_i32 : i32, i32
  }
  func.func @transform_1(%arg0: i32) -> (i32, i32) {
    %c0_i32 = arith.constant 0 : i32
    %c0_i32_0 = arith.constant 0 : i32
    %c0_i32_1 = arith.constant 0 : i32
    return %c0_i32, %c0_i32_0 : i32, i32
  }
  func.func @transform_2(%arg0: i32) -> (i32, i32) {
    %c0_i32 = arith.constant 0 : i32
    %c0_i32_0 = arith.constant 0 : i32
    %c0_i32_1 = arith.constant 0 : i32
    return %c0_i32, %c0_i32_0 : i32, i32
  }
  func.func @transform_3(%arg0: i32) -> (i32, i32) {
    %c0_i32 = arith.constant 0 : i32
    %c0_i32_0 = arith.constant 0 : i32
    return %arg0, %c0_i32 : i32, i32
  }
}

module attributes {stable_mosaic.version = 11 : i64} {
  func.func @_mm_kernel(%arg0: i32, %arg1: memref<256x128xbf16, #tpu.memory_space<vmem>>, %arg2: memref<128x128xbf16, #tpu.memory_space<vmem>>, %arg3: memref<1x128xf32, #tpu.memory_space<vmem>>, %arg4: memref<256x128xf32, #tpu.memory_space<vmem>>) attributes {dimension_semantics = [#tpu.dimension_semantics<parallel>], iteration_bounds = array<i64: 2>, scalar_prefetch = 0 : i64, scratch_operands = 0 : i64, tpu.core_type = #tpu.core_type<tc>, window_params = [{transform_indices = @transform_0, window_bounds = array<i64: 256, 128>}, {pipeline_mode = #tpu.pipeline_mode<synchronous>, transform_indices = @transform_1, window_bounds = array<i64: 128, 128>}, {pipeline_mode = #tpu.pipeline_mode<synchronous>, transform_indices = @transform_2, window_bounds = array<i64: 1, 128>}, {transform_indices = @transform_3, window_bounds = array<i64: 256, 128>}]} {
    %c0 = arith.constant 0 : index
    %c0_0 = arith.constant 0 : index
    %0 = vector.load %arg1[%c0, %c0_0] : memref<256x128xbf16, #tpu.memory_space<vmem>>, vector<256x128xbf16>
    %c0_1 = arith.constant 0 : index
    %c0_2 = arith.constant 0 : index
    %1 = vector.load %arg2[%c0_1, %c0_2] : memref<128x128xbf16, #tpu.memory_space<vmem>>, vector<128x128xbf16>
    %cst = arith.constant dense<0.000000e+00> : vector<256x128xf32>
    %2 = tpu.matmul %0, %1, %cst {dimension_numbers = #tpu.dot_dimension_numbers<[1], [0], [0], [1], [0, 0, 1, 1], [], []>} : vector<256x128xbf16>, vector<128x128xbf16>, vector<256x128xf32> -> vector<256x128xf32>
    %c0_3 = arith.constant 0 : index
    %c0_4 = arith.constant 0 : index
    %3 = vector.load %arg3[%c0_3, %c0_4] : memref<1x128xf32, #tpu.memory_space<vmem>>, vector<1x128xf32>
    %4 = vector.broadcast %3 : vector<1x128xf32> to vector<256x128xf32>
    %5 = arith.addf %2, %4 : vector<256x128xf32>
    %c0_5 = arith.constant 0 : index
    %c0_6 = arith.constant 0 : index
    %6 = vector.load %arg4[%c0_5, %c0_6] : memref<256x128xf32, #tpu.memory_space<vmem>>, vector<256x128xf32>
    tpu.vector_store %arg4[%c0_5, %c0_6], %5 {strides = array<i32>} : memref<256x128xf32, #tpu.memory_space<vmem>>, vector<256x128xf32>,
    return
  }
  func.func @transform_0(%arg0: i32) -> (i32, i32) {
    %c0_i32 = arith.constant 0 : i32
    %c0_i32_0 = arith.constant 0 : i32
    return %arg0, %c0_i32 : i32, i32
  }
  func.func @transform_1(%arg0: i32) -> (i32, i32) {
    %c0_i32 = arith.constant 0 : i32
    %c0_i32_0 = arith.constant 0 : i32
    %c0_i32_1 = arith.constant 0 : i32
    return %c0_i32, %c0_i32_0 : i32, i32
  }
  func.func @transform_2(%arg0: i32) -> (i32, i32) {
    %c0_i32 = arith.constant 0 : i32
    %c0_i32_0 = arith.constant 0 : i32
    %c0_i32_1 = arith.constant 0 : i32
    return %c0_i32, %c0_i32_0 : i32, i32
  }
  func.func @transform_3(%arg0: i32) -> (i32, i32) {
    %c0_i32 = arith.constant 0 : i32
    %c0_i32_0 = arith.constant 0 : i32
    return %arg0, %c0_i32 : i32, i32
  }
}

</mosaic_0001>

<llo_original>
// kernel: model_forward.19
$region0: #{model_forward.19}
  #allocation0 [shape = 'u32[]', space=smem, size = 0x4, offset = 0x4, fixed_abs, tag = 'smem constant byte address 0x4 - core index']
  #allocation1 [shape = 'u32[144,128]{1,0:T(1,128)}', space=vmem, size = 0x12000, scoped, tag = 'internal scratch']
  %s0 = inlined_call_operand.vmem [shape: bf16[512,48], index: 0, kind: input, shape index: {}]
  %s1 = inlined_call_operand.vmem [shape: bf16[48,128], index: 1, kind: input, shape index: {}]
  %s2 = inlined_call_operand.vmem [shape: f32[1,128], index: 2, kind: input, shape index: {}]
  %s3 = inlined_call_operand.vmem [shape: f32[512,128], index: 3, kind: output, shape index: {}]
  %s4 = sld [smem:[#allocation0]]
  $region45: #{model_forward.19} parent=0
    _
  %s6 = ssub.s32 1, %s4
  %s7 = scalar_select 0, %s6, %s4
  loop: start=0, step=1, limit=4
  $region2: #{model_forward.19} parent=0 // loop_pre_header
    _
  $region3: #{model_forward.19} parent=0 // loop_header
    %s9 = sphi 0, %s13
    %p10 = scmp.ge.s32.totalorder %s9, 4
    %s19 = sphi 0, %s21
    %s22 = sphi 0, %s19
    %s23 = sphi 0, %s22
    %s39 = sphi 0, %s23
    %s43 = sphi 0, %s43
    %s45 = sphi 0, %s43
    %s46 = sphi 0, %s45
    %s60 = sphi 0, %s46
    %s64 = sphi 0, %s64
    %s66 = sphi 0, %s64
    %s67 = sphi 0, %s66
    %s81 = sphi 0, %s67
    %s87 = sphi 0, %s89
    %s90 = sphi 0, %s87
    %s91 = sphi 0, %s90
    %s107 = sphi 0, %s91
  $region4: #{model_forward.19} parent=0 // loop_header_branch
    %12 = sbr.rel (%p10) target = $region8
  $region5: #{model_forward.19} parent=0 // loop_body
    %s14 = ssub.s32 %s9, 1
    %s15 = ssub.s32 %s9, 2
    %s16 = sadd.s32 %s9, 1
    %s17 = ssub.s32 %s9, %s16
    %p18 = scmp.eq.s32.totalorder %s17, 0
    %s20 = sadd.s32 %s19, 1
    %s21 = scalar_select %p18, %s19, %s20
    %p24 = pneg %p18
    %p25 = scmp.eq.s32.totalorder %s9, 1
    %p26 = por %p24, %p25
    %p27 = scmp.ne.s32.totalorder %s19, %s22
    %p28 = scmp.eq.s32.totalorder %s9, 0
    %p29 = por %p27, %p28
    %p30 = scmp.ne.s32.totalorder %s19, %s22
    %p31 = scmp.eq.s32.totalorder %s14, 1
    %p32 = por %p30, %p31
    %p33 = scmp.ne.s32.totalorder %s22, %s23
    %p34 = scmp.eq.s32.totalorder %s14, 0
    %p35 = por %p33, %p34
    %p36 = scmp.ne.s32.totalorder %s22, %s23
    %p37 = scmp.eq.s32.totalorder %s15, 1
    %p38 = por %p36, %p37
    %p40 = scmp.ne.s32.totalorder %s23, %s39
    %p41 = scmp.eq.s32.totalorder %s15, 0
    %p42 = por %p40, %p41
    %s44 = sadd.s32 %s43, 1
    %p47 = scmp.eq.s32.totalorder %s9, 1
    %p48 = scmp.ne.s32.totalorder %s43, %s45
    %p49 = scmp.eq.s32.totalorder %s9, 0
    %p50 = por %p48, %p49
    %p51 = scmp.ne.s32.totalorder %s43, %s45
    %p52 = scmp.eq.s32.totalorder %s14, 1
    %p53 = por %p51, %p52
    %p54 = scmp.ne.s32.totalorder %s45, %s46
    %p55 = scmp.eq.s32.totalorder %s14, 0
    %p56 = por %p54, %p55
    %p57 = scmp.ne.s32.totalorder %s45, %s46
    %p58 = scmp.eq.s32.totalorder %s15, 1
    %p59 = por %p57, %p58
    %p61 = scmp.ne.s32.totalorder %s46, %s60
    %p62 = scmp.eq.s32.totalorder %s15, 0
    %p63 = por %p61, %p62
    %s65 = sadd.s32 %s64, 1
    %p68 = scmp.eq.s32.totalorder %s9, 1
    %p69 = scmp.ne.s32.totalorder %s64, %s66
    %p70 = scmp.eq.s32.totalorder %s9, 0
    %p71 = por %p69, %p70
    %p72 = scmp.ne.s32.totalorder %s64, %s66
    %p73 = scmp.eq.s32.totalorder %s14, 1
    %p74 = por %p72, %p73
    %p75 = scmp.ne.s32.totalorder %s66, %s67
    %p76 = scmp.eq.s32.totalorder %s14, 0
    %p77 = por %p75, %p76
    %p78 = scmp.ne.s32.totalorder %s66, %s67
    %p79 = scmp.eq.s32.totalorder %s15, 1
    %p80 = por %p78, %p79
    %p82 = scmp.ne.s32.totalorder %s67, %s81
    %p83 = scmp.eq.s32.totalorder %s15, 0
    %p84 = por %p82, %p83
    %s85 = ssub.s32 %s9, %s16
    %p86 = scmp.eq.s32.totalorder %s85, 0
    %s88 = sadd.s32 %s87, 1
    %s89 = scalar_select %p86, %s87, %s88
    %p92 = pneg %p86
    %p93 = scmp.eq.s32.totalorder %s9, 1
    %p94 = por %p92, %p93
    %p95 = scmp.ne.s32.totalorder %s87, %s90
    %p96 = scmp.eq.s32.totalorder %s9, 0
    %p97 = por %p95, %p96
    %p98 = scmp.ne.s32.totalorder %s87, %s90
    %p99 = scmp.eq.s32.totalorder %s14, 1
    %p100 = por %p98, %p99
    %p101 = scmp.ne.s32.totalorder %s90, %s91
    %p102 = scmp.eq.s32.totalorder %s14, 0
    %p103 = por %p101, %p102
    %p104 = scmp.ne.s32.totalorder %s90, %s91
    %p105 = scmp.eq.s32.totalorder %s15, 1
    %p106 = por %p104, %p105
    %p108 = scmp.ne.s32.totalorder %s91, %s107
    %p109 = scmp.eq.s32.totalorder %s15, 0
    %p110 = por %p108, %p109
    %p111 = scmp.le.s32.totalorder 1, %s9
    %p112 = scmp.lt.s32.totalorder %s9, 3
    %p113 = pnand %p111, %p112
    %p114 = pneg %p113
    // Predicated region
    $region9: #{model_forward.19} parent=5 // pred_check
      _
    $region10: #{model_forward.19} parent=5 // pred_check_branch
      %116 = sbr.rel (%p113) target = $region12
    $region11: #{model_forward.19} parent=5 // pred_region
      %s117 = ssub.s32 %s9, 1
      // Predicated region
      $region13: #{model_forward.19} parent=11 // pred_check
        %p118 = pneg %p56
      $region14: #{model_forward.19} parent=11 // pred_check_branch
        %120 = sbr.rel (%p118) target = $region16
      $region15: #{model_forward.19} parent=11 // pred_region
        _
      $region16: #{model_forward.19} parent=11 // pred_fallthru
        _
      // Predicated region
      $region17: #{model_forward.19} parent=11 // pred_check
        %p121 = pneg %p77
      $region18: #{model_forward.19} parent=11 // pred_check_branch
        %123 = sbr.rel (%p121) target = $region20
      $region19: #{model_forward.19} parent=11 // pred_region
        _
      $region20: #{model_forward.19} parent=11 // pred_fallthru
        _
    $region12: #{model_forward.19} parent=5 // pred_fallthru
      _
    %p124 = scmp.lt.s32.totalorder %s9, 2
    // Predicated region
    $region21: #{model_forward.19} parent=5 // pred_check
      %p125 = pneg %p124
    $region22: #{model_forward.19} parent=5 // pred_check_branch
      %127 = sbr.rel (%p125) target = $region24
    $region23: #{model_forward.19} parent=5 // pred_region
      // Predicated region
      $region25: #{model_forward.19} parent=23 // pred_check
        %p128 = pneg %p29
      $region26: #{model_forward.19} parent=23 // pred_check_branch
        %130 = sbr.rel (%p128) target = $region28
      $region27: #{model_forward.19} parent=23 // pred_region
        %s131 = smul.u32 32, %s9
        %p132 = scmp.lt.s32.totalorder %s131, 63
        %s133 = scalar_select %p132, %s131, 63
        %s134 = smul.addr %s133, 4
        %s135 = scalar_lea.vmem %s0, %s134
        %s136 = smul.u32 32, %s9
      $region28: #{model_forward.19} parent=23 // pred_fallthru
        _
    $region24: #{model_forward.19} parent=5 // pred_fallthru
      _
    %p137 = scmp.le.s32.totalorder 1, %s9
    %p138 = scmp.lt.s32.totalorder %s9, 3
    %p139 = pnand %p137, %p138
    %p140 = pneg %p139
    // Predicated region
    $region29: #{model_forward.19} parent=5 // pred_check
      _
    $region30: #{model_forward.19} parent=5 // pred_check_branch
      %142 = sbr.rel (%p139) target = $region32
    $region31: #{model_forward.19} parent=5 // pred_region
      %s143 = ssub.s32 %s9, 1
      %s144 = smul.u32 32, %s14
      %p145 = scmp.lt.s32.totalorder %s144, 63
      %s146 = scalar_select %p145, %s144, 63
      %s147 = smul.addr %s146, 4
      %s148 = scalar_lea.vmem %s0, %s147
      %p149 = pneg %p35
      %p150 = pneg %p32
      %p151 = pneg %p56
      %p152 = pneg %p53
      %p153 = pneg %p77
      %p154 = pneg %p74
      %p155 = pneg %p103
      %p156 = pneg %p100
      %s157 = smul.u32 32, %s14
      %p158 = scmp.lt.s32.totalorder %s157, 63
      %s159 = scalar_select %p158, %s157, 63
      %s160 = smul.addr %s159, 8
      %s161 = scalar_lea.vmem %s3, %s160
      %s162 = smul.u32 32, %s14
      %p163 = scmp.lt.s32.totalorder %s162, 63
      %s164 = scalar_select %p163, %s162, 63
      %s165 = smul.addr %s164, 4
      %s166 = scalar_lea.vmem %s0, %s165
      %s167 = smul.u32 32, %s14
      %s168 = smul.u32 32, %s14
      %p169 = scmp.lt.s32.totalorder %s168, 63
      %s170 = scalar_select %p169, %s168, 63
      %s171 = smul.addr %s170, 8
      %s172 = scalar_lea.vmem %s3, %s171
      %s173 = smul.u32 32, %s14
      %v175 = vld [vmem:[%s166] sm:$0xf]
      %v176 = vld [vmem:[%s166 + $0x4] sm:$0xf]
      %v177 = vld [vmem:[%s166 + $0x8] sm:$0xf]
      %v178 = vld [vmem:[%s166 + $0xc] sm:$0xf]
      %v179 = vld [vmem:[%s166 + $0x10] sm:$0xf]
      %v180 = vld [vmem:[%s166 + $0x14] sm:$0xf]
      %v181 = vld [vmem:[%s166 + $0x18] sm:$0xf]
      %v182 = vld [vmem:[%s166 + $0x1c] sm:$0xf]
      %v183 = vld [vmem:[%s166 + $0x20] sm:$0xf]
      %v184 = vld [vmem:[%s166 + $0x24] sm:$0xf]
      %v185 = vld [vmem:[%s166 + $0x28] sm:$0xf]
      %v186 = vld [vmem:[%s166 + $0x2c] sm:$0xf]
      %v187 = vld [vmem:[%s166 + $0x30] sm:$0xf]
      %v188 = vld [vmem:[%s166 + $0x34] sm:$0xf]
      %v189 = vld [vmem:[%s166 + $0x38] sm:$0xf]
      %v190 = vld [vmem:[%s166 + $0x3c] sm:$0xf]
      %v191 = vld [vmem:[%s166 + $0x40] sm:$0xf]
      %v192 = vld [vmem:[%s166 + $0x44] sm:$0xf]
      %v193 = vld [vmem:[%s166 + $0x48] sm:$0xf]
      %v194 = vld [vmem:[%s166 + $0x4c] sm:$0xf]
      %v195 = vld [vmem:[%s166 + $0x50] sm:$0xf]
      %v196 = vld [vmem:[%s166 + $0x54] sm:$0xf]
      %v197 = vld [vmem:[%s166 + $0x58] sm:$0xf]
      %v198 = vld [vmem:[%s166 + $0x5c] sm:$0xf]
      %v199 = vld [vmem:[%s166 + $0x60] sm:$0xf]
      %v200 = vld [vmem:[%s166 + $0x64] sm:$0xf]
      %v201 = vld [vmem:[%s166 + $0x68] sm:$0xf]
      %v202 = vld [vmem:[%s166 + $0x6c] sm:$0xf]
      %v203 = vld [vmem:[%s166 + $0x70] sm:$0xf]
      %v204 = vld [vmem:[%s166 + $0x74] sm:$0xf]
      %v205 = vld [vmem:[%s166 + $0x78] sm:$0xf]
      %v206 = vld [vmem:[%s166 + $0x7c] sm:$0xf]
      %v207 = vld [vmem:[%s1] sm:$0xf]
      %v208 = vld [vmem:[%s1 + $0x4] sm:$0xf]
      %v209 = vld [vmem:[%s1 + $0x8] sm:$0xf]
      %v210 = vld [vmem:[%s1 + $0xc] sm:$0xf]
      %v211 = vld [vmem:[%s1 + $0x10] sm:$0xf]
      %v212 = vld [vmem:[%s1 + $0x14] sm:$0xf]
      %v213 = vld [vmem:[%s2] sm:$0x1]
      %v215 = vlaneseq
      %v216 = vshrl.u32 %v215, 7
      %v217 = vsub.s32 0, %v216
      %v218 = vrot.slane %v213, %v217
      %v252 = vunpack.c.l.b16 %v175
      %v253 = vunpack.c.l.b16 %v176
      %v254 = vunpack.c.l.b16 %v177
      %v255 = vunpack.c.l.b16 %v178
      %v256 = vunpack.c.l.b16 %v179
      %v257 = vunpack.c.l.b16 %v180
      %v258 = vunpack.c.l.b16 %v181
      %v259 = vunpack.c.l.b16 %v182
      %v260 = vunpack.c.l.b16 %v183
      %v261 = vunpack.c.l.b16 %v184
      %v262 = vunpack.c.l.b16 %v185
      %v263 = vunpack.c.l.b16 %v186
      %v264 = vunpack.c.l.b16 %v187
      %v265 = vunpack.c.l.b16 %v188
      %v266 = vunpack.c.l.b16 %v189
      %v267 = vunpack.c.l.b16 %v190
      %v268 = vunpack.c.l.b16 %v191
      %v269 = vunpack.c.l.b16 %v192
      %v270 = vunpack.c.l.b16 %v193
      %v271 = vunpack.c.l.b16 %v194
      %v272 = vunpack.c.l.b16 %v195
      %v273 = vunpack.c.l.b16 %v196
      %v274 = vunpack.c.l.b16 %v197
      %v275 = vunpack.c.l.b16 %v198
      %v276 = vunpack.c.l.b16 %v199
      %v277 = vunpack.c.l.b16 %v200
      %v278 = vunpack.c.l.b16 %v201
      %v279 = vunpack.c.l.b16 %v202
      %v280 = vunpack.c.l.b16 %v203
      %v281 = vunpack.c.l.b16 %v204
      %v282 = vunpack.c.l.b16 %v205
      %v283 = vunpack.c.l.b16 %v206
      %v284 = vpack.c.b16 %v253, %v252
      %v285 = vpack.c.b16 %v255, %v254
      %v286 = vpack.c.b16 %v257, %v256
      %v287 = vpack.c.b16 %v259, %v258
      %v288 = vpack.c.b16 %v261, %v260
      %v289 = vpack.c.b16 %v263, %v262
      %v290 = vpack.c.b16 %v265, %v264
      %v291 = vpack.c.b16 %v267, %v266
      %v292 = vpack.c.b16 %v269, %v268
      %v293 = vpack.c.b16 %v271, %v270
      %v294 = vpack.c.b16 %v273, %v272
      %v295 = vpack.c.b16 %v275, %v274
      %v296 = vpack.c.b16 %v277, %v276
      %v297 = vpack.c.b16 %v279, %v278
      %v298 = vpack.c.b16 %v281, %v280
      %v299 = vpack.c.b16 %v283, %v282
      %v306 = vunpack.c.l.b16 %v207
      %v307 = vunpack.c.l.b16 %v208
      %v308 = vunpack.c.l.b16 %v209
      %v309 = vunpack.c.l.b16 %v210
      %v310 = vunpack.c.l.b16 %v211
      %v311 = vunpack.c.l.b16 %v212
      %v312 = vpack.c.b16 %v307, %v306
      %v313 = vpack.c.b16 %v309, %v308
      %v314 = vpack.c.b16 %v311, %v310
      %vm318 = vcmask 392192
      %v320 = vsel %vm318, %v284, 0
      %v323 = vsel %vm318, %v285, 0
      %v326 = vsel %vm318, %v286, 0
      %v329 = vsel %vm318, %v287, 0
      %v332 = vsel %vm318, %v288, 0
      %v335 = vsel %vm318, %v289, 0
      %v338 = vsel %vm318, %v290, 0
      %v341 = vsel %vm318, %v291, 0
      %v344 = vsel %vm318, %v292, 0
      %v347 = vsel %vm318, %v293, 0
      %v350 = vsel %vm318, %v294, 0
      %v353 = vsel %vm318, %v295, 0
      %v356 = vsel %vm318, %v296, 0
      %v359 = vsel %vm318, %v297, 0
      %v362 = vsel %vm318, %v298, 0
      %v365 = vsel %vm318, %v299, 0
      %367 = vmatprep.subr.bf16.mxu0 0
      %368 = vmatpush1.bf16.msra.mxu0 0
      %369 = vmatprep.subr.bf16.mxu0 0
      %370 = vmatpush1.bf16.msra.mxu0 0
      %371 = vmatprep.subr.bf16.mxu0 0
      %372 = vmatpush1.bf16.msra.mxu0 0
      %373 = vmatprep.subr.bf16.mxu0 0
      %374 = vmatpush1.bf16.msra.mxu0 0
      %375 = vmatprep.subr.bf16.mxu0 0
      %376 = vmatpush1.bf16.msra.mxu0 0
      %377 = vmatprep.subr.bf16.mxu0 0
      %378 = vmatpush1.bf16.msra.mxu0 %v314
      %379 = vmatprep.subr.bf16.mxu0 0
      %380 = vmatpush1.bf16.msra.mxu0 %v313
      %381 = vmatprep.subr.bf16.mxu0 0
      %382 = vmatpush1.bf16.msra.mxu0 %v312
      %383 = vmatprep.subr.bf16.mxu0 0
      %384 = vmatpush2.bf16.msra.mxu0 0
      %385 = vmatprep.subr.bf16.mxu0 0
      %386 = vmatpush2.bf16.msra.mxu0 0
      %387 = vmatprep.subr.bf16.mxu0 0
      %388 = vmatpush2.bf16.msra.mxu0 0
      %389 = vmatprep.subr.bf16.mxu0 0
      %390 = vmatpush2.bf16.msra.mxu0 0
      %391 = vmatprep.subr.bf16.mxu0 0
      %392 = vmatpush2.bf16.msra.mxu0 0
      %393 = vmatprep.subr.bf16.mxu0 0
      %394 = vmatpush2.bf16.msra.mxu0 0
      %395 = vmatprep.subr.bf16.mxu0 0
      %396 = vmatpush2.bf16.msra.mxu0 0
      %397 = vmatprep.subr.bf16.mxu0 0
      %398 = vmatpush2.bf16.msra.mxu0 0
      %399 = vmatprep.mubr.bf16.mxu0 0
      %400 = vmatmul.mubr.bf16.gmra.mxu0 %v320
      %v401 = vpop.f32.mrf.mxu0
      %v402 = vadd.f32 %v218, %v401
      %v403 = vpop.f32.mrf.mxu0
      %v404 = vpop.f32.mrf.mxu0
      %v405 = vadd.f32 %v218, %v404
      %v406 = vpop.f32.mrf.mxu0
      %407 = vmatprep.mubr.bf16.mxu0 0
      %408 = vmatmul.mubr.bf16.gmra.mxu0 %v323
      %v409 = vpop.f32.mrf.mxu0
      %v410 = vadd.f32 %v218, %v409
      %v411 = vpop.f32.mrf.mxu0
      %v412 = vpop.f32.mrf.mxu0
      %v413 = vadd.f32 %v218, %v412
      %v414 = vpop.f32.mrf.mxu0
      %415 = vmatprep.mubr.bf16.mxu0 0
      %416 = vmatmul.mubr.bf16.gmra.mxu0 %v326
      %v417 = vpop.f32.mrf.mxu0
      %v418 = vadd.f32 %v218, %v417
      %v419 = vpop.f32.mrf.mxu0
      %v420 = vpop.f32.mrf.mxu0
      %v421 = vadd.f32 %v218, %v420
      %v422 = vpop.f32.mrf.mxu0
      %423 = vmatprep.mubr.bf16.mxu0 0
      %424 = vmatmul.mubr.bf16.gmra.mxu0 %v329
      %v425 = vpop.f32.mrf.mxu0
      %v426 = vadd.f32 %v218, %v425
      %v427 = vpop.f32.mrf.mxu0
      %v428 = vpop.f32.mrf.mxu0
      %v429 = vadd.f32 %v218, %v428
      %v430 = vpop.f32.mrf.mxu0
      %431 = vmatprep.mubr.bf16.mxu0 0
      %432 = vmatmul.mubr.bf16.gmra.mxu0 %v332
      %v433 = vpop.f32.mrf.mxu0
      %v434 = vadd.f32 %v218, %v433
      %v435 = vpop.f32.mrf.mxu0
      %v436 = vpop.f32.mrf.mxu0
      %v437 = vadd.f32 %v218, %v436
      %v438 = vpop.f32.mrf.mxu0
      %439 = vmatprep.mubr.bf16.mxu0 0
      %440 = vmatmul.mubr.bf16.gmra.mxu0 %v335
      %v441 = vpop.f32.mrf.mxu0
      %v442 = vadd.f32 %v218, %v441
      %v443 = vpop.f32.mrf.mxu0
      %v444 = vpop.f32.mrf.mxu0
      %v445 = vadd.f32 %v218, %v444
      %v446 = vpop.f32.mrf.mxu0
      %447 = vmatprep.mubr.bf16.mxu0 0
      %448 = vmatmul.mubr.bf16.gmra.mxu0 %v338
      %v449 = vpop.f32.mrf.mxu0
      %v450 = vadd.f32 %v218, %v449
      %v451 = vpop.f32.mrf.mxu0
      %v452 = vpop.f32.mrf.mxu0
      %v453 = vadd.f32 %v218, %v452
      %v454 = vpop.f32.mrf.mxu0
      %455 = vmatprep.mubr.bf16.mxu0 0
      %456 = vmatmul.mubr.bf16.gmra.mxu0 %v341
      %v457 = vpop.f32.mrf.mxu0
      %v458 = vadd.f32 %v218, %v457
      %v459 = vpop.f32.mrf.mxu0
      %v460 = vpop.f32.mrf.mxu0
      %v461 = vadd.f32 %v218, %v460
      %v462 = vpop.f32.mrf.mxu0
      %463 = vmatprep.mubr.bf16.mxu0 0
      %464 = vmatmul.mubr.bf16.gmra.mxu0 %v344
      %v465 = vpop.f32.mrf.mxu0
      %v466 = vadd.f32 %v218, %v465
      %v467 = vpop.f32.mrf.mxu0
      %v468 = vpop.f32.mrf.mxu0
      %v469 = vadd.f32 %v218, %v468
      %v470 = vpop.f32.mrf.mxu0
      %471 = vmatprep.mubr.bf16.mxu0 0
      %472 = vmatmul.mubr.bf16.gmra.mxu0 %v347
      %v473 = vpop.f32.mrf.mxu0
      %v474 = vadd.f32 %v218, %v473
      %v475 = vpop.f32.mrf.mxu0
      %v476 = vpop.f32.mrf.mxu0
      %v477 = vadd.f32 %v218, %v476
      %v478 = vpop.f32.mrf.mxu0
      %479 = vmatprep.mubr.bf16.mxu0 0
      %480 = vmatmul.mubr.bf16.gmra.mxu0 %v350
      %v481 = vpop.f32.mrf.mxu0
      %v482 = vadd.f32 %v218, %v481
      %v483 = vpop.f32.mrf.mxu0
      %v484 = vpop.f32.mrf.mxu0
      %v485 = vadd.f32 %v218, %v484
      %v486 = vpop.f32.mrf.mxu0
      %487 = vmatprep.mubr.bf16.mxu0 0
      %488 = vmatmul.mubr.bf16.gmra.mxu0 %v353
      %v489 = vpop.f32.mrf.mxu0
      %v490 = vadd.f32 %v218, %v489
      %v491 = vpop.f32.mrf.mxu0
      %v492 = vpop.f32.mrf.mxu0
      %v493 = vadd.f32 %v218, %v492
      %v494 = vpop.f32.mrf.mxu0
      %495 = vmatprep.mubr.bf16.mxu0 0
      %496 = vmatmul.mubr.bf16.gmra.mxu0 %v356
      %v497 = vpop.f32.mrf.mxu0
      %v498 = vadd.f32 %v218, %v497
      %v499 = vpop.f32.mrf.mxu0
      %v500 = vpop.f32.mrf.mxu0
      %v501 = vadd.f32 %v218, %v500
      %v502 = vpop.f32.mrf.mxu0
      %503 = vmatprep.mubr.bf16.mxu0 0
      %504 = vmatmul.mubr.bf16.gmra.mxu0 %v359
      %v505 = vpop.f32.mrf.mxu0
      %v506 = vadd.f32 %v218, %v505
      %v507 = vpop.f32.mrf.mxu0
      %v508 = vpop.f32.mrf.mxu0
      %v509 = vadd.f32 %v218, %v508
      %v510 = vpop.f32.mrf.mxu0
      %511 = vmatprep.mubr.bf16.mxu0 0
      %512 = vmatmul.mubr.bf16.gmra.mxu0 %v362
      %v513 = vpop.f32.mrf.mxu0
      %v514 = vadd.f32 %v218, %v513
      %v515 = vpop.f32.mrf.mxu0
      %v516 = vpop.f32.mrf.mxu0
      %v517 = vadd.f32 %v218, %v516
      %v518 = vpop.f32.mrf.mxu0
      %519 = vmatprep.mubr.bf16.mxu0 0
      %520 = vmatmul.mubr.bf16.gmra.mxu0 %v365
      %v521 = vpop.f32.mrf.mxu0
      %v522 = vadd.f32 %v218, %v521
      %v523 = vpop.f32.mrf.mxu0
      %v524 = vpop.f32.mrf.mxu0
      %v525 = vadd.f32 %v218, %v524
      %v526 = vpop.f32.mrf.mxu0
      %527 = vdwg.mxu0
      %v528 = vmax.f32 %v402, 0.0
      %v529 = vmax.f32 %v405, 0.0
      %v530 = vmax.f32 %v410, 0.0
      %v531 = vmax.f32 %v413, 0.0
      %v532 = vmax.f32 %v418, 0.0
      %v533 = vmax.f32 %v421, 0.0
      %v534 = vmax.f32 %v426, 0.0
      %v535 = vmax.f32 %v429, 0.0
      %v536 = vmax.f32 %v434, 0.0
      %v537 = vmax.f32 %v437, 0.0
      %v538 = vmax.f32 %v442, 0.0
      %v539 = vmax.f32 %v445, 0.0
      %v540 = vmax.f32 %v450, 0.0
      %v541 = vmax.f32 %v453, 0.0
      %v542 = vmax.f32 %v458, 0.0
      %v543 = vmax.f32 %v461, 0.0
      %v544 = vmax.f32 %v466, 0.0
      %v545 = vmax.f32 %v469, 0.0
      %v546 = vmax.f32 %v474, 0.0
      %v547 = vmax.f32 %v477, 0.0
      %v548 = vmax.f32 %v482, 0.0
      %v549 = vmax.f32 %v485, 0.0
      %v550 = vmax.f32 %v490, 0.0
      %v551 = vmax.f32 %v493, 0.0
      %v552 = vmax.f32 %v498, 0.0
      %v553 = vmax.f32 %v501, 0.0
      %v554 = vmax.f32 %v506, 0.0
      %v555 = vmax.f32 %v509, 0.0
      %v556 = vmax.f32 %v514, 0.0
      %v557 = vmax.f32 %v517, 0.0
      %v558 = vmax.f32 %v522, 0.0
      %v559 = vmax.f32 %v525, 0.0
      %560 = vst [vmem:[%s172] sm:$0xff] %v528
      %561 = vst [vmem:[%s172 + $0x8] sm:$0xff] %v529
      %562 = vst [vmem:[%s172 + $0x10] sm:$0xff] %v530
      %563 = vst [vmem:[%s172 + $0x18] sm:$0xff] %v531
      %564 = vst [vmem:[%s172 + $0x20] sm:$0xff] %v532
      %565 = vst [vmem:[%s172 + $0x28] sm:$0xff] %v533
      %566 = vst [vmem:[%s172 + $0x30] sm:$0xff] %v534
      %567 = vst [vmem:[%s172 + $0x38] sm:$0xff] %v535
      %568 = vst [vmem:[%s172 + $0x40] sm:$0xff] %v536
      %569 = vst [vmem:[%s172 + $0x48] sm:$0xff] %v537
      %570 = vst [vmem:[%s172 + $0x50] sm:$0xff] %v538
      %571 = vst [vmem:[%s172 + $0x58] sm:$0xff] %v539
      %572 = vst [vmem:[%s172 + $0x60] sm:$0xff] %v540
      %573 = vst [vmem:[%s172 + $0x68] sm:$0xff] %v541
      %574 = vst [vmem:[%s172 + $0x70] sm:$0xff] %v542
      %575 = vst [vmem:[%s172 + $0x78] sm:$0xff] %v543
      %576 = vst [vmem:[%s172 + $0x80] sm:$0xff] %v544
      %577 = vst [vmem:[%s172 + $0x88] sm:$0xff] %v545
      %578 = vst [vmem:[%s172 + $0x90] sm:$0xff] %v546
      %579 = vst [vmem:[%s172 + $0x98] sm:$0xff] %v547
      %580 = vst [vmem:[%s172 + $0xa0] sm:$0xff] %v548
      %581 = vst [vmem:[%s172 + $0xa8] sm:$0xff] %v549
      %582 = vst [vmem:[%s172 + $0xb0] sm:$0xff] %v550
      %583 = vst [vmem:[%s172 + $0xb8] sm:$0xff] %v551
      %584 = vst [vmem:[%s172 + $0xc0] sm:$0xff] %v552
      %585 = vst [vmem:[%s172 + $0xc8] sm:$0xff] %v553
      %586 = vst [vmem:[%s172 + $0xd0] sm:$0xff] %v554
      %587 = vst [vmem:[%s172 + $0xd8] sm:$0xff] %v555
      %588 = vst [vmem:[%s172 + $0xe0] sm:$0xff] %v556
      %589 = vst [vmem:[%s172 + $0xe8] sm:$0xff] %v557
      %590 = vst [vmem:[%s172 + $0xf0] sm:$0xff] %v558
      %591 = vst [vmem:[%s172 + $0xf8] sm:$0xff] %v559
      %s592 = smul.u32 32, %s14
      %p593 = scmp.lt.s32.totalorder %s592, 63
      %s594 = scalar_select %p593, %s592, 63
      %s595 = smul.addr %s594, 8
      %s596 = scalar_lea.vmem %s3, %s595
      // Predicated region
      $region33: #{model_forward.19} parent=31 // pred_check
        %p597 = pneg %p100
      $region34: #{model_forward.19} parent=31 // pred_check_branch
        %599 = sbr.rel (%p597) target = $region36
      $region35: #{model_forward.19} parent=31 // pred_region
        %s600 = smul.u32 32, %s14
      $region36: #{model_forward.19} parent=31 // pred_fallthru
        _
    $region32: #{model_forward.19} parent=5 // pred_fallthru
      _
    %p601 = scmp.le.s32.totalorder 2, %s9
    // Predicated region
    $region37: #{model_forward.19} parent=5 // pred_check
      %p602 = pneg %p601
    $region38: #{model_forward.19} parent=5 // pred_check_branch
      %604 = sbr.rel (%p602) target = $region40
    $region39: #{model_forward.19} parent=5 // pred_region
      %s605 = ssub.s32 %s9, 2
      // Predicated region
      $region41: #{model_forward.19} parent=39 // pred_check
        %p606 = pneg %p106
      $region42: #{model_forward.19} parent=39 // pred_check_branch
        %608 = sbr.rel (%p606) target = $region44
      $region43: #{model_forward.19} parent=39 // pred_region
        %s609 = smul.u32 32, %s15
        %p610 = scmp.lt.s32.totalorder %s609, 63
        %s611 = scalar_select %p610, %s609, 63
        %s612 = smul.addr %s611, 8
        %s613 = scalar_lea.vmem %s3, %s612
      $region44: #{model_forward.19} parent=39 // pred_fallthru
        _
    $region40: #{model_forward.19} parent=5 // pred_fallthru
      _
  $region6: #{model_forward.19} parent=0 // loop_footer
    %s13 = sadd.s32 1, %s9
  $region7: #{model_forward.19} parent=0 // loop_footer_branch
    %8 = sbr.rel target = $region3
  $region8: #{model_forward.19} parent=0 // loop_exit
    _

// kernel: model_forward.20
$region0: #{model_forward.20}
  #allocation0 [shape = 'u32[]', space=smem, size = 0x4, offset = 0x4, fixed_abs, tag = 'smem constant byte address 0x4 - core index']
  #allocation1 [shape = 'u32[144,128]{1,0:T(1,128)}', space=vmem, size = 0x12000, scoped, tag = 'internal scratch']
  %s0 = inlined_call_operand.vmem [shape: bf16[128,256], index: 0, kind: input, shape index: {}]
  %s1 = inlined_call_operand.vmem [shape: bf16[256,128], index: 1, kind: input, shape index: {}]
  %s2 = inlined_call_operand.vmem [shape: f32[1,128], index: 2, kind: input, shape index: {}]
  %s3 = inlined_call_operand.vmem [shape: f32[128,128], index: 3, kind: output, shape index: {}]
  %s4 = sld [smem:[#allocation0]]
  $region22: #{model_forward.20} parent=0
    _
  %s6 = ssub.s32 1, %s4
  %s7 = scalar_select 0, %s6, %s4
  // Predicated region
  $region2: #{model_forward.20} parent=0 // pred_check
    _
  $region3: #{model_forward.20} parent=0 // pred_check_branch
    %9 = sbr.rel (0) target = $region5
  $region4: #{model_forward.20} parent=0 // pred_region
    _
  $region5: #{model_forward.20} parent=0 // pred_fallthru
    _
  // Predicated region
  $region6: #{model_forward.20} parent=0 // pred_check
    _
  $region7: #{model_forward.20} parent=0 // pred_check_branch
    %11 = sbr.rel (0) target = $region9
  $region8: #{model_forward.20} parent=0 // pred_region
    _
  $region9: #{model_forward.20} parent=0 // pred_fallthru
    _
  // Predicated region
  $region10: #{model_forward.20} parent=0 // pred_check
    _
  $region11: #{model_forward.20} parent=0 // pred_check_branch
    %13 = sbr.rel (0) target = $region13
  $region12: #{model_forward.20} parent=0 // pred_region
    _
  $region13: #{model_forward.20} parent=0 // pred_fallthru
    _
  %v15 = vld [vmem:[%s0] sm:$0xff]
  %v16 = vld [vmem:[%s0 + $0x8] sm:$0xff]
  %v17 = vld [vmem:[%s0 + $0x10] sm:$0xff]
  %v18 = vld [vmem:[%s0 + $0x18] sm:$0xff]
  %v19 = vld [vmem:[%s0 + $0x20] sm:$0xff]
  %v20 = vld [vmem:[%s0 + $0x28] sm:$0xff]
  %v21 = vld [vmem:[%s0 + $0x30] sm:$0xff]
  %v22 = vld [vmem:[%s0 + $0x38] sm:$0xff]
  %v23 = vld [vmem:[%s0 + $0x40] sm:$0xff]
  %v24 = vld [vmem:[%s0 + $0x48] sm:$0xff]
  %v25 = vld [vmem:[%s0 + $0x50] sm:$0xff]
  %v26 = vld [vmem:[%s0 + $0x58] sm:$0xff]
  %v27 = vld [vmem:[%s0 + $0x60] sm:$0xff]
  %v28 = vld [vmem:[%s0 + $0x68] sm:$0xff]
  %v29 = vld [vmem:[%s0 + $0x70] sm:$0xff]
  %v30 = vld [vmem:[%s0 + $0x78] sm:$0xff]
  %v31 = vld [vmem:[%s1] sm:$0xf]
  %v32 = vld [vmem:[%s1 + $0x4] sm:$0xf]
  %v33 = vld [vmem:[%s1 + $0x8] sm:$0xf]
  %v34 = vld [vmem:[%s1 + $0xc] sm:$0xf]
  %v35 = vld [vmem:[%s1 + $0x10] sm:$0xf]
  %v36 = vld [vmem:[%s1 + $0x14] sm:$0xf]
  %v37 = vld [vmem:[%s1 + $0x18] sm:$0xf]
  %v38 = vld [vmem:[%s1 + $0x1c] sm:$0xf]
  %v39 = vld [vmem:[%s1 + $0x20] sm:$0xf]
  %v40 = vld [vmem:[%s1 + $0x24] sm:$0xf]
  %v41 = vld [vmem:[%s1 + $0x28] sm:$0xf]
  %v42 = vld [vmem:[%s1 + $0x2c] sm:$0xf]
  %v43 = vld [vmem:[%s1 + $0x30] sm:$0xf]
  %v44 = vld [vmem:[%s1 + $0x34] sm:$0xf]
  %v45 = vld [vmem:[%s1 + $0x38] sm:$0xf]
  %v46 = vld [vmem:[%s1 + $0x3c] sm:$0xf]
  %v47 = vld [vmem:[%s1 + $0x40] sm:$0xf]
  %v48 = vld [vmem:[%s1 + $0x44] sm:$0xf]
  %v49 = vld [vmem:[%s1 + $0x48] sm:$0xf]
  %v50 = vld [vmem:[%s1 + $0x4c] sm:$0xf]
  %v51 = vld [vmem:[%s1 + $0x50] sm:$0xf]
  %v52 = vld [vmem:[%s1 + $0x54] sm:$0xf]
  %v53 = vld [vmem:[%s1 + $0x58] sm:$0xf]
  %v54 = vld [vmem:[%s1 + $0x5c] sm:$0xf]
  %v55 = vld [vmem:[%s1 + $0x60] sm:$0xf]
  %v56 = vld [vmem:[%s1 + $0x64] sm:$0xf]
  %v57 = vld [vmem:[%s1 + $0x68] sm:$0xf]
  %v58 = vld [vmem:[%s1 + $0x6c] sm:$0xf]
  %v59 = vld [vmem:[%s1 + $0x70] sm:$0xf]
  %v60 = vld [vmem:[%s1 + $0x74] sm:$0xf]
  %v61 = vld [vmem:[%s1 + $0x78] sm:$0xf]
  %v62 = vld [vmem:[%s1 + $0x7c] sm:$0xf]
  %v63 = vld [vmem:[%s2] sm:$0x1]
  %v65 = vlaneseq
  %v66 = vshrl.u32 %v65, 7
  %v67 = vsub.s32 0, %v66
  %v68 = vrot.slane %v63, %v67
  %v86 = vunpack.c.l.b16 %v15
  %v87 = vunpack.c.h.b16 %v15
  %v88 = vunpack.c.l.b16 %v16
  %v89 = vunpack.c.h.b16 %v16
  %v90 = vunpack.c.l.b16 %v17
  %v91 = vunpack.c.h.b16 %v17
  %v92 = vunpack.c.l.b16 %v18
  %v93 = vunpack.c.h.b16 %v18
  %v94 = vunpack.c.l.b16 %v19
  %v95 = vunpack.c.h.b16 %v19
  %v96 = vunpack.c.l.b16 %v20
  %v97 = vunpack.c.h.b16 %v20
  %v98 = vunpack.c.l.b16 %v21
  %v99 = vunpack.c.h.b16 %v21
  %v100 = vunpack.c.l.b16 %v22
  %v101 = vunpack.c.h.b16 %v22
  %v102 = vunpack.c.l.b16 %v23
  %v103 = vunpack.c.h.b16 %v23
  %v104 = vunpack.c.l.b16 %v24
  %v105 = vunpack.c.h.b16 %v24
  %v106 = vunpack.c.l.b16 %v25
  %v107 = vunpack.c.h.b16 %v25
  %v108 = vunpack.c.l.b16 %v26
  %v109 = vunpack.c.h.b16 %v26
  %v110 = vunpack.c.l.b16 %v27
  %v111 = vunpack.c.h.b16 %v27
  %v112 = vunpack.c.l.b16 %v28
  %v113 = vunpack.c.h.b16 %v28
  %v114 = vunpack.c.l.b16 %v29
  %v115 = vunpack.c.h.b16 %v29
  %v116 = vunpack.c.l.b16 %v30
  %v117 = vunpack.c.h.b16 %v30
  %v118 = vpack.c.b16 %v88, %v86
  %v119 = vpack.c.b16 %v89, %v87
  %v120 = vpack.c.b16 %v92, %v90
  %v121 = vpack.c.b16 %v93, %v91
  %v122 = vpack.c.b16 %v96, %v94
  %v123 = vpack.c.b16 %v97, %v95
  %v124 = vpack.c.b16 %v100, %v98
  %v125 = vpack.c.b16 %v101, %v99
  %v126 = vpack.c.b16 %v104, %v102
  %v127 = vpack.c.b16 %v105, %v103
  %v128 = vpack.c.b16 %v108, %v106
  %v129 = vpack.c.b16 %v109, %v107
  %v130 = vpack.c.b16 %v112, %v110
  %v131 = vpack.c.b16 %v113, %v111
  %v132 = vpack.c.b16 %v116, %v114
  %v133 = vpack.c.b16 %v117, %v115
  %v182 = vunpack.c.l.b16 %v31
  %v183 = vunpack.c.l.b16 %v32
  %v184 = vunpack.c.l.b16 %v33
  %v185 = vunpack.c.l.b16 %v34
  %v186 = vunpack.c.l.b16 %v35
  %v187 = vunpack.c.l.b16 %v36
  %v188 = vunpack.c.l.b16 %v37
  %v189 = vunpack.c.l.b16 %v38
  %v190 = vunpack.c.l.b16 %v39
  %v191 = vunpack.c.l.b16 %v40
  %v192 = vunpack.c.l.b16 %v41
  %v193 = vunpack.c.l.b16 %v42
  %v194 = vunpack.c.l.b16 %v43
  %v195 = vunpack.c.l.b16 %v44
  %v196 = vunpack.c.l.b16 %v45
  %v197 = vunpack.c.l.b16 %v46
  %v198 = vunpack.c.l.b16 %v47
  %v199 = vunpack.c.l.b16 %v48
  %v200 = vunpack.c.l.b16 %v49
  %v201 = vunpack.c.l.b16 %v50
  %v202 = vunpack.c.l.b16 %v51
  %v203 = vunpack.c.l.b16 %v52
  %v204 = vunpack.c.l.b16 %v53
  %v205 = vunpack.c.l.b16 %v54
  %v206 = vunpack.c.l.b16 %v55
  %v207 = vunpack.c.l.b16 %v56
  %v208 = vunpack.c.l.b16 %v57
  %v209 = vunpack.c.l.b16 %v58
  %v210 = vunpack.c.l.b16 %v59
  %v211 = vunpack.c.l.b16 %v60
  %v212 = vunpack.c.l.b16 %v61
  %v213 = vunpack.c.l.b16 %v62
  %v214 = vpack.c.b16 %v183, %v182
  %v215 = vpack.c.b16 %v185, %v184
  %v216 = vpack.c.b16 %v187, %v186
  %v217 = vpack.c.b16 %v189, %v188
  %v218 = vpack.c.b16 %v191, %v190
  %v219 = vpack.c.b16 %v193, %v192
  %v220 = vpack.c.b16 %v195, %v194
  %v221 = vpack.c.b16 %v197, %v196
  %v222 = vpack.c.b16 %v199, %v198
  %v223 = vpack.c.b16 %v201, %v200
  %v224 = vpack.c.b16 %v203, %v202
  %v225 = vpack.c.b16 %v205, %v204
  %v226 = vpack.c.b16 %v207, %v206
  %v227 = vpack.c.b16 %v209, %v208
  %v228 = vpack.c.b16 %v211, %v210
  %v229 = vpack.c.b16 %v213, %v212
  %246 = vmatprep.subr.bf16.mxu0 0
  %247 = vmatpush1.bf16.msra.mxu0 %v221
  %248 = vmatprep.subr.bf16.mxu0 0
  %249 = vmatpush1.bf16.msra.mxu0 %v220
  %250 = vmatprep.subr.bf16.mxu0 0
  %251 = vmatpush1.bf16.msra.mxu0 %v219
  %252 = vmatprep.subr.bf16.mxu0 0
  %253 = vmatpush1.bf16.msra.mxu0 %v218
  %254 = vmatprep.subr.bf16.mxu0 0
  %255 = vmatpush1.bf16.msra.mxu0 %v217
  %256 = vmatprep.subr.bf16.mxu0 0
  %257 = vmatpush1.bf16.msra.mxu0 %v216
  %258 = vmatprep.subr.bf16.mxu0 0
  %259 = vmatpush1.bf16.msra.mxu0 %v215
  %260 = vmatprep.subr.bf16.mxu0 0
  %261 = vmatpush1.bf16.msra.mxu0 %v214
  %262 = vmatprep.subr.bf16.mxu0 0
  %263 = vmatpush2.bf16.msra.mxu0 %v229
  %264 = vmatprep.subr.bf16.mxu0 0
  %265 = vmatpush2.bf16.msra.mxu0 %v228
  %266 = vmatprep.subr.bf16.mxu0 0
  %267 = vmatpush2.bf16.msra.mxu0 %v227
  %268 = vmatprep.subr.bf16.mxu0 0
  %269 = vmatpush2.bf16.msra.mxu0 %v226
  %270 = vmatprep.subr.bf16.mxu0 0
  %271 = vmatpush2.bf16.msra.mxu0 %v225
  %272 = vmatprep.subr.bf16.mxu0 0
  %273 = vmatpush2.bf16.msra.mxu0 %v224
  %274 = vmatprep.subr.bf16.mxu0 0
  %275 = vmatpush2.bf16.msra.mxu0 %v223
  %276 = vmatprep.subr.bf16.mxu0 0
  %277 = vmatpush2.bf16.msra.mxu0 %v222
  %278 = vmatprep.mubr.bf16.mxu0 %v119
  %279 = vmatmul.mubr.bf16.gmra.mxu0 %v118
  %v280 = vpop.f32.mrf.mxu0
  %v281 = vadd.f32 %v68, %v280
  %v282 = vpop.f32.mrf.mxu0
  %v283 = vpop.f32.mrf.mxu0
  %v284 = vadd.f32 %v68, %v283
  %v285 = vpop.f32.mrf.mxu0
  %286 = vmatprep.mubr.bf16.mxu0 %v121
  %287 = vmatmul.mubr.bf16.gmra.mxu0 %v120
  %v288 = vpop.f32.mrf.mxu0
  %v289 = vadd.f32 %v68, %v288
  %v290 = vpop.f32.mrf.mxu0
  %v291 = vpop.f32.mrf.mxu0
  %v292 = vadd.f32 %v68, %v291
  %v293 = vpop.f32.mrf.mxu0
  %294 = vmatprep.mubr.bf16.mxu0 %v123
  %295 = vmatmul.mubr.bf16.gmra.mxu0 %v122
  %v296 = vpop.f32.mrf.mxu0
  %v297 = vadd.f32 %v68, %v296
  %v298 = vpop.f32.mrf.mxu0
  %v299 = vpop.f32.mrf.mxu0
  %v300 = vadd.f32 %v68, %v299
  %v301 = vpop.f32.mrf.mxu0
  %302 = vmatprep.mubr.bf16.mxu0 %v125
  %303 = vmatmul.mubr.bf16.gmra.mxu0 %v124
  %v304 = vpop.f32.mrf.mxu0
  %v305 = vadd.f32 %v68, %v304
  %v306 = vpop.f32.mrf.mxu0
  %v307 = vpop.f32.mrf.mxu0
  %v308 = vadd.f32 %v68, %v307
  %v309 = vpop.f32.mrf.mxu0
  %310 = vmatprep.mubr.bf16.mxu0 %v127
  %311 = vmatmul.mubr.bf16.gmra.mxu0 %v126
  %v312 = vpop.f32.mrf.mxu0
  %v313 = vadd.f32 %v68, %v312
  %v314 = vpop.f32.mrf.mxu0
  %v315 = vpop.f32.mrf.mxu0
  %v316 = vadd.f32 %v68, %v315
  %v317 = vpop.f32.mrf.mxu0
  %318 = vmatprep.mubr.bf16.mxu0 %v129
  %319 = vmatmul.mubr.bf16.gmra.mxu0 %v128
  %v320 = vpop.f32.mrf.mxu0
  %v321 = vadd.f32 %v68, %v320
  %v322 = vpop.f32.mrf.mxu0
  %v323 = vpop.f32.mrf.mxu0
  %v324 = vadd.f32 %v68, %v323
  %v325 = vpop.f32.mrf.mxu0
  %326 = vmatprep.mubr.bf16.mxu0 %v131
  %327 = vmatmul.mubr.bf16.gmra.mxu0 %v130
  %v328 = vpop.f32.mrf.mxu0
  %v329 = vadd.f32 %v68, %v328
  %v330 = vpop.f32.mrf.mxu0
  %v331 = vpop.f32.mrf.mxu0
  %v332 = vadd.f32 %v68, %v331
  %v333 = vpop.f32.mrf.mxu0
  %334 = vmatprep.mubr.bf16.mxu0 %v133
  %335 = vmatmul.mubr.bf16.gmra.mxu0 %v132
  %v336 = vpop.f32.mrf.mxu0
  %v337 = vadd.f32 %v68, %v336
  %v338 = vpop.f32.mrf.mxu0
  %v339 = vpop.f32.mrf.mxu0
  %v340 = vadd.f32 %v68, %v339
  %v341 = vpop.f32.mrf.mxu0
  %342 = vdwg.mxu0
  %v343 = vmax.f32 %v281, 0.0
  %v344 = vmax.f32 %v284, 0.0
  %v345 = vmax.f32 %v289, 0.0
  %v346 = vmax.f32 %v292, 0.0
  %v347 = vmax.f32 %v297, 0.0
  %v348 = vmax.f32 %v300, 0.0
  %v349 = vmax.f32 %v305, 0.0
  %v350 = vmax.f32 %v308, 0.0
  %v351 = vmax.f32 %v313, 0.0
  %v352 = vmax.f32 %v316, 0.0
  %v353 = vmax.f32 %v321, 0.0
  %v354 = vmax.f32 %v324, 0.0
  %v355 = vmax.f32 %v329, 0.0
  %v356 = vmax.f32 %v332, 0.0
  %v357 = vmax.f32 %v337, 0.0
  %v358 = vmax.f32 %v340, 0.0
  %359 = vst [vmem:[%s3] sm:$0xff] %v343
  %360 = vst [vmem:[%s3 + $0x8] sm:$0xff] %v344
  %361 = vst [vmem:[%s3 + $0x10] sm:$0xff] %v345
  %362 = vst [vmem:[%s3 + $0x18] sm:$0xff] %v346
  %363 = vst [vmem:[%s3 + $0x20] sm:$0xff] %v347
  %364 = vst [vmem:[%s3 + $0x28] sm:$0xff] %v348
  %365 = vst [vmem:[%s3 + $0x30] sm:$0xff] %v349
  %366 = vst [vmem:[%s3 + $0x38] sm:$0xff] %v350
  %367 = vst [vmem:[%s3 + $0x40] sm:$0xff] %v351
  %368 = vst [vmem:[%s3 + $0x48] sm:$0xff] %v352
  %369 = vst [vmem:[%s3 + $0x50] sm:$0xff] %v353
  %370 = vst [vmem:[%s3 + $0x58] sm:$0xff] %v354
  %371 = vst [vmem:[%s3 + $0x60] sm:$0xff] %v355
  %372 = vst [vmem:[%s3 + $0x68] sm:$0xff] %v356
  %373 = vst [vmem:[%s3 + $0x70] sm:$0xff] %v357
  %374 = vst [vmem:[%s3 + $0x78] sm:$0xff] %v358
  // Predicated region
  $region14: #{model_forward.20} parent=0 // pred_check
    _
  $region15: #{model_forward.20} parent=0 // pred_check_branch
    %376 = sbr.rel (0) target = $region17
  $region16: #{model_forward.20} parent=0 // pred_region
    _
  $region17: #{model_forward.20} parent=0 // pred_fallthru
    _
  // Predicated region
  $region18: #{model_forward.20} parent=0 // pred_check
    _
  $region19: #{model_forward.20} parent=0 // pred_check_branch
    %378 = sbr.rel (0) target = $region21
  $region20: #{model_forward.20} parent=0 // pred_region
    _
  $region21: #{model_forward.20} parent=0 // pred_fallthru
    _

// kernel: model_forward.21
$region0: #{model_forward.21}
  #allocation0 [shape = 'u32[]', space=smem, size = 0x4, offset = 0x4, fixed_abs, tag = 'smem constant byte address 0x4 - core index']
  #allocation1 [shape = 'u32[144,128]{1,0:T(1,128)}', space=vmem, size = 0x12000, scoped, tag = 'internal scratch']
  %s0 = inlined_call_operand.vmem [shape: bf16[32,512], index: 0, kind: input, shape index: {}]
  %s1 = inlined_call_operand.vmem [shape: bf16[512,128], index: 1, kind: input, shape index: {}]
  %s2 = inlined_call_operand.vmem [shape: f32[1,128], index: 2, kind: input, shape index: {}]
  %s3 = inlined_call_operand.vmem [shape: f32[32,128], index: 3, kind: output, shape index: {}]
  %s4 = sld [smem:[#allocation0]]
  $region22: #{model_forward.21} parent=0
    _
  %s6 = ssub.s32 1, %s4
  %s7 = scalar_select 0, %s6, %s4
  // Predicated region
  $region2: #{model_forward.21} parent=0 // pred_check
    _
  $region3: #{model_forward.21} parent=0 // pred_check_branch
    %9 = sbr.rel (0) target = $region5
  $region4: #{model_forward.21} parent=0 // pred_region
    _
  $region5: #{model_forward.21} parent=0 // pred_fallthru
    _
  // Predicated region
  $region6: #{model_forward.21} parent=0 // pred_check
    _
  $region7: #{model_forward.21} parent=0 // pred_check_branch
    %11 = sbr.rel (0) target = $region9
  $region8: #{model_forward.21} parent=0 // pred_region
    _
  $region9: #{model_forward.21} parent=0 // pred_fallthru
    _
  // Predicated region
  $region10: #{model_forward.21} parent=0 // pred_check
    _
  $region11: #{model_forward.21} parent=0 // pred_check_branch
    %13 = sbr.rel (0) target = $region13
  $region12: #{model_forward.21} parent=0 // pred_region
    _
  $region13: #{model_forward.21} parent=0 // pred_fallthru
    _
  %v15 = vld [vmem:[%s0] sm:$0xff]
  %v16 = vld [vmem:[%s0 + $0x8] sm:$0xff]
  %v17 = vld [vmem:[%s0 + $0x10] sm:$0xff]
  %v18 = vld [vmem:[%s0 + $0x18] sm:$0xff]
  %v19 = vld [vmem:[%s0 + $0x20] sm:$0xff]
  %v20 = vld [vmem:[%s0 + $0x28] sm:$0xff]
  %v21 = vld [vmem:[%s0 + $0x30] sm:$0xff]
  %v22 = vld [vmem:[%s0 + $0x38] sm:$0xff]
  %v23 = vld [vmem:[%s1] sm:$0xf]
  %v24 = vld [vmem:[%s1 + $0x4] sm:$0xf]
  %v25 = vld [vmem:[%s1 + $0x8] sm:$0xf]
  %v26 = vld [vmem:[%s1 + $0xc] sm:$0xf]
  %v27 = vld [vmem:[%s1 + $0x10] sm:$0xf]
  %v28 = vld [vmem:[%s1 + $0x14] sm:$0xf]
  %v29 = vld [vmem:[%s1 + $0x18] sm:$0xf]
  %v30 = vld [vmem:[%s1 + $0x1c] sm:$0xf]
  %v31 = vld [vmem:[%s1 + $0x20] sm:$0xf]
  %v32 = vld [vmem:[%s1 + $0x24] sm:$0xf]
  %v33 = vld [vmem:[%s1 + $0x28] sm:$0xf]
  %v34 = vld [vmem:[%s1 + $0x2c] sm:$0xf]
  %v35 = vld [vmem:[%s1 + $0x30] sm:$0xf]
  %v36 = vld [vmem:[%s1 + $0x34] sm:$0xf]
  %v37 = vld [vmem:[%s1 + $0x38] sm:$0xf]
  %v38 = vld [vmem:[%s1 + $0x3c] sm:$0xf]
  %v39 = vld [vmem:[%s1 + $0x40] sm:$0xf]
  %v40 = vld [vmem:[%s1 + $0x44] sm:$0xf]
  %v41 = vld [vmem:[%s1 + $0x48] sm:$0xf]
  %v42 = vld [vmem:[%s1 + $0x4c] sm:$0xf]
  %v43 = vld [vmem:[%s1 + $0x50] sm:$0xf]
  %v44 = vld [vmem:[%s1 + $0x54] sm:$0xf]
  %v45 = vld [vmem:[%s1 + $0x58] sm:$0xf]
  %v46 = vld [vmem:[%s1 + $0x5c] sm:$0xf]
  %v47 = vld [vmem:[%s1 + $0x60] sm:$0xf]
  %v48 = vld [vmem:[%s1 + $0x64] sm:$0xf]
  %v49 = vld [vmem:[%s1 + $0x68] sm:$0xf]
  %v50 = vld [vmem:[%s1 + $0x6c] sm:$0xf]
  %v51 = vld [vmem:[%s1 + $0x70] sm:$0xf]
  %v52 = vld [vmem:[%s1 + $0x74] sm:$0xf]
  %v53 = vld [vmem:[%s1 + $0x78] sm:$0xf]
  %v54 = vld [vmem:[%s1 + $0x7c] sm:$0xf]
  %v55 = vld [vmem:[%s1 + $0x80] sm:$0xf]
  %v56 = vld [vmem:[%s1 + $0x84] sm:$0xf]
  %v57 = vld [vmem:[%s1 + $0x88] sm:$0xf]
  %v58 = vld [vmem:[%s1 + $0x8c] sm:$0xf]
  %v59 = vld [vmem:[%s1 + $0x90] sm:$0xf]
  %v60 = vld [vmem:[%s1 + $0x94] sm:$0xf]
  %v61 = vld [vmem:[%s1 + $0x98] sm:$0xf]
  %v62 = vld [vmem:[%s1 + $0x9c] sm:$0xf]
  %v63 = vld [vmem:[%s1 + $0xa0] sm:$0xf]
  %v64 = vld [vmem:[%s1 + $0xa4] sm:$0xf]
  %v65 = vld [vmem:[%s1 + $0xa8] sm:$0xf]
  %v66 = vld [vmem:[%s1 + $0xac] sm:$0xf]
  %v67 = vld [vmem:[%s1 + $0xb0] sm:$0xf]
  %v68 = vld [vmem:[%s1 + $0xb4] sm:$0xf]
  %v69 = vld [vmem:[%s1 + $0xb8] sm:$0xf]
  %v70 = vld [vmem:[%s1 + $0xbc] sm:$0xf]
  %v71 = vld [vmem:[%s1 + $0xc0] sm:$0xf]
  %v72 = vld [vmem:[%s1 + $0xc4] sm:$0xf]
  %v73 = vld [vmem:[%s1 + $0xc8] sm:$0xf]
  %v74 = vld [vmem:[%s1 + $0xcc] sm:$0xf]
  %v75 = vld [vmem:[%s1 + $0xd0] sm:$0xf]
  %v76 = vld [vmem:[%s1 + $0xd4] sm:$0xf]
  %v77 = vld [vmem:[%s1 + $0xd8] sm:$0xf]
  %v78 = vld [vmem:[%s1 + $0xdc] sm:$0xf]
  %v79 = vld [vmem:[%s1 + $0xe0] sm:$0xf]
  %v80 = vld [vmem:[%s1 + $0xe4] sm:$0xf]
  %v81 = vld [vmem:[%s1 + $0xe8] sm:$0xf]
  %v82 = vld [vmem:[%s1 + $0xec] sm:$0xf]
  %v83 = vld [vmem:[%s1 + $0xf0] sm:$0xf]
  %v84 = vld [vmem:[%s1 + $0xf4] sm:$0xf]
  %v85 = vld [vmem:[%s1 + $0xf8] sm:$0xf]
  %v86 = vld [vmem:[%s1 + $0xfc] sm:$0xf]
  %v87 = vld [vmem:[%s2] sm:$0x1]
  %v89 = vlaneseq
  %v90 = vshrl.u32 %v89, 7
  %v91 = vsub.s32 0, %v90
  %v92 = vrot.slane %v87, %v91
  %v102 = vunpack.c.l.b16 %v15
  %v103 = vunpack.c.h.b16 %v15
  %v104 = vunpack.c.l.b16 %v16
  %v105 = vunpack.c.h.b16 %v16
  %v106 = vunpack.c.l.b16 %v17
  %v107 = vunpack.c.h.b16 %v17
  %v108 = vunpack.c.l.b16 %v18
  %v109 = vunpack.c.h.b16 %v18
  %v110 = vunpack.c.l.b16 %v19
  %v111 = vunpack.c.h.b16 %v19
  %v112 = vunpack.c.l.b16 %v20
  %v113 = vunpack.c.h.b16 %v20
  %v114 = vunpack.c.l.b16 %v21
  %v115 = vunpack.c.h.b16 %v21
  %v116 = vunpack.c.l.b16 %v22
  %v117 = vunpack.c.h.b16 %v22
  %v118 = vpack.c.b16 %v106, %v102
  %v119 = vpack.c.b16 %v107, %v103
  %v120 = vpack.c.b16 %v108, %v104
  %v121 = vpack.c.b16 %v109, %v105
  %v122 = vpack.c.b16 %v114, %v110
  %v123 = vpack.c.b16 %v115, %v111
  %v124 = vpack.c.b16 %v116, %v112
  %v125 = vpack.c.b16 %v117, %v113
  %v198 = vunpack.c.l.b16 %v23
  %v199 = vunpack.c.l.b16 %v24
  %v200 = vunpack.c.l.b16 %v25
  %v201 = vunpack.c.l.b16 %v26
  %v202 = vunpack.c.l.b16 %v27
  %v203 = vunpack.c.l.b16 %v28
  %v204 = vunpack.c.l.b16 %v29
  %v205 = vunpack.c.l.b16 %v30
  %v206 = vunpack.c.l.b16 %v31
  %v207 = vunpack.c.l.b16 %v32
  %v208 = vunpack.c.l.b16 %v33
  %v209 = vunpack.c.l.b16 %v34
  %v210 = vunpack.c.l.b16 %v35
  %v211 = vunpack.c.l.b16 %v36
  %v212 = vunpack.c.l.b16 %v37
  %v213 = vunpack.c.l.b16 %v38
  %v214 = vunpack.c.l.b16 %v39
  %v215 = vunpack.c.l.b16 %v40
  %v216 = vunpack.c.l.b16 %v41
  %v217 = vunpack.c.l.b16 %v42
  %v218 = vunpack.c.l.b16 %v43
  %v219 = vunpack.c.l.b16 %v44
  %v220 = vunpack.c.l.b16 %v45
  %v221 = vunpack.c.l.b16 %v46
  %v222 = vunpack.c.l.b16 %v47
  %v223 = vunpack.c.l.b16 %v48
  %v224 = vunpack.c.l.b16 %v49
  %v225 = vunpack.c.l.b16 %v50
  %v226 = vunpack.c.l.b16 %v51
  %v227 = vunpack.c.l.b16 %v52
  %v228 = vunpack.c.l.b16 %v53
  %v229 = vunpack.c.l.b16 %v54
  %v230 = vunpack.c.l.b16 %v55
  %v231 = vunpack.c.l.b16 %v56
  %v232 = vunpack.c.l.b16 %v57
  %v233 = vunpack.c.l.b16 %v58
  %v234 = vunpack.c.l.b16 %v59
  %v235 = vunpack.c.l.b16 %v60
  %v236 = vunpack.c.l.b16 %v61
  %v237 = vunpack.c.l.b16 %v62
  %v238 = vunpack.c.l.b16 %v63
  %v239 = vunpack.c.l.b16 %v64
  %v240 = vunpack.c.l.b16 %v65
  %v241 = vunpack.c.l.b16 %v66
  %v242 = vunpack.c.l.b16 %v67
  %v243 = vunpack.c.l.b16 %v68
  %v244 = vunpack.c.l.b16 %v69
  %v245 = vunpack.c.l.b16 %v70
  %v246 = vunpack.c.l.b16 %v71
  %v247 = vunpack.c.l.b16 %v72
  %v248 = vunpack.c.l.b16 %v73
  %v249 = vunpack.c.l.b16 %v74
  %v250 = vunpack.c.l.b16 %v75
  %v251 = vunpack.c.l.b16 %v76
  %v252 = vunpack.c.l.b16 %v77
  %v253 = vunpack.c.l.b16 %v78
  %v254 = vunpack.c.l.b16 %v79
  %v255 = vunpack.c.l.b16 %v80
  %v256 = vunpack.c.l.b16 %v81
  %v257 = vunpack.c.l.b16 %v82
  %v258 = vunpack.c.l.b16 %v83
  %v259 = vunpack.c.l.b16 %v84
  %v260 = vunpack.c.l.b16 %v85
  %v261 = vunpack.c.l.b16 %v86
  %v262 = vpack.c.b16 %v199, %v198
  %v263 = vpack.c.b16 %v201, %v200
  %v264 = vpack.c.b16 %v203, %v202
  %v265 = vpack.c.b16 %v205, %v204
  %v266 = vpack.c.b16 %v207, %v206
  %v267 = vpack.c.b16 %v209, %v208
  %v268 = vpack.c.b16 %v211, %v210
  %v269 = vpack.c.b16 %v213, %v212
  %v270 = vpack.c.b16 %v215, %v214
  %v271 = vpack.c.b16 %v217, %v216
  %v272 = vpack.c.b16 %v219, %v218
  %v273 = vpack.c.b16 %v221, %v220
  %v274 = vpack.c.b16 %v223, %v222
  %v275 = vpack.c.b16 %v225, %v224
  %v276 = vpack.c.b16 %v227, %v226
  %v277 = vpack.c.b16 %v229, %v228
  %v278 = vpack.c.b16 %v231, %v230
  %v279 = vpack.c.b16 %v233, %v232
  %v280 = vpack.c.b16 %v235, %v234
  %v281 = vpack.c.b16 %v237, %v236
  %v282 = vpack.c.b16 %v239, %v238
  %v283 = vpack.c.b16 %v241, %v240
  %v284 = vpack.c.b16 %v243, %v242
  %v285 = vpack.c.b16 %v245, %v244
  %v286 = vpack.c.b16 %v247, %v246
  %v287 = vpack.c.b16 %v249, %v248
  %v288 = vpack.c.b16 %v251, %v250
  %v289 = vpack.c.b16 %v253, %v252
  %v290 = vpack.c.b16 %v255, %v254
  %v291 = vpack.c.b16 %v257, %v256
  %v292 = vpack.c.b16 %v259, %v258
  %v293 = vpack.c.b16 %v261, %v260
  %326 = vmatprep.subr.bf16.mxu0 0
  %327 = vmatpush1.bf16.msra.mxu0 %v269
  %328 = vmatprep.subr.bf16.mxu0 0
  %329 = vmatpush1.bf16.msra.mxu0 %v268
  %330 = vmatprep.subr.bf16.mxu0 0
  %331 = vmatpush1.bf16.msra.mxu0 %v267
  %332 = vmatprep.subr.bf16.mxu0 0
  %333 = vmatpush1.bf16.msra.mxu0 %v266
  %334 = vmatprep.subr.bf16.mxu0 0
  %335 = vmatpush1.bf16.msra.mxu0 %v265
  %336 = vmatprep.subr.bf16.mxu0 0
  %337 = vmatpush1.bf16.msra.mxu0 %v264
  %338 = vmatprep.subr.bf16.mxu0 0
  %339 = vmatpush1.bf16.msra.mxu0 %v263
  %340 = vmatprep.subr.bf16.mxu0 0
  %341 = vmatpush1.bf16.msra.mxu0 %v262
  %342 = vmatprep.subr.bf16.mxu0 0
  %343 = vmatpush2.bf16.msra.mxu0 %v277
  %344 = vmatprep.subr.bf16.mxu0 0
  %345 = vmatpush2.bf16.msra.mxu0 %v276
  %346 = vmatprep.subr.bf16.mxu0 0
  %347 = vmatpush2.bf16.msra.mxu0 %v275
  %348 = vmatprep.subr.bf16.mxu0 0
  %349 = vmatpush2.bf16.msra.mxu0 %v274
  %350 = vmatprep.subr.bf16.mxu0 0
  %351 = vmatpush2.bf16.msra.mxu0 %v273
  %352 = vmatprep.subr.bf16.mxu0 0
  %353 = vmatpush2.bf16.msra.mxu0 %v272
  %354 = vmatprep.subr.bf16.mxu0 0
  %355 = vmatpush2.bf16.msra.mxu0 %v271
  %356 = vmatprep.subr.bf16.mxu0 0
  %357 = vmatpush2.bf16.msra.mxu0 %v270
  %358 = vmatprep.mubr.bf16.mxu0 %v119
  %359 = vmatmul.mubr.bf16.gmra.mxu0 %v118
  %v360 = vpop.f32.mrf.mxu0
  %v361 = vadd.f32 %v92, %v360
  %v362 = vpop.f32.mrf.mxu0
  %v363 = vpop.f32.mrf.mxu0
  %v364 = vadd.f32 %v92, %v363
  %v365 = vpop.f32.mrf.mxu0
  %366 = vmatprep.mubr.bf16.mxu0 %v123
  %367 = vmatmul.mubr.bf16.gmra.mxu0 %v122
  %v368 = vpop.f32.mrf.mxu0
  %v369 = vadd.f32 %v92, %v368
  %v370 = vpop.f32.mrf.mxu0
  %v371 = vpop.f32.mrf.mxu0
  %v372 = vadd.f32 %v92, %v371
  %v373 = vpop.f32.mrf.mxu0
  %374 = vdwg.mxu0
  %375 = vmatprep.subr.bf16.mxu0 0
  %376 = vmatpush1.bf16.msra.mxu0 %v285
  %377 = vmatprep.subr.bf16.mxu0 0
  %378 = vmatpush1.bf16.msra.mxu0 %v284
  %379 = vmatprep.subr.bf16.mxu0 0
  %380 = vmatpush1.bf16.msra.mxu0 %v283
  %381 = vmatprep.subr.bf16.mxu0 0
  %382 = vmatpush1.bf16.msra.mxu0 %v282
  %383 = vmatprep.subr.bf16.mxu0 0
  %384 = vmatpush1.bf16.msra.mxu0 %v281
  %385 = vmatprep.subr.bf16.mxu0 0
  %386 = vmatpush1.bf16.msra.mxu0 %v280
  %387 = vmatprep.subr.bf16.mxu0 0
  %388 = vmatpush1.bf16.msra.mxu0 %v279
  %389 = vmatprep.subr.bf16.mxu0 0
  %390 = vmatpush1.bf16.msra.mxu0 %v278
  %391 = vmatprep.subr.bf16.mxu0 0
  %392 = vmatpush2.bf16.msra.mxu0 %v293
  %393 = vmatprep.subr.bf16.mxu0 0
  %394 = vmatpush2.bf16.msra.mxu0 %v292
  %395 = vmatprep.subr.bf16.mxu0 0
  %396 = vmatpush2.bf16.msra.mxu0 %v291
  %397 = vmatprep.subr.bf16.mxu0 0
  %398 = vmatpush2.bf16.msra.mxu0 %v290
  %399 = vmatprep.subr.bf16.mxu0 0
  %400 = vmatpush2.bf16.msra.mxu0 %v289
  %401 = vmatprep.subr.bf16.mxu0 0
  %402 = vmatpush2.bf16.msra.mxu0 %v288
  %403 = vmatprep.subr.bf16.mxu0 0
  %404 = vmatpush2.bf16.msra.mxu0 %v287
  %405 = vmatprep.subr.bf16.mxu0 0
  %406 = vmatpush2.bf16.msra.mxu0 %v286
  %407 = vmatprep.mubr.bf16.mxu0 %v121
  %408 = vmatmul.mubr.bf16.gmra.mxu0 %v120
  %v409 = vpop.f32.mrf.mxu0
  %v410 = vadd.f32 %v361, %v409
  %v411 = vpop.f32.mrf.mxu0
  %v412 = vpop.f32.mrf.mxu0
  %v413 = vadd.f32 %v364, %v412
  %v414 = vpop.f32.mrf.mxu0
  %415 = vmatprep.mubr.bf16.mxu0 %v125
  %416 = vmatmul.mubr.bf16.gmra.mxu0 %v124
  %v417 = vpop.f32.mrf.mxu0
  %v418 = vadd.f32 %v369, %v417
  %v419 = vpop.f32.mrf.mxu0
  %v420 = vpop.f32.mrf.mxu0
  %v421 = vadd.f32 %v372, %v420
  %v422 = vpop.f32.mrf.mxu0
  %423 = vdwg.mxu0
  %v424 = vmax.f32 %v410, 0.0
  %v425 = vmax.f32 %v413, 0.0
  %v426 = vmax.f32 %v418, 0.0
  %v427 = vmax.f32 %v421, 0.0
  %428 = vst [vmem:[%s3] sm:$0xff] %v424
  %429 = vst [vmem:[%s3 + $0x8] sm:$0xff] %v425
  %430 = vst [vmem:[%s3 + $0x10] sm:$0xff] %v426
  %431 = vst [vmem:[%s3 + $0x18] sm:$0xff] %v427
  // Predicated region
  $region14: #{model_forward.21} parent=0 // pred_check
    _
  $region15: #{model_forward.21} parent=0 // pred_check_branch
    %433 = sbr.rel (0) target = $region17
  $region16: #{model_forward.21} parent=0 // pred_region
    _
  $region17: #{model_forward.21} parent=0 // pred_fallthru
    _
  // Predicated region
  $region18: #{model_forward.21} parent=0 // pred_check
    _
  $region19: #{model_forward.21} parent=0 // pred_check_branch
    %435 = sbr.rel (0) target = $region21
  $region20: #{model_forward.21} parent=0 // pred_region
    _
  $region21: #{model_forward.21} parent=0 // pred_fallthru
    _

// kernel: model_forward.23
$region0: #{model_forward.23}
  #allocation0 [shape = 'u32[]', space=smem, size = 0x4, offset = 0x4, fixed_abs, tag = 'smem constant byte address 0x4 - core index']
  #allocation1 [shape = 'u32[144,128]{1,0:T(1,128)}', space=vmem, size = 0x12000, scoped, tag = 'internal scratch']
  %s0 = inlined_call_operand.vmem [shape: bf16[32,576], index: 0, kind: input, shape index: {}]
  %s1 = inlined_call_operand.vmem [shape: bf16[576,128], index: 1, kind: input, shape index: {}]
  %s2 = inlined_call_operand.vmem [shape: f32[1,128], index: 2, kind: input, shape index: {}]
  %s3 = inlined_call_operand.vmem [shape: f32[32,128], index: 3, kind: input, shape index: {}]
  %s4 = inlined_call_operand.vmem [shape: f32[32,128], index: 4, kind: output, shape index: {}]
  %s5 = sld [smem:[#allocation0]]
  $region26: #{model_forward.23} parent=0
    _
  %s7 = ssub.s32 1, %s5
  %s8 = scalar_select 0, %s7, %s5
  // Predicated region
  $region2: #{model_forward.23} parent=0 // pred_check
    _
  $region3: #{model_forward.23} parent=0 // pred_check_branch
    %10 = sbr.rel (0) target = $region5
  $region4: #{model_forward.23} parent=0 // pred_region
    _
  $region5: #{model_forward.23} parent=0 // pred_fallthru
    _
  // Predicated region
  $region6: #{model_forward.23} parent=0 // pred_check
    _
  $region7: #{model_forward.23} parent=0 // pred_check_branch
    %12 = sbr.rel (0) target = $region9
  $region8: #{model_forward.23} parent=0 // pred_region
    _
  $region9: #{model_forward.23} parent=0 // pred_fallthru
    _
  // Predicated region
  $region10: #{model_forward.23} parent=0 // pred_check
    _
  $region11: #{model_forward.23} parent=0 // pred_check_branch
    %14 = sbr.rel (0) target = $region13
  $region12: #{model_forward.23} parent=0 // pred_region
    _
  $region13: #{model_forward.23} parent=0 // pred_fallthru
    _
  // Predicated region
  $region14: #{model_forward.23} parent=0 // pred_check
    _
  $region15: #{model_forward.23} parent=0 // pred_check_branch
    %16 = sbr.rel (0) target = $region17
  $region16: #{model_forward.23} parent=0 // pred_region
    _
  $region17: #{model_forward.23} parent=0 // pred_fallthru
    _
  %v18 = vld [vmem:[%s0] sm:$0xff]
  %v19 = vld [vmem:[%s0 + $0x8] sm:$0xff]
  %v20 = vld [vmem:[%s0 + $0x10] sm:$0xf]
  %v21 = vld [vmem:[%s0 + $0x14] sm:$0xff]
  %v22 = vld [vmem:[%s0 + $0x1c] sm:$0xff]
  %v23 = vld [vmem:[%s0 + $0x24] sm:$0xf]
  %v24 = vld [vmem:[%s0 + $0x28] sm:$0xff]
  %v25 = vld [vmem:[%s0 + $0x30] sm:$0xff]
  %v26 = vld [vmem:[%s0 + $0x38] sm:$0xf]
  %v27 = vld [vmem:[%s0 + $0x3c] sm:$0xff]
  %v28 = vld [vmem:[%s0 + $0x44] sm:$0xff]
  %v29 = vld [vmem:[%s0 + $0x4c] sm:$0xf]
  %v30 = vld [vmem:[%s1] sm:$0xf]
  %v31 = vld [vmem:[%s1 + $0x4] sm:$0xf]
  %v32 = vld [vmem:[%s1 + $0x8] sm:$0xf]
  %v33 = vld [vmem:[%s1 + $0xc] sm:$0xf]
  %v34 = vld [vmem:[%s1 + $0x10] sm:$0xf]
  %v35 = vld [vmem:[%s1 + $0x14] sm:$0xf]
  %v36 = vld [vmem:[%s1 + $0x18] sm:$0xf]
  %v37 = vld [vmem:[%s1 + $0x1c] sm:$0xf]
  %v38 = vld [vmem:[%s1 + $0x20] sm:$0xf]
  %v39 = vld [vmem:[%s1 + $0x24] sm:$0xf]
  %v40 = vld [vmem:[%s1 + $0x28] sm:$0xf]
  %v41 = vld [vmem:[%s1 + $0x2c] sm:$0xf]
  %v42 = vld [vmem:[%s1 + $0x30] sm:$0xf]
  %v43 = vld [vmem:[%s1 + $0x34] sm:$0xf]
  %v44 = vld [vmem:[%s1 + $0x38] sm:$0xf]
  %v45 = vld [vmem:[%s1 + $0x3c] sm:$0xf]
  %v46 = vld [vmem:[%s1 + $0x40] sm:$0xf]
  %v47 = vld [vmem:[%s1 + $0x44] sm:$0xf]
  %v48 = vld [vmem:[%s1 + $0x48] sm:$0xf]
  %v49 = vld [vmem:[%s1 + $0x4c] sm:$0xf]
  %v50 = vld [vmem:[%s1 + $0x50] sm:$0xf]
  %v51 = vld [vmem:[%s1 + $0x54] sm:$0xf]
  %v52 = vld [vmem:[%s1 + $0x58] sm:$0xf]
  %v53 = vld [vmem:[%s1 + $0x5c] sm:$0xf]
  %v54 = vld [vmem:[%s1 + $0x60] sm:$0xf]
  %v55 = vld [vmem:[%s1 + $0x64] sm:$0xf]
  %v56 = vld [vmem:[%s1 + $0x68] sm:$0xf]
  %v57 = vld [vmem:[%s1 + $0x6c] sm:$0xf]
  %v58 = vld [vmem:[%s1 + $0x70] sm:$0xf]
  %v59 = vld [vmem:[%s1 + $0x74] sm:$0xf]
  %v60 = vld [vmem:[%s1 + $0x78] sm:$0xf]
  %v61 = vld [vmem:[%s1 + $0x7c] sm:$0xf]
  %v62 = vld [vmem:[%s1 + $0x80] sm:$0xf]
  %v63 = vld [vmem:[%s1 + $0x84] sm:$0xf]
  %v64 = vld [vmem:[%s1 + $0x88] sm:$0xf]
  %v65 = vld [vmem:[%s1 + $0x8c] sm:$0xf]
  %v66 = vld [vmem:[%s1 + $0x90] sm:$0xf]
  %v67 = vld [vmem:[%s1 + $0x94] sm:$0xf]
  %v68 = vld [vmem:[%s1 + $0x98] sm:$0xf]
  %v69 = vld [vmem:[%s1 + $0x9c] sm:$0xf]
  %v70 = vld [vmem:[%s1 + $0xa0] sm:$0xf]
  %v71 = vld [vmem:[%s1 + $0xa4] sm:$0xf]
  %v72 = vld [vmem:[%s1 + $0xa8] sm:$0xf]
  %v73 = vld [vmem:[%s1 + $0xac] sm:$0xf]
  %v74 = vld [vmem:[%s1 + $0xb0] sm:$0xf]
  %v75 = vld [vmem:[%s1 + $0xb4] sm:$0xf]
  %v76 = vld [vmem:[%s1 + $0xb8] sm:$0xf]
  %v77 = vld [vmem:[%s1 + $0xbc] sm:$0xf]
  %v78 = vld [vmem:[%s1 + $0xc0] sm:$0xf]
  %v79 = vld [vmem:[%s1 + $0xc4] sm:$0xf]
  %v80 = vld [vmem:[%s1 + $0xc8] sm:$0xf]
  %v81 = vld [vmem:[%s1 + $0xcc] sm:$0xf]
  %v82 = vld [vmem:[%s1 + $0xd0] sm:$0xf]
  %v83 = vld [vmem:[%s1 + $0xd4] sm:$0xf]
  %v84 = vld [vmem:[%s1 + $0xd8] sm:$0xf]
  %v85 = vld [vmem:[%s1 + $0xdc] sm:$0xf]
  %v86 = vld [vmem:[%s1 + $0xe0] sm:$0xf]
  %v87 = vld [vmem:[%s1 + $0xe4] sm:$0xf]
  %v88 = vld [vmem:[%s1 + $0xe8] sm:$0xf]
  %v89 = vld [vmem:[%s1 + $0xec] sm:$0xf]
  %v90 = vld [vmem:[%s1 + $0xf0] sm:$0xf]
  %v91 = vld [vmem:[%s1 + $0xf4] sm:$0xf]
  %v92 = vld [vmem:[%s1 + $0xf8] sm:$0xf]
  %v93 = vld [vmem:[%s1 + $0xfc] sm:$0xf]
  %v94 = vld [vmem:[%s1 + $0x100] sm:$0xf]
  %v95 = vld [vmem:[%s1 + $0x104] sm:$0xf]
  %v96 = vld [vmem:[%s1 + $0x108] sm:$0xf]
  %v97 = vld [vmem:[%s1 + $0x10c] sm:$0xf]
  %v98 = vld [vmem:[%s1 + $0x110] sm:$0xf]
  %v99 = vld [vmem:[%s1 + $0x114] sm:$0xf]
  %v100 = vld [vmem:[%s1 + $0x118] sm:$0xf]
  %v101 = vld [vmem:[%s1 + $0x11c] sm:$0xf]
  %v102 = vld [vmem:[%s2] sm:$0x1]
  %v104 = vlaneseq
  %v105 = vshrl.u32 %v104, 7
  %v106 = vsub.s32 0, %v105
  %v107 = vrot.slane %v102, %v106
  %v121 = vunpack.c.l.b16 %v18
  %v122 = vunpack.c.h.b16 %v18
  %v123 = vunpack.c.l.b16 %v19
  %v124 = vunpack.c.h.b16 %v19
  %v125 = vunpack.c.l.b16 %v20
  %v126 = vunpack.c.l.b16 %v21
  %v127 = vunpack.c.h.b16 %v21
  %v128 = vunpack.c.l.b16 %v22
  %v129 = vunpack.c.h.b16 %v22
  %v130 = vunpack.c.l.b16 %v23
  %v131 = vunpack.c.l.b16 %v24
  %v132 = vunpack.c.h.b16 %v24
  %v133 = vunpack.c.l.b16 %v25
  %v134 = vunpack.c.h.b16 %v25
  %v135 = vunpack.c.l.b16 %v26
  %v136 = vunpack.c.l.b16 %v27
  %v137 = vunpack.c.h.b16 %v27
  %v138 = vunpack.c.l.b16 %v28
  %v139 = vunpack.c.h.b16 %v28
  %v140 = vunpack.c.l.b16 %v29
  %v141 = vpack.c.b16 %v126, %v121
  %v142 = vpack.c.b16 %v127, %v122
  %v143 = vpack.c.b16 %v128, %v123
  %v144 = vpack.c.b16 %v129, %v124
  %v145 = vpack.c.b16 %v130, %v125
  %v146 = vpack.c.b16 %v136, %v131
  %v147 = vpack.c.b16 %v137, %v132
  %v148 = vpack.c.b16 %v138, %v133
  %v149 = vpack.c.b16 %v139, %v134
  %v150 = vpack.c.b16 %v140, %v135
  %v231 = vunpack.c.l.b16 %v30
  %v232 = vunpack.c.l.b16 %v31
  %v233 = vunpack.c.l.b16 %v32
  %v234 = vunpack.c.l.b16 %v33
  %v235 = vunpack.c.l.b16 %v34
  %v236 = vunpack.c.l.b16 %v35
  %v237 = vunpack.c.l.b16 %v36
  %v238 = vunpack.c.l.b16 %v37
  %v239 = vunpack.c.l.b16 %v38
  %v240 = vunpack.c.l.b16 %v39
  %v241 = vunpack.c.l.b16 %v40
  %v242 = vunpack.c.l.b16 %v41
  %v243 = vunpack.c.l.b16 %v42
  %v244 = vunpack.c.l.b16 %v43
  %v245 = vunpack.c.l.b16 %v44
  %v246 = vunpack.c.l.b16 %v45
  %v247 = vunpack.c.l.b16 %v46
  %v248 = vunpack.c.l.b16 %v47
  %v249 = vunpack.c.l.b16 %v48
  %v250 = vunpack.c.l.b16 %v49
  %v251 = vunpack.c.l.b16 %v50
  %v252 = vunpack.c.l.b16 %v51
  %v253 = vunpack.c.l.b16 %v52
  %v254 = vunpack.c.l.b16 %v53
  %v255 = vunpack.c.l.b16 %v54
  %v256 = vunpack.c.l.b16 %v55
  %v257 = vunpack.c.l.b16 %v56
  %v258 = vunpack.c.l.b16 %v57
  %v259 = vunpack.c.l.b16 %v58
  %v260 = vunpack.c.l.b16 %v59
  %v261 = vunpack.c.l.b16 %v60
  %v262 = vunpack.c.l.b16 %v61
  %v263 = vunpack.c.l.b16 %v62
  %v264 = vunpack.c.l.b16 %v63
  %v265 = vunpack.c.l.b16 %v64
  %v266 = vunpack.c.l.b16 %v65
  %v267 = vunpack.c.l.b16 %v66
  %v268 = vunpack.c.l.b16 %v67
  %v269 = vunpack.c.l.b16 %v68
  %v270 = vunpack.c.l.b16 %v69
  %v271 = vunpack.c.l.b16 %v70
  %v272 = vunpack.c.l.b16 %v71
  %v273 = vunpack.c.l.b16 %v72
  %v274 = vunpack.c.l.b16 %v73
  %v275 = vunpack.c.l.b16 %v74
  %v276 = vunpack.c.l.b16 %v75
  %v277 = vunpack.c.l.b16 %v76
  %v278 = vunpack.c.l.b16 %v77
  %v279 = vunpack.c.l.b16 %v78
  %v280 = vunpack.c.l.b16 %v79
  %v281 = vunpack.c.l.b16 %v80
  %v282 = vunpack.c.l.b16 %v81
  %v283 = vunpack.c.l.b16 %v82
  %v284 = vunpack.c.l.b16 %v83
  %v285 = vunpack.c.l.b16 %v84
  %v286 = vunpack.c.l.b16 %v85
  %v287 = vunpack.c.l.b16 %v86
  %v288 = vunpack.c.l.b16 %v87
  %v289 = vunpack.c.l.b16 %v88
  %v290 = vunpack.c.l.b16 %v89
  %v291 = vunpack.c.l.b16 %v90
  %v292 = vunpack.c.l.b16 %v91
  %v293 = vunpack.c.l.b16 %v92
  %v294 = vunpack.c.l.b16 %v93
  %v295 = vunpack.c.l.b16 %v94
  %v296 = vunpack.c.l.b16 %v95
  %v297 = vunpack.c.l.b16 %v96
  %v298 = vunpack.c.l.b16 %v97
  %v299 = vunpack.c.l.b16 %v98
  %v300 = vunpack.c.l.b16 %v99
  %v301 = vunpack.c.l.b16 %v100
  %v302 = vunpack.c.l.b16 %v101
  %v303 = vpack.c.b16 %v232, %v231
  %v304 = vpack.c.b16 %v234, %v233
  %v305 = vpack.c.b16 %v236, %v235
  %v306 = vpack.c.b16 %v238, %v237
  %v307 = vpack.c.b16 %v240, %v239
  %v308 = vpack.c.b16 %v242, %v241
  %v309 = vpack.c.b16 %v244, %v243
  %v310 = vpack.c.b16 %v246, %v245
  %v311 = vpack.c.b16 %v248, %v247
  %v312 = vpack.c.b16 %v250, %v249
  %v313 = vpack.c.b16 %v252, %v251
  %v314 = vpack.c.b16 %v254, %v253
  %v315 = vpack.c.b16 %v256, %v255
  %v316 = vpack.c.b16 %v258, %v257
  %v317 = vpack.c.b16 %v260, %v259
  %v318 = vpack.c.b16 %v262, %v261
  %v319 = vpack.c.b16 %v264, %v263
  %v320 = vpack.c.b16 %v266, %v265
  %v321 = vpack.c.b16 %v268, %v267
  %v322 = vpack.c.b16 %v270, %v269
  %v323 = vpack.c.b16 %v272, %v271
  %v324 = vpack.c.b16 %v274, %v273
  %v325 = vpack.c.b16 %v276, %v275
  %v326 = vpack.c.b16 %v278, %v277
  %v327 = vpack.c.b16 %v280, %v279
  %v328 = vpack.c.b16 %v282, %v281
  %v329 = vpack.c.b16 %v284, %v283
  %v330 = vpack.c.b16 %v286, %v285
  %v331 = vpack.c.b16 %v288, %v287
  %v332 = vpack.c.b16 %v290, %v289
  %v333 = vpack.c.b16 %v292, %v291
  %v334 = vpack.c.b16 %v294, %v293
  %v335 = vpack.c.b16 %v296, %v295
  %v336 = vpack.c.b16 %v298, %v297
  %v337 = vpack.c.b16 %v300, %v299
  %v338 = vpack.c.b16 %v302, %v301
  %vm375 = vcmask 523264
  %v377 = vsel %vm375, %v145, 0
  %v380 = vsel %vm375, %v150, 0
  %382 = vmatprep.subr.bf16.mxu0 0
  %383 = vmatpush1.bf16.msra.mxu0 %v310
  %384 = vmatprep.subr.bf16.mxu0 0
  %385 = vmatpush1.bf16.msra.mxu0 %v309
  %386 = vmatprep.subr.bf16.mxu0 0
  %387 = vmatpush1.bf16.msra.mxu0 %v308
  %388 = vmatprep.subr.bf16.mxu0 0
  %389 = vmatpush1.bf16.msra.mxu0 %v307
  %390 = vmatprep.subr.bf16.mxu0 0
  %391 = vmatpush1.bf16.msra.mxu0 %v306
  %392 = vmatprep.subr.bf16.mxu0 0
  %393 = vmatpush1.bf16.msra.mxu0 %v305
  %394 = vmatprep.subr.bf16.mxu0 0
  %395 = vmatpush1.bf16.msra.mxu0 %v304
  %396 = vmatprep.subr.bf16.mxu0 0
  %397 = vmatpush1.bf16.msra.mxu0 %v303
  %398 = vmatprep.subr.bf16.mxu0 0
  %399 = vmatpush2.bf16.msra.mxu0 %v318
  %400 = vmatprep.subr.bf16.mxu0 0
  %401 = vmatpush2.bf16.msra.mxu0 %v317
  %402 = vmatprep.subr.bf16.mxu0 0
  %403 = vmatpush2.bf16.msra.mxu0 %v316
  %404 = vmatprep.subr.bf16.mxu0 0
  %405 = vmatpush2.bf16.msra.mxu0 %v315
  %406 = vmatprep.subr.bf16.mxu0 0
  %407 = vmatpush2.bf16.msra.mxu0 %v314
  %408 = vmatprep.subr.bf16.mxu0 0
  %409 = vmatpush2.bf16.msra.mxu0 %v313
  %410 = vmatprep.subr.bf16.mxu0 0
  %411 = vmatpush2.bf16.msra.mxu0 %v312
  %412 = vmatprep.subr.bf16.mxu0 0
  %413 = vmatpush2.bf16.msra.mxu0 %v311
  %414 = vmatprep.mubr.bf16.mxu0 %v142
  %415 = vmatmul.mubr.bf16.gmra.mxu0 %v141
  %v416 = vpop.f32.mrf.mxu0
  %v417 = vadd.f32 %v107, %v416
  %v418 = vpop.f32.mrf.mxu0
  %v419 = vpop.f32.mrf.mxu0
  %v420 = vadd.f32 %v107, %v419
  %v421 = vpop.f32.mrf.mxu0
  %422 = vmatprep.mubr.bf16.mxu0 %v147
  %423 = vmatmul.mubr.bf16.gmra.mxu0 %v146
  %v424 = vpop.f32.mrf.mxu0
  %v425 = vadd.f32 %v107, %v424
  %v426 = vpop.f32.mrf.mxu0
  %v427 = vpop.f32.mrf.mxu0
  %v428 = vadd.f32 %v107, %v427
  %v429 = vpop.f32.mrf.mxu0
  %430 = vdwg.mxu0
  %431 = vmatprep.subr.bf16.mxu0 0
  %432 = vmatpush1.bf16.msra.mxu0 %v326
  %433 = vmatprep.subr.bf16.mxu0 0
  %434 = vmatpush1.bf16.msra.mxu0 %v325
  %435 = vmatprep.subr.bf16.mxu0 0
  %436 = vmatpush1.bf16.msra.mxu0 %v324
  %437 = vmatprep.subr.bf16.mxu0 0
  %438 = vmatpush1.bf16.msra.mxu0 %v323
  %439 = vmatprep.subr.bf16.mxu0 0
  %440 = vmatpush1.bf16.msra.mxu0 %v322
  %441 = vmatprep.subr.bf16.mxu0 0
  %442 = vmatpush1.bf16.msra.mxu0 %v321
  %443 = vmatprep.subr.bf16.mxu0 0
  %444 = vmatpush1.bf16.msra.mxu0 %v320
  %445 = vmatprep.subr.bf16.mxu0 0
  %446 = vmatpush1.bf16.msra.mxu0 %v319
  %447 = vmatprep.subr.bf16.mxu0 0
  %448 = vmatpush2.bf16.msra.mxu0 %v334
  %449 = vmatprep.subr.bf16.mxu0 0
  %450 = vmatpush2.bf16.msra.mxu0 %v333
  %451 = vmatprep.subr.bf16.mxu0 0
  %452 = vmatpush2.bf16.msra.mxu0 %v332
  %453 = vmatprep.subr.bf16.mxu0 0
  %454 = vmatpush2.bf16.msra.mxu0 %v331
  %455 = vmatprep.subr.bf16.mxu0 0
  %456 = vmatpush2.bf16.msra.mxu0 %v330
  %457 = vmatprep.subr.bf16.mxu0 0
  %458 = vmatpush2.bf16.msra.mxu0 %v329
  %459 = vmatprep.subr.bf16.mxu0 0
  %460 = vmatpush2.bf16.msra.mxu0 %v328
  %461 = vmatprep.subr.bf16.mxu0 0
  %462 = vmatpush2.bf16.msra.mxu0 %v327
  %463 = vmatprep.mubr.bf16.mxu0 %v144
  %464 = vmatmul.mubr.bf16.gmra.mxu0 %v143
  %v465 = vpop.f32.mrf.mxu0
  %v466 = vadd.f32 %v417, %v465
  %v467 = vpop.f32.mrf.mxu0
  %v468 = vpop.f32.mrf.mxu0
  %v469 = vadd.f32 %v420, %v468
  %v470 = vpop.f32.mrf.mxu0
  %471 = vmatprep.mubr.bf16.mxu0 %v149
  %472 = vmatmul.mubr.bf16.gmra.mxu0 %v148
  %v473 = vpop.f32.mrf.mxu0
  %v474 = vadd.f32 %v425, %v473
  %v475 = vpop.f32.mrf.mxu0
  %v476 = vpop.f32.mrf.mxu0
  %v477 = vadd.f32 %v428, %v476
  %v478 = vpop.f32.mrf.mxu0
  %479 = vdwg.mxu0
  %480 = vmatprep.subr.bf16.mxu0 0
  %481 = vmatpush1.bf16.msra.mxu0 0
  %482 = vmatprep.subr.bf16.mxu0 0
  %483 = vmatpush1.bf16.msra.mxu0 0
  %484 = vmatprep.subr.bf16.mxu0 0
  %485 = vmatpush1.bf16.msra.mxu0 0
  %486 = vmatprep.subr.bf16.mxu0 0
  %487 = vmatpush1.bf16.msra.mxu0 0
  %488 = vmatprep.subr.bf16.mxu0 0
  %489 = vmatpush1.bf16.msra.mxu0 %v338
  %490 = vmatprep.subr.bf16.mxu0 0
  %491 = vmatpush1.bf16.msra.mxu0 %v337
  %492 = vmatprep.subr.bf16.mxu0 0
  %493 = vmatpush1.bf16.msra.mxu0 %v336
  %494 = vmatprep.subr.bf16.mxu0 0
  %495 = vmatpush1.bf16.msra.mxu0 %v335
  %496 = vmatprep.subr.bf16.mxu0 0
  %497 = vmatpush2.bf16.msra.mxu0 0
  %498 = vmatprep.subr.bf16.mxu0 0
  %499 = vmatpush2.bf16.msra.mxu0 0
  %500 = vmatprep.subr.bf16.mxu0 0
  %501 = vmatpush2.bf16.msra.mxu0 0
  %502 = vmatprep.subr.bf16.mxu0 0
  %503 = vmatpush2.bf16.msra.mxu0 0
  %504 = vmatprep.subr.bf16.mxu0 0
  %505 = vmatpush2.bf16.msra.mxu0 0
  %506 = vmatprep.subr.bf16.mxu0 0
  %507 = vmatpush2.bf16.msra.mxu0 0
  %508 = vmatprep.subr.bf16.mxu0 0
  %509 = vmatpush2.bf16.msra.mxu0 0
  %510 = vmatprep.subr.bf16.mxu0 0
  %511 = vmatpush2.bf16.msra.mxu0 0
  %512 = vmatprep.mubr.bf16.mxu0 0
  %513 = vmatmul.mubr.bf16.gmra.mxu0 %v377
  %v514 = vpop.f32.mrf.mxu0
  %v515 = vadd.f32 %v466, %v514
  %v516 = vpop.f32.mrf.mxu0
  %v517 = vpop.f32.mrf.mxu0
  %v518 = vadd.f32 %v469, %v517
  %v519 = vpop.f32.mrf.mxu0
  %520 = vmatprep.mubr.bf16.mxu0 0
  %521 = vmatmul.mubr.bf16.gmra.mxu0 %v380
  %v522 = vpop.f32.mrf.mxu0
  %v523 = vadd.f32 %v474, %v522
  %v524 = vpop.f32.mrf.mxu0
  %v525 = vpop.f32.mrf.mxu0
  %v526 = vadd.f32 %v477, %v525
  %v527 = vpop.f32.mrf.mxu0
  %528 = vdwg.mxu0
  %v529 = vld [vmem:[%s3] sm:$0xff]
  %v530 = vld [vmem:[%s3 + $0x8] sm:$0xff]
  %v531 = vld [vmem:[%s3 + $0x10] sm:$0xff]
  %v532 = vld [vmem:[%s3 + $0x18] sm:$0xff]
  %v533 = vadd.f32 %v515, %v529
  %v534 = vadd.f32 %v518, %v530
  %v535 = vadd.f32 %v523, %v531
  %v536 = vadd.f32 %v526, %v532
  %v537 = vmax.f32 %v533, 0.0
  %v538 = vmax.f32 %v534, 0.0
  %v539 = vmax.f32 %v535, 0.0
  %v540 = vmax.f32 %v536, 0.0
  %541 = vst [vmem:[%s4] sm:$0xff] %v537
  %542 = vst [vmem:[%s4 + $0x8] sm:$0xff] %v538
  %543 = vst [vmem:[%s4 + $0x10] sm:$0xff] %v539
  %544 = vst [vmem:[%s4 + $0x18] sm:$0xff] %v540
  // Predicated region
  $region18: #{model_forward.23} parent=0 // pred_check
    _
  $region19: #{model_forward.23} parent=0 // pred_check_branch
    %546 = sbr.rel (0) target = $region21
  $region20: #{model_forward.23} parent=0 // pred_region
    _
  $region21: #{model_forward.23} parent=0 // pred_fallthru
    _
  // Predicated region
  $region22: #{model_forward.23} parent=0 // pred_check
    _
  $region23: #{model_forward.23} parent=0 // pred_check_branch
    %548 = sbr.rel (0) target = $region25
  $region24: #{model_forward.23} parent=0 // pred_region
    _
  $region25: #{model_forward.23} parent=0 // pred_fallthru
    _

// kernel: model_forward.22
$region0: #{model_forward.22}
  #allocation0 [shape = 'u32[]', space=smem, size = 0x4, offset = 0x4, fixed_abs, tag = 'smem constant byte address 0x4 - core index']
  #allocation1 [shape = 'u32[144,128]{1,0:T(1,128)}', space=vmem, size = 0x12000, scoped, tag = 'internal scratch']
  %s0 = inlined_call_operand.vmem [shape: bf16[32,576], index: 0, kind: input, shape index: {}]
  %s1 = inlined_call_operand.vmem [shape: bf16[576,128], index: 1, kind: input, shape index: {}]
  %s2 = inlined_call_operand.vmem [shape: f32[1,128], index: 2, kind: input, shape index: {}]
  %s3 = inlined_call_operand.vmem [shape: f32[32,128], index: 3, kind: output, shape index: {}]
  %s4 = sld [smem:[#allocation0]]
  $region22: #{model_forward.22} parent=0
    _
  %s6 = ssub.s32 1, %s4
  %s7 = scalar_select 0, %s6, %s4
  // Predicated region
  $region2: #{model_forward.22} parent=0 // pred_check
    _
  $region3: #{model_forward.22} parent=0 // pred_check_branch
    %9 = sbr.rel (0) target = $region5
  $region4: #{model_forward.22} parent=0 // pred_region
    _
  $region5: #{model_forward.22} parent=0 // pred_fallthru
    _
  // Predicated region
  $region6: #{model_forward.22} parent=0 // pred_check
    _
  $region7: #{model_forward.22} parent=0 // pred_check_branch
    %11 = sbr.rel (0) target = $region9
  $region8: #{model_forward.22} parent=0 // pred_region
    _
  $region9: #{model_forward.22} parent=0 // pred_fallthru
    _
  // Predicated region
  $region10: #{model_forward.22} parent=0 // pred_check
    _
  $region11: #{model_forward.22} parent=0 // pred_check_branch
    %13 = sbr.rel (0) target = $region13
  $region12: #{model_forward.22} parent=0 // pred_region
    _
  $region13: #{model_forward.22} parent=0 // pred_fallthru
    _
  %v15 = vld [vmem:[%s0] sm:$0xff]
  %v16 = vld [vmem:[%s0 + $0x8] sm:$0xff]
  %v17 = vld [vmem:[%s0 + $0x10] sm:$0xf]
  %v18 = vld [vmem:[%s0 + $0x14] sm:$0xff]
  %v19 = vld [vmem:[%s0 + $0x1c] sm:$0xff]
  %v20 = vld [vmem:[%s0 + $0x24] sm:$0xf]
  %v21 = vld [vmem:[%s0 + $0x28] sm:$0xff]
  %v22 = vld [vmem:[%s0 + $0x30] sm:$0xff]
  %v23 = vld [vmem:[%s0 + $0x38] sm:$0xf]
  %v24 = vld [vmem:[%s0 + $0x3c] sm:$0xff]
  %v25 = vld [vmem:[%s0 + $0x44] sm:$0xff]
  %v26 = vld [vmem:[%s0 + $0x4c] sm:$0xf]
  %v27 = vld [vmem:[%s1] sm:$0xf]
  %v28 = vld [vmem:[%s1 + $0x4] sm:$0xf]
  %v29 = vld [vmem:[%s1 + $0x8] sm:$0xf]
  %v30 = vld [vmem:[%s1 + $0xc] sm:$0xf]
  %v31 = vld [vmem:[%s1 + $0x10] sm:$0xf]
  %v32 = vld [vmem:[%s1 + $0x14] sm:$0xf]
  %v33 = vld [vmem:[%s1 + $0x18] sm:$0xf]
  %v34 = vld [vmem:[%s1 + $0x1c] sm:$0xf]
  %v35 = vld [vmem:[%s1 + $0x20] sm:$0xf]
  %v36 = vld [vmem:[%s1 + $0x24] sm:$0xf]
  %v37 = vld [vmem:[%s1 + $0x28] sm:$0xf]
  %v38 = vld [vmem:[%s1 + $0x2c] sm:$0xf]
  %v39 = vld [vmem:[%s1 + $0x30] sm:$0xf]
  %v40 = vld [vmem:[%s1 + $0x34] sm:$0xf]
  %v41 = vld [vmem:[%s1 + $0x38] sm:$0xf]
  %v42 = vld [vmem:[%s1 + $0x3c] sm:$0xf]
  %v43 = vld [vmem:[%s1 + $0x40] sm:$0xf]
  %v44 = vld [vmem:[%s1 + $0x44] sm:$0xf]
  %v45 = vld [vmem:[%s1 + $0x48] sm:$0xf]
  %v46 = vld [vmem:[%s1 + $0x4c] sm:$0xf]
  %v47 = vld [vmem:[%s1 + $0x50] sm:$0xf]
  %v48 = vld [vmem:[%s1 + $0x54] sm:$0xf]
  %v49 = vld [vmem:[%s1 + $0x58] sm:$0xf]
  %v50 = vld [vmem:[%s1 + $0x5c] sm:$0xf]
  %v51 = vld [vmem:[%s1 + $0x60] sm:$0xf]
  %v52 = vld [vmem:[%s1 + $0x64] sm:$0xf]
  %v53 = vld [vmem:[%s1 + $0x68] sm:$0xf]
  %v54 = vld [vmem:[%s1 + $0x6c] sm:$0xf]
  %v55 = vld [vmem:[%s1 + $0x70] sm:$0xf]
  %v56 = vld [vmem:[%s1 + $0x74] sm:$0xf]
  %v57 = vld [vmem:[%s1 + $0x78] sm:$0xf]
  %v58 = vld [vmem:[%s1 + $0x7c] sm:$0xf]
  %v59 = vld [vmem:[%s1 + $0x80] sm:$0xf]
  %v60 = vld [vmem:[%s1 + $0x84] sm:$0xf]
  %v61 = vld [vmem:[%s1 + $0x88] sm:$0xf]
  %v62 = vld [vmem:[%s1 + $0x8c] sm:$0xf]
  %v63 = vld [vmem:[%s1 + $0x90] sm:$0xf]
  %v64 = vld [vmem:[%s1 + $0x94] sm:$0xf]
  %v65 = vld [vmem:[%s1 + $0x98] sm:$0xf]
  %v66 = vld [vmem:[%s1 + $0x9c] sm:$0xf]
  %v67 = vld [vmem:[%s1 + $0xa0] sm:$0xf]
  %v68 = vld [vmem:[%s1 + $0xa4] sm:$0xf]
  %v69 = vld [vmem:[%s1 + $0xa8] sm:$0xf]
  %v70 = vld [vmem:[%s1 + $0xac] sm:$0xf]
  %v71 = vld [vmem:[%s1 + $0xb0] sm:$0xf]
  %v72 = vld [vmem:[%s1 + $0xb4] sm:$0xf]
  %v73 = vld [vmem:[%s1 + $0xb8] sm:$0xf]
  %v74 = vld [vmem:[%s1 + $0xbc] sm:$0xf]
  %v75 = vld [vmem:[%s1 + $0xc0] sm:$0xf]
  %v76 = vld [vmem:[%s1 + $0xc4] sm:$0xf]
  %v77 = vld [vmem:[%s1 + $0xc8] sm:$0xf]
  %v78 = vld [vmem:[%s1 + $0xcc] sm:$0xf]
  %v79 = vld [vmem:[%s1 + $0xd0] sm:$0xf]
  %v80 = vld [vmem:[%s1 + $0xd4] sm:$0xf]
  %v81 = vld [vmem:[%s1 + $0xd8] sm:$0xf]
  %v82 = vld [vmem:[%s1 + $0xdc] sm:$0xf]
  %v83 = vld [vmem:[%s1 + $0xe0] sm:$0xf]
  %v84 = vld [vmem:[%s1 + $0xe4] sm:$0xf]
  %v85 = vld [vmem:[%s1 + $0xe8] sm:$0xf]
  %v86 = vld [vmem:[%s1 + $0xec] sm:$0xf]
  %v87 = vld [vmem:[%s1 + $0xf0] sm:$0xf]
  %v88 = vld [vmem:[%s1 + $0xf4] sm:$0xf]
  %v89 = vld [vmem:[%s1 + $0xf8] sm:$0xf]
  %v90 = vld [vmem:[%s1 + $0xfc] sm:$0xf]
  %v91 = vld [vmem:[%s1 + $0x100] sm:$0xf]
  %v92 = vld [vmem:[%s1 + $0x104] sm:$0xf]
  %v93 = vld [vmem:[%s1 + $0x108] sm:$0xf]
  %v94 = vld [vmem:[%s1 + $0x10c] sm:$0xf]
  %v95 = vld [vmem:[%s1 + $0x110] sm:$0xf]
  %v96 = vld [vmem:[%s1 + $0x114] sm:$0xf]
  %v97 = vld [vmem:[%s1 + $0x118] sm:$0xf]
  %v98 = vld [vmem:[%s1 + $0x11c] sm:$0xf]
  %v99 = vld [vmem:[%s2] sm:$0x1]
  %v101 = vlaneseq
  %v102 = vshrl.u32 %v101, 7
  %v103 = vsub.s32 0, %v102
  %v104 = vrot.slane %v99, %v103
  %v118 = vunpack.c.l.b16 %v15
  %v119 = vunpack.c.h.b16 %v15
  %v120 = vunpack.c.l.b16 %v16
  %v121 = vunpack.c.h.b16 %v16
  %v122 = vunpack.c.l.b16 %v17
  %v123 = vunpack.c.l.b16 %v18
  %v124 = vunpack.c.h.b16 %v18
  %v125 = vunpack.c.l.b16 %v19
  %v126 = vunpack.c.h.b16 %v19
  %v127 = vunpack.c.l.b16 %v20
  %v128 = vunpack.c.l.b16 %v21
  %v129 = vunpack.c.h.b16 %v21
  %v130 = vunpack.c.l.b16 %v22
  %v131 = vunpack.c.h.b16 %v22
  %v132 = vunpack.c.l.b16 %v23
  %v133 = vunpack.c.l.b16 %v24
  %v134 = vunpack.c.h.b16 %v24
  %v135 = vunpack.c.l.b16 %v25
  %v136 = vunpack.c.h.b16 %v25
  %v137 = vunpack.c.l.b16 %v26
  %v138 = vpack.c.b16 %v123, %v118
  %v139 = vpack.c.b16 %v124, %v119
  %v140 = vpack.c.b16 %v125, %v120
  %v141 = vpack.c.b16 %v126, %v121
  %v142 = vpack.c.b16 %v127, %v122
  %v143 = vpack.c.b16 %v133, %v128
  %v144 = vpack.c.b16 %v134, %v129
  %v145 = vpack.c.b16 %v135, %v130
  %v146 = vpack.c.b16 %v136, %v131
  %v147 = vpack.c.b16 %v137, %v132
  %v228 = vunpack.c.l.b16 %v27
  %v229 = vunpack.c.l.b16 %v28
  %v230 = vunpack.c.l.b16 %v29
  %v231 = vunpack.c.l.b16 %v30
  %v232 = vunpack.c.l.b16 %v31
  %v233 = vunpack.c.l.b16 %v32
  %v234 = vunpack.c.l.b16 %v33
  %v235 = vunpack.c.l.b16 %v34
  %v236 = vunpack.c.l.b16 %v35
  %v237 = vunpack.c.l.b16 %v36
  %v238 = vunpack.c.l.b16 %v37
  %v239 = vunpack.c.l.b16 %v38
  %v240 = vunpack.c.l.b16 %v39
  %v241 = vunpack.c.l.b16 %v40
  %v242 = vunpack.c.l.b16 %v41
  %v243 = vunpack.c.l.b16 %v42
  %v244 = vunpack.c.l.b16 %v43
  %v245 = vunpack.c.l.b16 %v44
  %v246 = vunpack.c.l.b16 %v45
  %v247 = vunpack.c.l.b16 %v46
  %v248 = vunpack.c.l.b16 %v47
  %v249 = vunpack.c.l.b16 %v48
  %v250 = vunpack.c.l.b16 %v49
  %v251 = vunpack.c.l.b16 %v50
  %v252 = vunpack.c.l.b16 %v51
  %v253 = vunpack.c.l.b16 %v52
  %v254 = vunpack.c.l.b16 %v53
  %v255 = vunpack.c.l.b16 %v54
  %v256 = vunpack.c.l.b16 %v55
  %v257 = vunpack.c.l.b16 %v56
  %v258 = vunpack.c.l.b16 %v57
  %v259 = vunpack.c.l.b16 %v58
  %v260 = vunpack.c.l.b16 %v59
  %v261 = vunpack.c.l.b16 %v60
  %v262 = vunpack.c.l.b16 %v61
  %v263 = vunpack.c.l.b16 %v62
  %v264 = vunpack.c.l.b16 %v63
  %v265 = vunpack.c.l.b16 %v64
  %v266 = vunpack.c.l.b16 %v65
  %v267 = vunpack.c.l.b16 %v66
  %v268 = vunpack.c.l.b16 %v67
  %v269 = vunpack.c.l.b16 %v68
  %v270 = vunpack.c.l.b16 %v69
  %v271 = vunpack.c.l.b16 %v70
  %v272 = vunpack.c.l.b16 %v71
  %v273 = vunpack.c.l.b16 %v72
  %v274 = vunpack.c.l.b16 %v73
  %v275 = vunpack.c.l.b16 %v74
  %v276 = vunpack.c.l.b16 %v75
  %v277 = vunpack.c.l.b16 %v76
  %v278 = vunpack.c.l.b16 %v77
  %v279 = vunpack.c.l.b16 %v78
  %v280 = vunpack.c.l.b16 %v79
  %v281 = vunpack.c.l.b16 %v80
  %v282 = vunpack.c.l.b16 %v81
  %v283 = vunpack.c.l.b16 %v82
  %v284 = vunpack.c.l.b16 %v83
  %v285 = vunpack.c.l.b16 %v84
  %v286 = vunpack.c.l.b16 %v85
  %v287 = vunpack.c.l.b16 %v86
  %v288 = vunpack.c.l.b16 %v87
  %v289 = vunpack.c.l.b16 %v88
  %v290 = vunpack.c.l.b16 %v89
  %v291 = vunpack.c.l.b16 %v90
  %v292 = vunpack.c.l.b16 %v91
  %v293 = vunpack.c.l.b16 %v92
  %v294 = vunpack.c.l.b16 %v93
  %v295 = vunpack.c.l.b16 %v94
  %v296 = vunpack.c.l.b16 %v95
  %v297 = vunpack.c.l.b16 %v96
  %v298 = vunpack.c.l.b16 %v97
  %v299 = vunpack.c.l.b16 %v98
  %v300 = vpack.c.b16 %v229, %v228
  %v301 = vpack.c.b16 %v231, %v230
  %v302 = vpack.c.b16 %v233, %v232
  %v303 = vpack.c.b16 %v235, %v234
  %v304 = vpack.c.b16 %v237, %v236
  %v305 = vpack.c.b16 %v239, %v238
  %v306 = vpack.c.b16 %v241, %v240
  %v307 = vpack.c.b16 %v243, %v242
  %v308 = vpack.c.b16 %v245, %v244
  %v309 = vpack.c.b16 %v247, %v246
  %v310 = vpack.c.b16 %v249, %v248
  %v311 = vpack.c.b16 %v251, %v250
  %v312 = vpack.c.b16 %v253, %v252
  %v313 = vpack.c.b16 %v255, %v254
  %v314 = vpack.c.b16 %v257, %v256
  %v315 = vpack.c.b16 %v259, %v258
  %v316 = vpack.c.b16 %v261, %v260
  %v317 = vpack.c.b16 %v263, %v262
  %v318 = vpack.c.b16 %v265, %v264
  %v319 = vpack.c.b16 %v267, %v266
  %v320 = vpack.c.b16 %v269, %v268
  %v321 = vpack.c.b16 %v271, %v270
  %v322 = vpack.c.b16 %v273, %v272
  %v323 = vpack.c.b16 %v275, %v274
  %v324 = vpack.c.b16 %v277, %v276
  %v325 = vpack.c.b16 %v279, %v278
  %v326 = vpack.c.b16 %v281, %v280
  %v327 = vpack.c.b16 %v283, %v282
  %v328 = vpack.c.b16 %v285, %v284
  %v329 = vpack.c.b16 %v287, %v286
  %v330 = vpack.c.b16 %v289, %v288
  %v331 = vpack.c.b16 %v291, %v290
  %v332 = vpack.c.b16 %v293, %v292
  %v333 = vpack.c.b16 %v295, %v294
  %v334 = vpack.c.b16 %v297, %v296
  %v335 = vpack.c.b16 %v299, %v298
  %vm372 = vcmask 523264
  %v374 = vsel %vm372, %v142, 0
  %v377 = vsel %vm372, %v147, 0
  %379 = vmatprep.subr.bf16.mxu0 0
  %380 = vmatpush1.bf16.msra.mxu0 %v307
  %381 = vmatprep.subr.bf16.mxu0 0
  %382 = vmatpush1.bf16.msra.mxu0 %v306
  %383 = vmatprep.subr.bf16.mxu0 0
  %384 = vmatpush1.bf16.msra.mxu0 %v305
  %385 = vmatprep.subr.bf16.mxu0 0
  %386 = vmatpush1.bf16.msra.mxu0 %v304
  %387 = vmatprep.subr.bf16.mxu0 0
  %388 = vmatpush1.bf16.msra.mxu0 %v303
  %389 = vmatprep.subr.bf16.mxu0 0
  %390 = vmatpush1.bf16.msra.mxu0 %v302
  %391 = vmatprep.subr.bf16.mxu0 0
  %392 = vmatpush1.bf16.msra.mxu0 %v301
  %393 = vmatprep.subr.bf16.mxu0 0
  %394 = vmatpush1.bf16.msra.mxu0 %v300
  %395 = vmatprep.subr.bf16.mxu0 0
  %396 = vmatpush2.bf16.msra.mxu0 %v315
  %397 = vmatprep.subr.bf16.mxu0 0
  %398 = vmatpush2.bf16.msra.mxu0 %v314
  %399 = vmatprep.subr.bf16.mxu0 0
  %400 = vmatpush2.bf16.msra.mxu0 %v313
  %401 = vmatprep.subr.bf16.mxu0 0
  %402 = vmatpush2.bf16.msra.mxu0 %v312
  %403 = vmatprep.subr.bf16.mxu0 0
  %404 = vmatpush2.bf16.msra.mxu0 %v311
  %405 = vmatprep.subr.bf16.mxu0 0
  %406 = vmatpush2.bf16.msra.mxu0 %v310
  %407 = vmatprep.subr.bf16.mxu0 0
  %408 = vmatpush2.bf16.msra.mxu0 %v309
  %409 = vmatprep.subr.bf16.mxu0 0
  %410 = vmatpush2.bf16.msra.mxu0 %v308
  %411 = vmatprep.mubr.bf16.mxu0 %v139
  %412 = vmatmul.mubr.bf16.gmra.mxu0 %v138
  %v413 = vpop.f32.mrf.mxu0
  %v414 = vadd.f32 %v104, %v413
  %v415 = vpop.f32.mrf.mxu0
  %v416 = vpop.f32.mrf.mxu0
  %v417 = vadd.f32 %v104, %v416
  %v418 = vpop.f32.mrf.mxu0
  %419 = vmatprep.mubr.bf16.mxu0 %v144
  %420 = vmatmul.mubr.bf16.gmra.mxu0 %v143
  %v421 = vpop.f32.mrf.mxu0
  %v422 = vadd.f32 %v104, %v421
  %v423 = vpop.f32.mrf.mxu0
  %v424 = vpop.f32.mrf.mxu0
  %v425 = vadd.f32 %v104, %v424
  %v426 = vpop.f32.mrf.mxu0
  %427 = vdwg.mxu0
  %428 = vmatprep.subr.bf16.mxu0 0
  %429 = vmatpush1.bf16.msra.mxu0 %v323
  %430 = vmatprep.subr.bf16.mxu0 0
  %431 = vmatpush1.bf16.msra.mxu0 %v322
  %432 = vmatprep.subr.bf16.mxu0 0
  %433 = vmatpush1.bf16.msra.mxu0 %v321
  %434 = vmatprep.subr.bf16.mxu0 0
  %435 = vmatpush1.bf16.msra.mxu0 %v320
  %436 = vmatprep.subr.bf16.mxu0 0
  %437 = vmatpush1.bf16.msra.mxu0 %v319
  %438 = vmatprep.subr.bf16.mxu0 0
  %439 = vmatpush1.bf16.msra.mxu0 %v318
  %440 = vmatprep.subr.bf16.mxu0 0
  %441 = vmatpush1.bf16.msra.mxu0 %v317
  %442 = vmatprep.subr.bf16.mxu0 0
  %443 = vmatpush1.bf16.msra.mxu0 %v316
  %444 = vmatprep.subr.bf16.mxu0 0
  %445 = vmatpush2.bf16.msra.mxu0 %v331
  %446 = vmatprep.subr.bf16.mxu0 0
  %447 = vmatpush2.bf16.msra.mxu0 %v330
  %448 = vmatprep.subr.bf16.mxu0 0
  %449 = vmatpush2.bf16.msra.mxu0 %v329
  %450 = vmatprep.subr.bf16.mxu0 0
  %451 = vmatpush2.bf16.msra.mxu0 %v328
  %452 = vmatprep.subr.bf16.mxu0 0
  %453 = vmatpush2.bf16.msra.mxu0 %v327
  %454 = vmatprep.subr.bf16.mxu0 0
  %455 = vmatpush2.bf16.msra.mxu0 %v326
  %456 = vmatprep.subr.bf16.mxu0 0
  %457 = vmatpush2.bf16.msra.mxu0 %v325
  %458 = vmatprep.subr.bf16.mxu0 0
  %459 = vmatpush2.bf16.msra.mxu0 %v324
  %460 = vmatprep.mubr.bf16.mxu0 %v141
  %461 = vmatmul.mubr.bf16.gmra.mxu0 %v140
  %v462 = vpop.f32.mrf.mxu0
  %v463 = vadd.f32 %v414, %v462
  %v464 = vpop.f32.mrf.mxu0
  %v465 = vpop.f32.mrf.mxu0
  %v466 = vadd.f32 %v417, %v465
  %v467 = vpop.f32.mrf.mxu0
  %468 = vmatprep.mubr.bf16.mxu0 %v146
  %469 = vmatmul.mubr.bf16.gmra.mxu0 %v145
  %v470 = vpop.f32.mrf.mxu0
  %v471 = vadd.f32 %v422, %v470
  %v472 = vpop.f32.mrf.mxu0
  %v473 = vpop.f32.mrf.mxu0
  %v474 = vadd.f32 %v425, %v473
  %v475 = vpop.f32.mrf.mxu0
  %476 = vdwg.mxu0
  %477 = vmatprep.subr.bf16.mxu0 0
  %478 = vmatpush1.bf16.msra.mxu0 0
  %479 = vmatprep.subr.bf16.mxu0 0
  %480 = vmatpush1.bf16.msra.mxu0 0
  %481 = vmatprep.subr.bf16.mxu0 0
  %482 = vmatpush1.bf16.msra.mxu0 0
  %483 = vmatprep.subr.bf16.mxu0 0
  %484 = vmatpush1.bf16.msra.mxu0 0
  %485 = vmatprep.subr.bf16.mxu0 0
  %486 = vmatpush1.bf16.msra.mxu0 %v335
  %487 = vmatprep.subr.bf16.mxu0 0
  %488 = vmatpush1.bf16.msra.mxu0 %v334
  %489 = vmatprep.subr.bf16.mxu0 0
  %490 = vmatpush1.bf16.msra.mxu0 %v333
  %491 = vmatprep.subr.bf16.mxu0 0
  %492 = vmatpush1.bf16.msra.mxu0 %v332
  %493 = vmatprep.subr.bf16.mxu0 0
  %494 = vmatpush2.bf16.msra.mxu0 0
  %495 = vmatprep.subr.bf16.mxu0 0
  %496 = vmatpush2.bf16.msra.mxu0 0
  %497 = vmatprep.subr.bf16.mxu0 0
  %498 = vmatpush2.bf16.msra.mxu0 0
  %499 = vmatprep.subr.bf16.mxu0 0
  %500 = vmatpush2.bf16.msra.mxu0 0
  %501 = vmatprep.subr.bf16.mxu0 0
  %502 = vmatpush2.bf16.msra.mxu0 0
  %503 = vmatprep.subr.bf16.mxu0 0
  %504 = vmatpush2.bf16.msra.mxu0 0
  %505 = vmatprep.subr.bf16.mxu0 0
  %506 = vmatpush2.bf16.msra.mxu0 0
  %507 = vmatprep.subr.bf16.mxu0 0
  %508 = vmatpush2.bf16.msra.mxu0 0
  %509 = vmatprep.mubr.bf16.mxu0 0
  %510 = vmatmul.mubr.bf16.gmra.mxu0 %v374
  %v511 = vpop.f32.mrf.mxu0
  %v512 = vadd.f32 %v463, %v511
  %v513 = vpop.f32.mrf.mxu0
  %v514 = vpop.f32.mrf.mxu0
  %v515 = vadd.f32 %v466, %v514
  %v516 = vpop.f32.mrf.mxu0
  %517 = vmatprep.mubr.bf16.mxu0 0
  %518 = vmatmul.mubr.bf16.gmra.mxu0 %v377
  %v519 = vpop.f32.mrf.mxu0
  %v520 = vadd.f32 %v471, %v519
  %v521 = vpop.f32.mrf.mxu0
  %v522 = vpop.f32.mrf.mxu0
  %v523 = vadd.f32 %v474, %v522
  %v524 = vpop.f32.mrf.mxu0
  %525 = vdwg.mxu0
  %v526 = vmax.f32 %v512, 0.0
  %v527 = vmax.f32 %v515, 0.0
  %v528 = vmax.f32 %v520, 0.0
  %v529 = vmax.f32 %v523, 0.0
  %530 = vst [vmem:[%s3] sm:$0xff] %v526
  %531 = vst [vmem:[%s3 + $0x8] sm:$0xff] %v527
  %532 = vst [vmem:[%s3 + $0x10] sm:$0xff] %v528
  %533 = vst [vmem:[%s3 + $0x18] sm:$0xff] %v529
  // Predicated region
  $region14: #{model_forward.22} parent=0 // pred_check
    _
  $region15: #{model_forward.22} parent=0 // pred_check_branch
    %535 = sbr.rel (0) target = $region17
  $region16: #{model_forward.22} parent=0 // pred_region
    _
  $region17: #{model_forward.22} parent=0 // pred_fallthru
    _
  // Predicated region
  $region18: #{model_forward.22} parent=0 // pred_check
    _
  $region19: #{model_forward.22} parent=0 // pred_check_branch
    %537 = sbr.rel (0) target = $region21
  $region20: #{model_forward.22} parent=0 // pred_region
    _
  $region21: #{model_forward.22} parent=0 // pred_fallthru
    _

// kernel: model_forward.26
$region0: #{model_forward.26}
  #allocation0 [shape = 'u32[]', space=smem, size = 0x4, offset = 0x4, fixed_abs, tag = 'smem constant byte address 0x4 - core index']
  #allocation1 [shape = 'u32[144,128]{1,0:T(1,128)}', space=vmem, size = 0x12000, scoped, tag = 'internal scratch']
  %s0 = inlined_call_operand.vmem [shape: bf16[32,256], index: 0, kind: input, shape index: {}]
  %s1 = inlined_call_operand.vmem [shape: bf16[256,128], index: 1, kind: input, shape index: {}]
  %s2 = inlined_call_operand.vmem [shape: f32[1,128], index: 2, kind: input, shape index: {}]
  %s3 = inlined_call_operand.vmem [shape: f32[32,128], index: 3, kind: output, shape index: {}]
  %s4 = sld [smem:[#allocation0]]
  $region22: #{model_forward.26} parent=0
    _
  %s6 = ssub.s32 1, %s4
  %s7 = scalar_select 0, %s6, %s4
  // Predicated region
  $region2: #{model_forward.26} parent=0 // pred_check
    _
  $region3: #{model_forward.26} parent=0 // pred_check_branch
    %9 = sbr.rel (0) target = $region5
  $region4: #{model_forward.26} parent=0 // pred_region
    _
  $region5: #{model_forward.26} parent=0 // pred_fallthru
    _
  // Predicated region
  $region6: #{model_forward.26} parent=0 // pred_check
    _
  $region7: #{model_forward.26} parent=0 // pred_check_branch
    %11 = sbr.rel (0) target = $region9
  $region8: #{model_forward.26} parent=0 // pred_region
    _
  $region9: #{model_forward.26} parent=0 // pred_fallthru
    _
  // Predicated region
  $region10: #{model_forward.26} parent=0 // pred_check
    _
  $region11: #{model_forward.26} parent=0 // pred_check_branch
    %13 = sbr.rel (0) target = $region13
  $region12: #{model_forward.26} parent=0 // pred_region
    _
  $region13: #{model_forward.26} parent=0 // pred_fallthru
    _
  %v15 = vld [vmem:[%s0] sm:$0xff]
  %v16 = vld [vmem:[%s0 + $0x8] sm:$0xff]
  %v17 = vld [vmem:[%s0 + $0x10] sm:$0xff]
  %v18 = vld [vmem:[%s0 + $0x18] sm:$0xff]
  %v19 = vld [vmem:[%s1] sm:$0xf]
  %v20 = vld [vmem:[%s1 + $0x4] sm:$0xf]
  %v21 = vld [vmem:[%s1 + $0x8] sm:$0xf]
  %v22 = vld [vmem:[%s1 + $0xc] sm:$0xf]
  %v23 = vld [vmem:[%s1 + $0x10] sm:$0xf]
  %v24 = vld [vmem:[%s1 + $0x14] sm:$0xf]
  %v25 = vld [vmem:[%s1 + $0x18] sm:$0xf]
  %v26 = vld [vmem:[%s1 + $0x1c] sm:$0xf]
  %v27 = vld [vmem:[%s1 + $0x20] sm:$0xf]
  %v28 = vld [vmem:[%s1 + $0x24] sm:$0xf]
  %v29 = vld [vmem:[%s1 + $0x28] sm:$0xf]
  %v30 = vld [vmem:[%s1 + $0x2c] sm:$0xf]
  %v31 = vld [vmem:[%s1 + $0x30] sm:$0xf]
  %v32 = vld [vmem:[%s1 + $0x34] sm:$0xf]
  %v33 = vld [vmem:[%s1 + $0x38] sm:$0xf]
  %v34 = vld [vmem:[%s1 + $0x3c] sm:$0xf]
  %v35 = vld [vmem:[%s1 + $0x40] sm:$0xf]
  %v36 = vld [vmem:[%s1 + $0x44] sm:$0xf]
  %v37 = vld [vmem:[%s1 + $0x48] sm:$0xf]
  %v38 = vld [vmem:[%s1 + $0x4c] sm:$0xf]
  %v39 = vld [vmem:[%s1 + $0x50] sm:$0xf]
  %v40 = vld [vmem:[%s1 + $0x54] sm:$0xf]
  %v41 = vld [vmem:[%s1 + $0x58] sm:$0xf]
  %v42 = vld [vmem:[%s1 + $0x5c] sm:$0xf]
  %v43 = vld [vmem:[%s1 + $0x60] sm:$0xf]
  %v44 = vld [vmem:[%s1 + $0x64] sm:$0xf]
  %v45 = vld [vmem:[%s1 + $0x68] sm:$0xf]
  %v46 = vld [vmem:[%s1 + $0x6c] sm:$0xf]
  %v47 = vld [vmem:[%s1 + $0x70] sm:$0xf]
  %v48 = vld [vmem:[%s1 + $0x74] sm:$0xf]
  %v49 = vld [vmem:[%s1 + $0x78] sm:$0xf]
  %v50 = vld [vmem:[%s1 + $0x7c] sm:$0xf]
  %v51 = vld [vmem:[%s2] sm:$0x1]
  %v53 = vlaneseq
  %v54 = vshrl.u32 %v53, 7
  %v55 = vsub.s32 0, %v54
  %v56 = vrot.slane %v51, %v55
  %v62 = vunpack.c.l.b16 %v15
  %v63 = vunpack.c.h.b16 %v15
  %v64 = vunpack.c.l.b16 %v16
  %v65 = vunpack.c.h.b16 %v16
  %v66 = vunpack.c.l.b16 %v17
  %v67 = vunpack.c.h.b16 %v17
  %v68 = vunpack.c.l.b16 %v18
  %v69 = vunpack.c.h.b16 %v18
  %v70 = vpack.c.b16 %v64, %v62
  %v71 = vpack.c.b16 %v65, %v63
  %v72 = vpack.c.b16 %v68, %v66
  %v73 = vpack.c.b16 %v69, %v67
  %v110 = vunpack.c.l.b16 %v19
  %v111 = vunpack.c.l.b16 %v20
  %v112 = vunpack.c.l.b16 %v21
  %v113 = vunpack.c.l.b16 %v22
  %v114 = vunpack.c.l.b16 %v23
  %v115 = vunpack.c.l.b16 %v24
  %v116 = vunpack.c.l.b16 %v25
  %v117 = vunpack.c.l.b16 %v26
  %v118 = vunpack.c.l.b16 %v27
  %v119 = vunpack.c.l.b16 %v28
  %v120 = vunpack.c.l.b16 %v29
  %v121 = vunpack.c.l.b16 %v30
  %v122 = vunpack.c.l.b16 %v31
  %v123 = vunpack.c.l.b16 %v32
  %v124 = vunpack.c.l.b16 %v33
  %v125 = vunpack.c.l.b16 %v34
  %v126 = vunpack.c.l.b16 %v35
  %v127 = vunpack.c.l.b16 %v36
  %v128 = vunpack.c.l.b16 %v37
  %v129 = vunpack.c.l.b16 %v38
  %v130 = vunpack.c.l.b16 %v39
  %v131 = vunpack.c.l.b16 %v40
  %v132 = vunpack.c.l.b16 %v41
  %v133 = vunpack.c.l.b16 %v42
  %v134 = vunpack.c.l.b16 %v43
  %v135 = vunpack.c.l.b16 %v44
  %v136 = vunpack.c.l.b16 %v45
  %v137 = vunpack.c.l.b16 %v46
  %v138 = vunpack.c.l.b16 %v47
  %v139 = vunpack.c.l.b16 %v48
  %v140 = vunpack.c.l.b16 %v49
  %v141 = vunpack.c.l.b16 %v50
  %v142 = vpack.c.b16 %v111, %v110
  %v143 = vpack.c.b16 %v113, %v112
  %v144 = vpack.c.b16 %v115, %v114
  %v145 = vpack.c.b16 %v117, %v116
  %v146 = vpack.c.b16 %v119, %v118
  %v147 = vpack.c.b16 %v121, %v120
  %v148 = vpack.c.b16 %v123, %v122
  %v149 = vpack.c.b16 %v125, %v124
  %v150 = vpack.c.b16 %v127, %v126
  %v151 = vpack.c.b16 %v129, %v128
  %v152 = vpack.c.b16 %v131, %v130
  %v153 = vpack.c.b16 %v133, %v132
  %v154 = vpack.c.b16 %v135, %v134
  %v155 = vpack.c.b16 %v137, %v136
  %v156 = vpack.c.b16 %v139, %v138
  %v157 = vpack.c.b16 %v141, %v140
  %174 = vmatprep.subr.bf16.mxu0 0
  %175 = vmatpush1.bf16.msra.mxu0 %v149
  %176 = vmatprep.subr.bf16.mxu0 0
  %177 = vmatpush1.bf16.msra.mxu0 %v148
  %178 = vmatprep.subr.bf16.mxu0 0
  %179 = vmatpush1.bf16.msra.mxu0 %v147
  %180 = vmatprep.subr.bf16.mxu0 0
  %181 = vmatpush1.bf16.msra.mxu0 %v146
  %182 = vmatprep.subr.bf16.mxu0 0
  %183 = vmatpush1.bf16.msra.mxu0 %v145
  %184 = vmatprep.subr.bf16.mxu0 0
  %185 = vmatpush1.bf16.msra.mxu0 %v144
  %186 = vmatprep.subr.bf16.mxu0 0
  %187 = vmatpush1.bf16.msra.mxu0 %v143
  %188 = vmatprep.subr.bf16.mxu0 0
  %189 = vmatpush1.bf16.msra.mxu0 %v142
  %190 = vmatprep.subr.bf16.mxu0 0
  %191 = vmatpush2.bf16.msra.mxu0 %v157
  %192 = vmatprep.subr.bf16.mxu0 0
  %193 = vmatpush2.bf16.msra.mxu0 %v156
  %194 = vmatprep.subr.bf16.mxu0 0
  %195 = vmatpush2.bf16.msra.mxu0 %v155
  %196 = vmatprep.subr.bf16.mxu0 0
  %197 = vmatpush2.bf16.msra.mxu0 %v154
  %198 = vmatprep.subr.bf16.mxu0 0
  %199 = vmatpush2.bf16.msra.mxu0 %v153
  %200 = vmatprep.subr.bf16.mxu0 0
  %201 = vmatpush2.bf16.msra.mxu0 %v152
  %202 = vmatprep.subr.bf16.mxu0 0
  %203 = vmatpush2.bf16.msra.mxu0 %v151
  %204 = vmatprep.subr.bf16.mxu0 0
  %205 = vmatpush2.bf16.msra.mxu0 %v150
  %206 = vmatprep.mubr.bf16.mxu0 %v71
  %207 = vmatmul.mubr.bf16.gmra.mxu0 %v70
  %v208 = vpop.f32.mrf.mxu0
  %v209 = vadd.f32 %v56, %v208
  %v210 = vpop.f32.mrf.mxu0
  %v211 = vpop.f32.mrf.mxu0
  %v212 = vadd.f32 %v56, %v211
  %v213 = vpop.f32.mrf.mxu0
  %214 = vmatprep.mubr.bf16.mxu0 %v73
  %215 = vmatmul.mubr.bf16.gmra.mxu0 %v72
  %v216 = vpop.f32.mrf.mxu0
  %v217 = vadd.f32 %v56, %v216
  %v218 = vpop.f32.mrf.mxu0
  %v219 = vpop.f32.mrf.mxu0
  %v220 = vadd.f32 %v56, %v219
  %v221 = vpop.f32.mrf.mxu0
  %222 = vdwg.mxu0
  %v223 = vmax.f32 %v209, 0.0
  %v224 = vmax.f32 %v212, 0.0
  %v225 = vmax.f32 %v217, 0.0
  %v226 = vmax.f32 %v220, 0.0
  %227 = vst [vmem:[%s3] sm:$0xff] %v223
  %228 = vst [vmem:[%s3 + $0x8] sm:$0xff] %v224
  %229 = vst [vmem:[%s3 + $0x10] sm:$0xff] %v225
  %230 = vst [vmem:[%s3 + $0x18] sm:$0xff] %v226
  // Predicated region
  $region14: #{model_forward.26} parent=0 // pred_check
    _
  $region15: #{model_forward.26} parent=0 // pred_check_branch
    %232 = sbr.rel (0) target = $region17
  $region16: #{model_forward.26} parent=0 // pred_region
    _
  $region17: #{model_forward.26} parent=0 // pred_fallthru
    _
  // Predicated region
  $region18: #{model_forward.26} parent=0 // pred_check
    _
  $region19: #{model_forward.26} parent=0 // pred_check_branch
    %234 = sbr.rel (0) target = $region21
  $region20: #{model_forward.26} parent=0 // pred_region
    _
  $region21: #{model_forward.26} parent=0 // pred_fallthru
    _

// kernel: model_forward.34
$region0: #{model_forward.34}
  #allocation0 [shape = 'u32[]', space=smem, size = 0x4, offset = 0x4, fixed_abs, tag = 'smem constant byte address 0x4 - core index']
  #allocation1 [shape = 'u32[144,128]{1,0:T(1,128)}', space=vmem, size = 0x12000, scoped, tag = 'internal scratch']
  %s0 = inlined_call_operand.vmem [shape: bf16[512,128], index: 0, kind: input, shape index: {}]
  %s1 = inlined_call_operand.vmem [shape: bf16[128,128], index: 1, kind: input, shape index: {}]
  %s2 = inlined_call_operand.vmem [shape: f32[1,128], index: 2, kind: input, shape index: {}]
  %s3 = inlined_call_operand.vmem [shape: f32[512,128], index: 3, kind: output, shape index: {}]
  %s4 = sld [smem:[#allocation0]]
  $region45: #{model_forward.34} parent=0
    _
  %s6 = ssub.s32 1, %s4
  %s7 = scalar_select 0, %s6, %s4
  loop: start=0, step=1, limit=4
  $region2: #{model_forward.34} parent=0 // loop_pre_header
    _
  $region3: #{model_forward.34} parent=0 // loop_header
    %s9 = sphi 0, %s13
    %p10 = scmp.ge.s32.totalorder %s9, 4
    %s19 = sphi 0, %s21
    %s22 = sphi 0, %s19
    %s23 = sphi 0, %s22
    %s39 = sphi 0, %s23
    %s43 = sphi 0, %s43
    %s45 = sphi 0, %s43
    %s46 = sphi 0, %s45
    %s60 = sphi 0, %s46
    %s64 = sphi 0, %s64
    %s66 = sphi 0, %s64
    %s67 = sphi 0, %s66
    %s81 = sphi 0, %s67
    %s87 = sphi 0, %s89
    %s90 = sphi 0, %s87
    %s91 = sphi 0, %s90
    %s107 = sphi 0, %s91
  $region4: #{model_forward.34} parent=0 // loop_header_branch
    %12 = sbr.rel (%p10) target = $region8
  $region5: #{model_forward.34} parent=0 // loop_body
    %s14 = ssub.s32 %s9, 1
    %s15 = ssub.s32 %s9, 2
    %s16 = sadd.s32 %s9, 1
    %s17 = ssub.s32 %s9, %s16
    %p18 = scmp.eq.s32.totalorder %s17, 0
    %s20 = sadd.s32 %s19, 1
    %s21 = scalar_select %p18, %s19, %s20
    %p24 = pneg %p18
    %p25 = scmp.eq.s32.totalorder %s9, 1
    %p26 = por %p24, %p25
    %p27 = scmp.ne.s32.totalorder %s19, %s22
    %p28 = scmp.eq.s32.totalorder %s9, 0
    %p29 = por %p27, %p28
    %p30 = scmp.ne.s32.totalorder %s19, %s22
    %p31 = scmp.eq.s32.totalorder %s14, 1
    %p32 = por %p30, %p31
    %p33 = scmp.ne.s32.totalorder %s22, %s23
    %p34 = scmp.eq.s32.totalorder %s14, 0
    %p35 = por %p33, %p34
    %p36 = scmp.ne.s32.totalorder %s22, %s23
    %p37 = scmp.eq.s32.totalorder %s15, 1
    %p38 = por %p36, %p37
    %p40 = scmp.ne.s32.totalorder %s23, %s39
    %p41 = scmp.eq.s32.totalorder %s15, 0
    %p42 = por %p40, %p41
    %s44 = sadd.s32 %s43, 1
    %p47 = scmp.eq.s32.totalorder %s9, 1
    %p48 = scmp.ne.s32.totalorder %s43, %s45
    %p49 = scmp.eq.s32.totalorder %s9, 0
    %p50 = por %p48, %p49
    %p51 = scmp.ne.s32.totalorder %s43, %s45
    %p52 = scmp.eq.s32.totalorder %s14, 1
    %p53 = por %p51, %p52
    %p54 = scmp.ne.s32.totalorder %s45, %s46
    %p55 = scmp.eq.s32.totalorder %s14, 0
    %p56 = por %p54, %p55
    %p57 = scmp.ne.s32.totalorder %s45, %s46
    %p58 = scmp.eq.s32.totalorder %s15, 1
    %p59 = por %p57, %p58
    %p61 = scmp.ne.s32.totalorder %s46, %s60
    %p62 = scmp.eq.s32.totalorder %s15, 0
    %p63 = por %p61, %p62
    %s65 = sadd.s32 %s64, 1
    %p68 = scmp.eq.s32.totalorder %s9, 1
    %p69 = scmp.ne.s32.totalorder %s64, %s66
    %p70 = scmp.eq.s32.totalorder %s9, 0
    %p71 = por %p69, %p70
    %p72 = scmp.ne.s32.totalorder %s64, %s66
    %p73 = scmp.eq.s32.totalorder %s14, 1
    %p74 = por %p72, %p73
    %p75 = scmp.ne.s32.totalorder %s66, %s67
    %p76 = scmp.eq.s32.totalorder %s14, 0
    %p77 = por %p75, %p76
    %p78 = scmp.ne.s32.totalorder %s66, %s67
    %p79 = scmp.eq.s32.totalorder %s15, 1
    %p80 = por %p78, %p79
    %p82 = scmp.ne.s32.totalorder %s67, %s81
    %p83 = scmp.eq.s32.totalorder %s15, 0
    %p84 = por %p82, %p83
    %s85 = ssub.s32 %s9, %s16
    %p86 = scmp.eq.s32.totalorder %s85, 0
    %s88 = sadd.s32 %s87, 1
    %s89 = scalar_select %p86, %s87, %s88
    %p92 = pneg %p86
    %p93 = scmp.eq.s32.totalorder %s9, 1
    %p94 = por %p92, %p93
    %p95 = scmp.ne.s32.totalorder %s87, %s90
    %p96 = scmp.eq.s32.totalorder %s9, 0
    %p97 = por %p95, %p96
    %p98 = scmp.ne.s32.totalorder %s87, %s90
    %p99 = scmp.eq.s32.totalorder %s14, 1
    %p100 = por %p98, %p99
    %p101 = scmp.ne.s32.totalorder %s90, %s91
    %p102 = scmp.eq.s32.totalorder %s14, 0
    %p103 = por %p101, %p102
    %p104 = scmp.ne.s32.totalorder %s90, %s91
    %p105 = scmp.eq.s32.totalorder %s15, 1
    %p106 = por %p104, %p105
    %p108 = scmp.ne.s32.totalorder %s91, %s107
    %p109 = scmp.eq.s32.totalorder %s15, 0
    %p110 = por %p108, %p109
    %p111 = scmp.le.s32.totalorder 1, %s9
    %p112 = scmp.lt.s32.totalorder %s9, 3
    %p113 = pnand %p111, %p112
    %p114 = pneg %p113
    // Predicated region
    $region9: #{model_forward.34} parent=5 // pred_check
      _
    $region10: #{model_forward.34} parent=5 // pred_check_branch
      %116 = sbr.rel (%p113) target = $region12
    $region11: #{model_forward.34} parent=5 // pred_region
      %s117 = ssub.s32 %s9, 1
      // Predicated region
      $region13: #{model_forward.34} parent=11 // pred_check
        %p118 = pneg %p56
      $region14: #{model_forward.34} parent=11 // pred_check_branch
        %120 = sbr.rel (%p118) target = $region16
      $region15: #{model_forward.34} parent=11 // pred_region
        _
      $region16: #{model_forward.34} parent=11 // pred_fallthru
        _
      // Predicated region
      $region17: #{model_forward.34} parent=11 // pred_check
        %p121 = pneg %p77
      $region18: #{model_forward.34} parent=11 // pred_check_branch
        %123 = sbr.rel (%p121) target = $region20
      $region19: #{model_forward.34} parent=11 // pred_region
        _
      $region20: #{model_forward.34} parent=11 // pred_fallthru
        _
    $region12: #{model_forward.34} parent=5 // pred_fallthru
      _
    %p124 = scmp.lt.s32.totalorder %s9, 2
    // Predicated region
    $region21: #{model_forward.34} parent=5 // pred_check
      %p125 = pneg %p124
    $region22: #{model_forward.34} parent=5 // pred_check_branch
      %127 = sbr.rel (%p125) target = $region24
    $region23: #{model_forward.34} parent=5 // pred_region
      // Predicated region
      $region25: #{model_forward.34} parent=23 // pred_check
        %p128 = pneg %p29
      $region26: #{model_forward.34} parent=23 // pred_check_branch
        %130 = sbr.rel (%p128) target = $region28
      $region27: #{model_forward.34} parent=23 // pred_region
        %s131 = smul.u32 32, %s9
        %p132 = scmp.lt.s32.totalorder %s131, 63
        %s133 = scalar_select %p132, %s131, 63
        %s134 = smul.addr %s133, 4
        %s135 = scalar_lea.vmem %s0, %s134
        %s136 = smul.u32 32, %s9
      $region28: #{model_forward.34} parent=23 // pred_fallthru
        _
    $region24: #{model_forward.34} parent=5 // pred_fallthru
      _
    %p137 = scmp.le.s32.totalorder 1, %s9
    %p138 = scmp.lt.s32.totalorder %s9, 3
    %p139 = pnand %p137, %p138
    %p140 = pneg %p139
    // Predicated region
    $region29: #{model_forward.34} parent=5 // pred_check
      _
    $region30: #{model_forward.34} parent=5 // pred_check_branch
      %142 = sbr.rel (%p139) target = $region32
    $region31: #{model_forward.34} parent=5 // pred_region
      %s143 = ssub.s32 %s9, 1
      %s144 = smul.u32 32, %s14
      %p145 = scmp.lt.s32.totalorder %s144, 63
      %s146 = scalar_select %p145, %s144, 63
      %s147 = smul.addr %s146, 4
      %s148 = scalar_lea.vmem %s0, %s147
      %p149 = pneg %p35
      %p150 = pneg %p32
      %p151 = pneg %p56
      %p152 = pneg %p53
      %p153 = pneg %p77
      %p154 = pneg %p74
      %p155 = pneg %p103
      %p156 = pneg %p100
      %s157 = smul.u32 32, %s14
      %p158 = scmp.lt.s32.totalorder %s157, 63
      %s159 = scalar_select %p158, %s157, 63
      %s160 = smul.addr %s159, 8
      %s161 = scalar_lea.vmem %s3, %s160
      %s162 = smul.u32 32, %s14
      %p163 = scmp.lt.s32.totalorder %s162, 63
      %s164 = scalar_select %p163, %s162, 63
      %s165 = smul.addr %s164, 4
      %s166 = scalar_lea.vmem %s0, %s165
      %s167 = smul.u32 32, %s14
      %s168 = smul.u32 32, %s14
      %p169 = scmp.lt.s32.totalorder %s168, 63
      %s170 = scalar_select %p169, %s168, 63
      %s171 = smul.addr %s170, 8
      %s172 = scalar_lea.vmem %s3, %s171
      %s173 = smul.u32 32, %s14
      %v175 = vld [vmem:[%s166] sm:$0xf]
      %v176 = vld [vmem:[%s166 + $0x4] sm:$0xf]
      %v177 = vld [vmem:[%s166 + $0x8] sm:$0xf]
      %v178 = vld [vmem:[%s166 + $0xc] sm:$0xf]
      %v179 = vld [vmem:[%s166 + $0x10] sm:$0xf]
      %v180 = vld [vmem:[%s166 + $0x14] sm:$0xf]
      %v181 = vld [vmem:[%s166 + $0x18] sm:$0xf]
      %v182 = vld [vmem:[%s166 + $0x1c] sm:$0xf]
      %v183 = vld [vmem:[%s166 + $0x20] sm:$0xf]
      %v184 = vld [vmem:[%s166 + $0x24] sm:$0xf]
      %v185 = vld [vmem:[%s166 + $0x28] sm:$0xf]
      %v186 = vld [vmem:[%s166 + $0x2c] sm:$0xf]
      %v187 = vld [vmem:[%s166 + $0x30] sm:$0xf]
      %v188 = vld [vmem:[%s166 + $0x34] sm:$0xf]
      %v189 = vld [vmem:[%s166 + $0x38] sm:$0xf]
      %v190 = vld [vmem:[%s166 + $0x3c] sm:$0xf]
      %v191 = vld [vmem:[%s166 + $0x40] sm:$0xf]
      %v192 = vld [vmem:[%s166 + $0x44] sm:$0xf]
      %v193 = vld [vmem:[%s166 + $0x48] sm:$0xf]
      %v194 = vld [vmem:[%s166 + $0x4c] sm:$0xf]
      %v195 = vld [vmem:[%s166 + $0x50] sm:$0xf]
      %v196 = vld [vmem:[%s166 + $0x54] sm:$0xf]
      %v197 = vld [vmem:[%s166 + $0x58] sm:$0xf]
      %v198 = vld [vmem:[%s166 + $0x5c] sm:$0xf]
      %v199 = vld [vmem:[%s166 + $0x60] sm:$0xf]
      %v200 = vld [vmem:[%s166 + $0x64] sm:$0xf]
      %v201 = vld [vmem:[%s166 + $0x68] sm:$0xf]
      %v202 = vld [vmem:[%s166 + $0x6c] sm:$0xf]
      %v203 = vld [vmem:[%s166 + $0x70] sm:$0xf]
      %v204 = vld [vmem:[%s166 + $0x74] sm:$0xf]
      %v205 = vld [vmem:[%s166 + $0x78] sm:$0xf]
      %v206 = vld [vmem:[%s166 + $0x7c] sm:$0xf]
      %v207 = vld [vmem:[%s1] sm:$0xf]
      %v208 = vld [vmem:[%s1 + $0x4] sm:$0xf]
      %v209 = vld [vmem:[%s1 + $0x8] sm:$0xf]
      %v210 = vld [vmem:[%s1 + $0xc] sm:$0xf]
      %v211 = vld [vmem:[%s1 + $0x10] sm:$0xf]
      %v212 = vld [vmem:[%s1 + $0x14] sm:$0xf]
      %v213 = vld [vmem:[%s1 + $0x18] sm:$0xf]
      %v214 = vld [vmem:[%s1 + $0x1c] sm:$0xf]
      %v215 = vld [vmem:[%s1 + $0x20] sm:$0xf]
      %v216 = vld [vmem:[%s1 + $0x24] sm:$0xf]
      %v217 = vld [vmem:[%s1 + $0x28] sm:$0xf]
      %v218 = vld [vmem:[%s1 + $0x2c] sm:$0xf]
      %v219 = vld [vmem:[%s1 + $0x30] sm:$0xf]
      %v220 = vld [vmem:[%s1 + $0x34] sm:$0xf]
      %v221 = vld [vmem:[%s1 + $0x38] sm:$0xf]
      %v222 = vld [vmem:[%s1 + $0x3c] sm:$0xf]
      %v223 = vld [vmem:[%s2] sm:$0x1]
      %v225 = vlaneseq
      %v226 = vshrl.u32 %v225, 7
      %v227 = vsub.s32 0, %v226
      %v228 = vrot.slane %v223, %v227
      %v262 = vunpack.c.l.b16 %v175
      %v263 = vunpack.c.l.b16 %v176
      %v264 = vunpack.c.l.b16 %v177
      %v265 = vunpack.c.l.b16 %v178
      %v266 = vunpack.c.l.b16 %v179
      %v267 = vunpack.c.l.b16 %v180
      %v268 = vunpack.c.l.b16 %v181
      %v269 = vunpack.c.l.b16 %v182
      %v270 = vunpack.c.l.b16 %v183
      %v271 = vunpack.c.l.b16 %v184
      %v272 = vunpack.c.l.b16 %v185
      %v273 = vunpack.c.l.b16 %v186
      %v274 = vunpack.c.l.b16 %v187
      %v275 = vunpack.c.l.b16 %v188
      %v276 = vunpack.c.l.b16 %v189
      %v277 = vunpack.c.l.b16 %v190
      %v278 = vunpack.c.l.b16 %v191
      %v279 = vunpack.c.l.b16 %v192
      %v280 = vunpack.c.l.b16 %v193
      %v281 = vunpack.c.l.b16 %v194
      %v282 = vunpack.c.l.b16 %v195
      %v283 = vunpack.c.l.b16 %v196
      %v284 = vunpack.c.l.b16 %v197
      %v285 = vunpack.c.l.b16 %v198
      %v286 = vunpack.c.l.b16 %v199
      %v287 = vunpack.c.l.b16 %v200
      %v288 = vunpack.c.l.b16 %v201
      %v289 = vunpack.c.l.b16 %v202
      %v290 = vunpack.c.l.b16 %v203
      %v291 = vunpack.c.l.b16 %v204
      %v292 = vunpack.c.l.b16 %v205
      %v293 = vunpack.c.l.b16 %v206
      %v294 = vpack.c.b16 %v263, %v262
      %v295 = vpack.c.b16 %v265, %v264
      %v296 = vpack.c.b16 %v267, %v266
      %v297 = vpack.c.b16 %v269, %v268
      %v298 = vpack.c.b16 %v271, %v270
      %v299 = vpack.c.b16 %v273, %v272
      %v300 = vpack.c.b16 %v275, %v274
      %v301 = vpack.c.b16 %v277, %v276
      %v302 = vpack.c.b16 %v279, %v278
      %v303 = vpack.c.b16 %v281, %v280
      %v304 = vpack.c.b16 %v283, %v282
      %v305 = vpack.c.b16 %v285, %v284
      %v306 = vpack.c.b16 %v287, %v286
      %v307 = vpack.c.b16 %v289, %v288
      %v308 = vpack.c.b16 %v291, %v290
      %v309 = vpack.c.b16 %v293, %v292
      %v342 = vunpack.c.l.b16 %v207
      %v343 = vunpack.c.l.b16 %v208
      %v344 = vunpack.c.l.b16 %v209
      %v345 = vunpack.c.l.b16 %v210
      %v346 = vunpack.c.l.b16 %v211
      %v347 = vunpack.c.l.b16 %v212
      %v348 = vunpack.c.l.b16 %v213
      %v349 = vunpack.c.l.b16 %v214
      %v350 = vunpack.c.l.b16 %v215
      %v351 = vunpack.c.l.b16 %v216
      %v352 = vunpack.c.l.b16 %v217
      %v353 = vunpack.c.l.b16 %v218
      %v354 = vunpack.c.l.b16 %v219
      %v355 = vunpack.c.l.b16 %v220
      %v356 = vunpack.c.l.b16 %v221
      %v357 = vunpack.c.l.b16 %v222
      %v358 = vpack.c.b16 %v343, %v342
      %v359 = vpack.c.b16 %v345, %v344
      %v360 = vpack.c.b16 %v347, %v346
      %v361 = vpack.c.b16 %v349, %v348
      %v362 = vpack.c.b16 %v351, %v350
      %v363 = vpack.c.b16 %v353, %v352
      %v364 = vpack.c.b16 %v355, %v354
      %v365 = vpack.c.b16 %v357, %v356
      %374 = vmatprep.subr.bf16.mxu0 0
      %375 = vmatpush1.bf16.msra.mxu0 %v365
      %376 = vmatprep.subr.bf16.mxu0 0
      %377 = vmatpush1.bf16.msra.mxu0 %v364
      %378 = vmatprep.subr.bf16.mxu0 0
      %379 = vmatpush1.bf16.msra.mxu0 %v363
      %380 = vmatprep.subr.bf16.mxu0 0
      %381 = vmatpush1.bf16.msra.mxu0 %v362
      %382 = vmatprep.subr.bf16.mxu0 0
      %383 = vmatpush1.bf16.msra.mxu0 %v361
      %384 = vmatprep.subr.bf16.mxu0 0
      %385 = vmatpush1.bf16.msra.mxu0 %v360
      %386 = vmatprep.subr.bf16.mxu0 0
      %387 = vmatpush1.bf16.msra.mxu0 %v359
      %388 = vmatprep.subr.bf16.mxu0 0
      %389 = vmatpush1.bf16.msra.mxu0 %v358
      %390 = vmatprep.subr.bf16.mxu0 0
      %391 = vmatpush2.bf16.msra.mxu0 0
      %392 = vmatprep.subr.bf16.mxu0 0
      %393 = vmatpush2.bf16.msra.mxu0 0
      %394 = vmatprep.subr.bf16.mxu0 0
      %395 = vmatpush2.bf16.msra.mxu0 0
      %396 = vmatprep.subr.bf16.mxu0 0
      %397 = vmatpush2.bf16.msra.mxu0 0
      %398 = vmatprep.subr.bf16.mxu0 0
      %399 = vmatpush2.bf16.msra.mxu0 0
      %400 = vmatprep.subr.bf16.mxu0 0
      %401 = vmatpush2.bf16.msra.mxu0 0
      %402 = vmatprep.subr.bf16.mxu0 0
      %403 = vmatpush2.bf16.msra.mxu0 0
      %404 = vmatprep.subr.bf16.mxu0 0
      %405 = vmatpush2.bf16.msra.mxu0 0
      %406 = vmatprep.mubr.bf16.mxu0 0
      %407 = vmatmul.mubr.bf16.gmra.mxu0 %v294
      %v408 = vpop.f32.mrf.mxu0
      %v409 = vadd.f32 %v228, %v408
      %v410 = vpop.f32.mrf.mxu0
      %v411 = vpop.f32.mrf.mxu0
      %v412 = vadd.f32 %v228, %v411
      %v413 = vpop.f32.mrf.mxu0
      %414 = vmatprep.mubr.bf16.mxu0 0
      %415 = vmatmul.mubr.bf16.gmra.mxu0 %v295
      %v416 = vpop.f32.mrf.mxu0
      %v417 = vadd.f32 %v228, %v416
      %v418 = vpop.f32.mrf.mxu0
      %v419 = vpop.f32.mrf.mxu0
      %v420 = vadd.f32 %v228, %v419
      %v421 = vpop.f32.mrf.mxu0
      %422 = vmatprep.mubr.bf16.mxu0 0
      %423 = vmatmul.mubr.bf16.gmra.mxu0 %v296
      %v424 = vpop.f32.mrf.mxu0
      %v425 = vadd.f32 %v228, %v424
      %v426 = vpop.f32.mrf.mxu0
      %v427 = vpop.f32.mrf.mxu0
      %v428 = vadd.f32 %v228, %v427
      %v429 = vpop.f32.mrf.mxu0
      %430 = vmatprep.mubr.bf16.mxu0 0
      %431 = vmatmul.mubr.bf16.gmra.mxu0 %v297
      %v432 = vpop.f32.mrf.mxu0
      %v433 = vadd.f32 %v228, %v432
      %v434 = vpop.f32.mrf.mxu0
      %v435 = vpop.f32.mrf.mxu0
      %v436 = vadd.f32 %v228, %v435
      %v437 = vpop.f32.mrf.mxu0
      %438 = vmatprep.mubr.bf16.mxu0 0
      %439 = vmatmul.mubr.bf16.gmra.mxu0 %v298
      %v440 = vpop.f32.mrf.mxu0
      %v441 = vadd.f32 %v228, %v440
      %v442 = vpop.f32.mrf.mxu0
      %v443 = vpop.f32.mrf.mxu0
      %v444 = vadd.f32 %v228, %v443
      %v445 = vpop.f32.mrf.mxu0
      %446 = vmatprep.mubr.bf16.mxu0 0
      %447 = vmatmul.mubr.bf16.gmra.mxu0 %v299
      %v448 = vpop.f32.mrf.mxu0
      %v449 = vadd.f32 %v228, %v448
      %v450 = vpop.f32.mrf.mxu0
      %v451 = vpop.f32.mrf.mxu0
      %v452 = vadd.f32 %v228, %v451
      %v453 = vpop.f32.mrf.mxu0
      %454 = vmatprep.mubr.bf16.mxu0 0
      %455 = vmatmul.mubr.bf16.gmra.mxu0 %v300
      %v456 = vpop.f32.mrf.mxu0
      %v457 = vadd.f32 %v228, %v456
      %v458 = vpop.f32.mrf.mxu0
      %v459 = vpop.f32.mrf.mxu0
      %v460 = vadd.f32 %v228, %v459
      %v461 = vpop.f32.mrf.mxu0
      %462 = vmatprep.mubr.bf16.mxu0 0
      %463 = vmatmul.mubr.bf16.gmra.mxu0 %v301
      %v464 = vpop.f32.mrf.mxu0
      %v465 = vadd.f32 %v228, %v464
      %v466 = vpop.f32.mrf.mxu0
      %v467 = vpop.f32.mrf.mxu0
      %v468 = vadd.f32 %v228, %v467
      %v469 = vpop.f32.mrf.mxu0
      %470 = vmatprep.mubr.bf16.mxu0 0
      %471 = vmatmul.mubr.bf16.gmra.mxu0 %v302
      %v472 = vpop.f32.mrf.mxu0
      %v473 = vadd.f32 %v228, %v472
      %v474 = vpop.f32.mrf.mxu0
      %v475 = vpop.f32.mrf.mxu0
      %v476 = vadd.f32 %v228, %v475
      %v477 = vpop.f32.mrf.mxu0
      %478 = vmatprep.mubr.bf16.mxu0 0
      %479 = vmatmul.mubr.bf16.gmra.mxu0 %v303
      %v480 = vpop.f32.mrf.mxu0
      %v481 = vadd.f32 %v228, %v480
      %v482 = vpop.f32.mrf.mxu0
      %v483 = vpop.f32.mrf.mxu0
      %v484 = vadd.f32 %v228, %v483
      %v485 = vpop.f32.mrf.mxu0
      %486 = vmatprep.mubr.bf16.mxu0 0
      %487 = vmatmul.mubr.bf16.gmra.mxu0 %v304
      %v488 = vpop.f32.mrf.mxu0
      %v489 = vadd.f32 %v228, %v488
      %v490 = vpop.f32.mrf.mxu0
      %v491 = vpop.f32.mrf.mxu0
      %v492 = vadd.f32 %v228, %v491
      %v493 = vpop.f32.mrf.mxu0
      %494 = vmatprep.mubr.bf16.mxu0 0
      %495 = vmatmul.mubr.bf16.gmra.mxu0 %v305
      %v496 = vpop.f32.mrf.mxu0
      %v497 = vadd.f32 %v228, %v496
      %v498 = vpop.f32.mrf.mxu0
      %v499 = vpop.f32.mrf.mxu0
      %v500 = vadd.f32 %v228, %v499
      %v501 = vpop.f32.mrf.mxu0
      %502 = vmatprep.mubr.bf16.mxu0 0
      %503 = vmatmul.mubr.bf16.gmra.mxu0 %v306
      %v504 = vpop.f32.mrf.mxu0
      %v505 = vadd.f32 %v228, %v504
      %v506 = vpop.f32.mrf.mxu0
      %v507 = vpop.f32.mrf.mxu0
      %v508 = vadd.f32 %v228, %v507
      %v509 = vpop.f32.mrf.mxu0
      %510 = vmatprep.mubr.bf16.mxu0 0
      %511 = vmatmul.mubr.bf16.gmra.mxu0 %v307
      %v512 = vpop.f32.mrf.mxu0
      %v513 = vadd.f32 %v228, %v512
      %v514 = vpop.f32.mrf.mxu0
      %v515 = vpop.f32.mrf.mxu0
      %v516 = vadd.f32 %v228, %v515
      %v517 = vpop.f32.mrf.mxu0
      %518 = vmatprep.mubr.bf16.mxu0 0
      %519 = vmatmul.mubr.bf16.gmra.mxu0 %v308
      %v520 = vpop.f32.mrf.mxu0
      %v521 = vadd.f32 %v228, %v520
      %v522 = vpop.f32.mrf.mxu0
      %v523 = vpop.f32.mrf.mxu0
      %v524 = vadd.f32 %v228, %v523
      %v525 = vpop.f32.mrf.mxu0
      %526 = vmatprep.mubr.bf16.mxu0 0
      %527 = vmatmul.mubr.bf16.gmra.mxu0 %v309
      %v528 = vpop.f32.mrf.mxu0
      %v529 = vadd.f32 %v228, %v528
      %v530 = vpop.f32.mrf.mxu0
      %v531 = vpop.f32.mrf.mxu0
      %v532 = vadd.f32 %v228, %v531
      %v533 = vpop.f32.mrf.mxu0
      %534 = vdwg.mxu0
      %535 = vst [vmem:[%s172] sm:$0xff] %v409
      %536 = vst [vmem:[%s172 + $0x8] sm:$0xff] %v412
      %537 = vst [vmem:[%s172 + $0x10] sm:$0xff] %v417
      %538 = vst [vmem:[%s172 + $0x18] sm:$0xff] %v420
      %539 = vst [vmem:[%s172 + $0x20] sm:$0xff] %v425
      %540 = vst [vmem:[%s172 + $0x28] sm:$0xff] %v428
      %541 = vst [vmem:[%s172 + $0x30] sm:$0xff] %v433
      %542 = vst [vmem:[%s172 + $0x38] sm:$0xff] %v436
      %543 = vst [vmem:[%s172 + $0x40] sm:$0xff] %v441
      %544 = vst [vmem:[%s172 + $0x48] sm:$0xff] %v444
      %545 = vst [vmem:[%s172 + $0x50] sm:$0xff] %v449
      %546 = vst [vmem:[%s172 + $0x58] sm:$0xff] %v452
      %547 = vst [vmem:[%s172 + $0x60] sm:$0xff] %v457
      %548 = vst [vmem:[%s172 + $0x68] sm:$0xff] %v460
      %549 = vst [vmem:[%s172 + $0x70] sm:$0xff] %v465
      %550 = vst [vmem:[%s172 + $0x78] sm:$0xff] %v468
      %551 = vst [vmem:[%s172 + $0x80] sm:$0xff] %v473
      %552 = vst [vmem:[%s172 + $0x88] sm:$0xff] %v476
      %553 = vst [vmem:[%s172 + $0x90] sm:$0xff] %v481
      %554 = vst [vmem:[%s172 + $0x98] sm:$0xff] %v484
      %555 = vst [vmem:[%s172 + $0xa0] sm:$0xff] %v489
      %556 = vst [vmem:[%s172 + $0xa8] sm:$0xff] %v492
      %557 = vst [vmem:[%s172 + $0xb0] sm:$0xff] %v497
      %558 = vst [vmem:[%s172 + $0xb8] sm:$0xff] %v500
      %559 = vst [vmem:[%s172 + $0xc0] sm:$0xff] %v505
      %560 = vst [vmem:[%s172 + $0xc8] sm:$0xff] %v508
      %561 = vst [vmem:[%s172 + $0xd0] sm:$0xff] %v513
      %562 = vst [vmem:[%s172 + $0xd8] sm:$0xff] %v516
      %563 = vst [vmem:[%s172 + $0xe0] sm:$0xff] %v521
      %564 = vst [vmem:[%s172 + $0xe8] sm:$0xff] %v524
      %565 = vst [vmem:[%s172 + $0xf0] sm:$0xff] %v529
      %566 = vst [vmem:[%s172 + $0xf8] sm:$0xff] %v532
      %s567 = smul.u32 32, %s14
      %p568 = scmp.lt.s32.totalorder %s567, 63
      %s569 = scalar_select %p568, %s567, 63
      %s570 = smul.addr %s569, 8
      %s571 = scalar_lea.vmem %s3, %s570
      // Predicated region
      $region33: #{model_forward.34} parent=31 // pred_check
        %p572 = pneg %p100
      $region34: #{model_forward.34} parent=31 // pred_check_branch
        %574 = sbr.rel (%p572) target = $region36
      $region35: #{model_forward.34} parent=31 // pred_region
        %s575 = smul.u32 32, %s14
      $region36: #{model_forward.34} parent=31 // pred_fallthru
        _
    $region32: #{model_forward.34} parent=5 // pred_fallthru
      _
    %p576 = scmp.le.s32.totalorder 2, %s9
    // Predicated region
    $region37: #{model_forward.34} parent=5 // pred_check
      %p577 = pneg %p576
    $region38: #{model_forward.34} parent=5 // pred_check_branch
      %579 = sbr.rel (%p577) target = $region40
    $region39: #{model_forward.34} parent=5 // pred_region
      %s580 = ssub.s32 %s9, 2
      // Predicated region
      $region41: #{model_forward.34} parent=39 // pred_check
        %p581 = pneg %p106
      $region42: #{model_forward.34} parent=39 // pred_check_branch
        %583 = sbr.rel (%p581) target = $region44
      $region43: #{model_forward.34} parent=39 // pred_region
        %s584 = smul.u32 32, %s15
        %p585 = scmp.lt.s32.totalorder %s584, 63
        %s586 = scalar_select %p585, %s584, 63
        %s587 = smul.addr %s586, 8
        %s588 = scalar_lea.vmem %s3, %s587
      $region44: #{model_forward.34} parent=39 // pred_fallthru
        _
    $region40: #{model_forward.34} parent=5 // pred_fallthru
      _
  $region6: #{model_forward.34} parent=0 // loop_footer
    %s13 = sadd.s32 1, %s9
  $region7: #{model_forward.34} parent=0 // loop_footer_branch
    %8 = sbr.rel target = $region3
  $region8: #{model_forward.34} parent=0 // loop_exit
    _

</llo_original>
